<compile_context>
chip_gen: v7x
topology: tpu7x:2x2x1
jax: 0.10.0
libtpu: 0.0.40
codegen_flags: <defaults>
</compile_context>

<pallas_src>
import math

import jax
import jax.numpy as jnp
from jax.experimental import pallas as pl
from jax.experimental.pallas import tpu as pltpu


def _gelu(x):
    # tanh-approximation GELU (EUP-friendly)
    # TODO(synk): PyTorch nn.GELU defaults to exact erf; tanh approx differs by ~1e-3.
    c = 0.7978845608028654  # sqrt(2/pi)
    return 0.5 * x * (1.0 + jnp.tanh(c * (x + 0.044715 * x * x * x)))


def _softmax(x):
    m = jnp.max(x, axis=-1, keepdims=True)
    e = jnp.exp(x - m)
    return e * pl.reciprocal(jnp.sum(e, axis=-1, keepdims=True), approx=True)


def composite_kernel(z_ref, wg_ref, we1_ref, we2_ref, expand_ref, kT_ref, vmem_ref,
                     wu1_ref, wv1_ref, wo1_ref,
                     wu2_ref, wv2_ref, wo2_ref,
                     wa_ref, ba_ref,
                     z2_ref, bias_ref,
                     x_scratch):
    vi = pl.program_id(1)

    # ---- latent transition: computed once per batch tile, reused for all vocab tiles ----
    @pl.when(vi == 0)
    def _():
        z = z_ref[...].astype(jnp.float32)                 # (TB, D)
        zb = z.astype(jnp.bfloat16)
        D = z.shape[-1]

        # ---------------- SparseMoE (fused into two wide bf16 MXU matmuls) ----------------
        # TODO(synk): true top-k sparse routing needs data-dependent expert dispatch;
        # this is dense softmax-gated mixture over all experts (the per-expert loop of
        # the original, folded into wide matmuls).
        gate = _softmax(jnp.dot(zb, wg_ref[...],
                                preferred_element_type=jnp.float32))             # (TB, E)
        h_all = jnp.maximum(
            jnp.dot(zb, we1_ref[...], preferred_element_type=jnp.float32), 0.0)  # (TB, E*H)
        # gate (TB, E) -> (TB, E*H) via the precomputed bf16 0/1 expand matrix
        g_wide = jnp.dot(gate.astype(jnp.bfloat16), expand_ref[...],
                         preferred_element_type=jnp.float32)                     # (TB, E*H)
        x = jnp.dot((g_wide * h_all).astype(jnp.bfloat16), we2_ref[...],
                    preferred_element_type=jnp.float32)                          # (TB, D)

        # ---------------- KeyValueMemory ----------------
        scale = 1.0 / math.sqrt(float(D))
        scores = jnp.dot(zb, kT_ref[...], preferred_element_type=jnp.float32) * scale
        attn = _softmax(scores)                                                  # (TB, M)
        x = x + jnp.dot(attn.astype(jnp.bfloat16), vmem_ref[...],
                        preferred_element_type=jnp.float32)

        # ---------------- GatedMLPBlock 1 ----------------
        xb = x.astype(jnp.bfloat16)
        u = _gelu(jnp.dot(xb, wu1_ref[...], preferred_element_type=jnp.float32))
        v = jnp.dot(xb, wv1_ref[...], preferred_element_type=jnp.float32)
        x = x + jnp.dot((u * v).astype(jnp.bfloat16), wo1_ref[...],
                        preferred_element_type=jnp.float32)

        # ---------------- GatedMLPBlock 2 ----------------
        xb = x.astype(jnp.bfloat16)
        u = _gelu(jnp.dot(xb, wu2_ref[...], preferred_element_type=jnp.float32))
        v = jnp.dot(xb, wv2_ref[...], preferred_element_type=jnp.float32)
        x = x + jnp.dot((u * v).astype(jnp.bfloat16), wo2_ref[...],
                        preferred_element_type=jnp.float32)

        # z2 block index is constant across vi -> stays resident, written back once per bi.
        z2_ref[...] = x.astype(z2_ref.dtype)
        x_scratch[...] = x.astype(jnp.bfloat16)            # bf16 scratch: cast once

    # ---- HyperAdapter head: vocab-tiled, runs every (bi, vi) on the streamed wa tile ----
    bias_ref[...] = (jnp.dot(x_scratch[...], wa_ref[...],
                             preferred_element_type=jnp.float32)
                     + ba_ref[...]).astype(bias_ref.dtype)


def prepare_params(params):
    """One-time weight transformation (call ONCE, outside the hot path):
    bf16 cast, MoE expert-stack fusion, gate-expand matrix precompute."""
    bf = lambda w: jnp.asarray(w, jnp.bfloat16)
    E, D, H = params["we1"].shape
    eh = E * H
    rows = jax.lax.broadcasted_iota(jnp.int32, (E, eh), 0)
    cols = jax.lax.broadcasted_iota(jnp.int32, (E, eh), 1) // H
    return {
        "wg":      bf(params["wg"]),                                        # (D, E)
        "we1_all": bf(jnp.transpose(params["we1"], (1, 0, 2)).reshape(D, eh)),  # (D, E*H)
        "we2_all": bf(params["we2"].reshape(eh, D)),                         # (E*H, D)
        "expand":  (rows == cols).astype(jnp.bfloat16),                      # (E, E*H)
        "kT":      bf(params["kT"]),
        "v_mem":   bf(params["v_mem"]),
        "wu1": bf(params["wu1"]), "wv1": bf(params["wv1"]), "wo1": bf(params["wo1"]),
        "wu2": bf(params["wu2"]), "wv2": bf(params["wv2"]), "wo2": bf(params["wo2"]),
        "wa":      bf(params["wa"]),                                         # (D, V)
        "ba":      jnp.asarray(params["ba"], jnp.float32),                   # (1, V)
    }


def composite_transition_net(z, prepared, *, tile_b=None, tile_v=None):
    B, D = z.shape
    E = prepared["wg"].shape[1]
    EH = prepared["we1_all"].shape[1]
    H = EH // E
    M = prepared["kT"].shape[1]
    G = prepared["wu1"].shape[1]
    V = prepared["wa"].shape[1]

    # tile_b: whole batch when small -> wa streamed exactly once; else 256-row tiles.
    if tile_b is None:
        tile_b = B if B <= 256 else 256
    # tile_v: lane-dense, big enough to amortize per-step overhead.
    if tile_v is None:
        tile_v = min(V, 512)
    assert B % tile_b == 0 and V % tile_v == 0 and tile_v % 128 == 0

    weights = (prepared["wg"], prepared["we1_all"], prepared["we2_all"],
               prepared["expand"], prepared["kT"], prepared["v_mem"],
               prepared["wu1"], prepared["wv1"], prepared["wo1"],
               prepared["wu2"], prepared["wv2"], prepared["wo2"])
    wa, ba = prepared["wa"], prepared["ba"]

    def full_spec(w):
        nd = w.ndim
        # Constant block index across the whole grid -> single-buffered.
        return pl.BlockSpec(w.shape, lambda bi, vi, nd=nd: (0,) * nd,
                            pipeline_mode=pl.Buffered(1))

    in_specs = ([pl.BlockSpec((tile_b, D), lambda bi, vi: (bi, 0))]
                + [full_spec(w) for w in weights]
                + [pl.BlockSpec((D, tile_v), lambda bi, vi: (0, vi)),
                   pl.BlockSpec((1, tile_v), lambda bi, vi: (0, vi))])
    out_specs = (pl.BlockSpec((tile_b, D), lambda bi, vi: (bi, 0)),
                 pl.BlockSpec((tile_b, tile_v), lambda bi, vi: (bi, vi)))
    grid = (B // tile_b, V // tile_v)

    # Advisory cost estimate for XLA scheduling.
    flops = 2 * B * D * (E + 2 * E * H + 2 * M + 6 * G + V) + 2 * B * E * E * H
    transcendentals = B * (E + M + 4 * G + 4)
    nbytes = lambda a: int(a.size) * a.dtype.itemsize
    bytes_accessed = (sum(nbytes(w) for w in weights) + nbytes(wa) + nbytes(ba)
                      + B * D * 4 * 2 + B * V * 4)

    # VMEM budget: single-buffered resident weights + double-buffered streamed tiles.
    resident = sum(nbytes(w) for w in weights)
    streamed = 2 * (tile_b * D * 4            # z tile (f32)
                    + D * tile_v * 2          # wa tile (bf16)
                    + tile_v * 4              # ba tile (f32)
                    + tile_b * D * 4          # z2 out tile
                    + tile_b * tile_v * 4)    # bias out tile
    needed = resident + streamed + tile_b * D * 2   # + bf16 x_scratch
    try:
        phys = pltpu.get_tpu_info().vmem_capacity_bytes
    except Exception:
        phys = 64 << 20
    cap = min(48 << 20, (phys * 3) // 4)             # v7x-safe headroom
    vmem_limit = int(min(cap, needed + (8 << 20)))
    vmem_limit = int(max(vmem_limit, needed + (2 << 20)))

    return pl.pallas_call(
        composite_kernel,
        out_shape=(jax.ShapeDtypeStruct((B, D), jnp.float32),
                   jax.ShapeDtypeStruct((B, V), jnp.float32)),
        grid_spec=pltpu.PrefetchScalarGridSpec(
            num_scalar_prefetch=0,
            grid=grid,
            in_specs=in_specs,
            out_specs=out_specs,
            scratch_shapes=[pltpu.VMEM((tile_b, D), jnp.bfloat16)]),
        compiler_params=pltpu.CompilerParams(
            dimension_semantics=("parallel", "arbitrary"),
            vmem_limit_bytes=vmem_limit),
        cost_estimate=pl.CostEstimate(flops=flops,
                                      transcendentals=transcendentals,
                                      bytes_accessed=bytes_accessed),
    )(z, *weights, wa, ba)


def init_params(key, d_model, n_experts, expert_hidden, n_mem, gmlp_hidden, vocab):
    ks = jax.random.split(key, 13)
    s = 0.02
    return {
        # SparseMoE
        "wg":  s * jax.random.normal(ks[0], (d_model, n_experts), jnp.float32),
        "we1": s * jax.random.normal(ks[1], (n_experts, d_model, expert_hidden), jnp.float32),
        "we2": s * jax.random.normal(ks[2], (n_experts, expert_hidden, d_model), jnp.float32),
        # KeyValueMemory (keys stored pre-transposed: (D, M))
        "kT":    s * jax.random.normal(ks[3], (d_model, n_mem), jnp.float32),
        "v_mem": s * jax.random.normal(ks[4], (n_mem, d_model), jnp.float32),
        # GatedMLPBlock 1
        "wu1": s * jax.random.normal(ks[5], (d_model, gmlp_hidden), jnp.float32),
        "wv1": s * jax.random.normal(ks[6], (d_model, gmlp_hidden), jnp.float32),
        "wo1": s * jax.random.normal(ks[7], (gmlp_hidden, d_model), jnp.float32),
        # GatedMLPBlock 2
        "wu2": s * jax.random.normal(ks[8], (d_model, gmlp_hidden), jnp.float32),
        "wv2": s * jax.random.normal(ks[9], (d_model, gmlp_hidden), jnp.float32),
        "wo2": s * jax.random.normal(ks[10], (gmlp_hidden, d_model), jnp.float32),
        # HyperAdapter(vocab_size)
        "wa": s * jax.random.normal(ks[11], (d_model, vocab), jnp.float32),
        "ba": s * jax.random.normal(ks[12], (1, vocab), jnp.float32),
    }


if __name__ == "__main__":
    B, D = 16, 128          # batch, latent dim (lane-dense)
    E, H = 4, 128           # experts, expert hidden (E*H = 512)
    M = 128                 # memory slots
    G = 256                 # gated-MLP hidden
    VOCAB = 1024            # vocab_size for HyperAdapter (2 tiles of 512)

    key = jax.random.PRNGKey(0)
    k_z, k_p = jax.random.split(key)
    z = jax.random.normal(k_z, (B, D), jnp.float32)
    params = init_params(k_p, D, E, H, M, G, VOCAB)
    prepared = prepare_params(params)   # one-time bf16 cast + expert fusion

    z2hat, bias_hat = composite_transition_net(z, prepared)
    jax.block_until_ready((z2hat, bias_hat))

    assert z2hat.shape == (B, D) and bias_hat.shape == (B, VOCAB)
    assert jnp.all(jnp.isfinite(z2hat)) and jnp.all(jnp.isfinite(bias_hat))
    print("KERNEL_OK")
</pallas_src>

<mosaic_0001>
module attributes {stable_mosaic.version = 11 : i64} {
  func.func @composite_kernel(%arg0: i32, %arg1: i32, %arg2: memref<16x128xf32, #tpu.memory_space<vmem>>, %arg3: memref<128x4xbf16, #tpu.memory_space<vmem>>, %arg4: memref<128x512xbf16, #tpu.memory_space<vmem>>, %arg5: memref<512x128xbf16, #tpu.memory_space<vmem>>, %arg6: memref<4x512xbf16, #tpu.memory_space<vmem>>, %arg7: memref<128x128xbf16, #tpu.memory_space<vmem>>, %arg8: memref<128x128xbf16, #tpu.memory_space<vmem>>, %arg9: memref<128x256xbf16, #tpu.memory_space<vmem>>, %arg10: memref<128x256xbf16, #tpu.memory_space<vmem>>, %arg11: memref<256x128xbf16, #tpu.memory_space<vmem>>, %arg12: memref<128x256xbf16, #tpu.memory_space<vmem>>, %arg13: memref<128x256xbf16, #tpu.memory_space<vmem>>, %arg14: memref<256x128xbf16, #tpu.memory_space<vmem>>, %arg15: memref<128x512xbf16, #tpu.memory_space<vmem>>, %arg16: memref<1x512xf32, #tpu.memory_space<vmem>>, %arg17: memref<16x128xf32, #tpu.memory_space<vmem>>, %arg18: memref<16x512xf32, #tpu.memory_space<vmem>>, %arg19: memref<16x128xbf16, #tpu.memory_space<vmem>>) attributes {dimension_semantics = [#tpu.dimension_semantics<parallel>, #tpu.dimension_semantics<arbitrary>], iteration_bounds = array<i64: 1, 2>, scalar_prefetch = 0 : i64, scratch_operands = 1 : i64, tpu.core_type = #tpu.core_type<tc>, window_params = [{transform_indices = @transform_0, window_bounds = array<i64: 16, 128>}, {pipeline_mode = #tpu.pipeline_mode<synchronous>, transform_indices = @transform_1, window_bounds = array<i64: 128, 4>}, {pipeline_mode = #tpu.pipeline_mode<synchronous>, transform_indices = @transform_2, window_bounds = array<i64: 128, 512>}, {pipeline_mode = #tpu.pipeline_mode<synchronous>, transform_indices = @transform_3, window_bounds = array<i64: 512, 128>}, {pipeline_mode = #tpu.pipeline_mode<synchronous>, transform_indices = @transform_4, window_bounds = array<i64: 4, 512>}, {pipeline_mode = #tpu.pipeline_mode<synchronous>, transform_indices = @transform_5, window_bounds = array<i64: 128, 128>}, {pipeline_mode = #tpu.pipeline_mode<synchronous>, transform_indices = @transform_6, window_bounds = array<i64: 128, 128>}, {pipeline_mode = #tpu.pipeline_mode<synchronous>, transform_indices = @transform_7, window_bounds = array<i64: 128, 256>}, {pipeline_mode = #tpu.pipeline_mode<synchronous>, transform_indices = @transform_8, window_bounds = array<i64: 128, 256>}, {pipeline_mode = #tpu.pipeline_mode<synchronous>, transform_indices = @transform_9, window_bounds = array<i64: 256, 128>}, {pipeline_mode = #tpu.pipeline_mode<synchronous>, transform_indices = @transform_10, window_bounds = array<i64: 128, 256>}, {pipeline_mode = #tpu.pipeline_mode<synchronous>, transform_indices = @transform_11, window_bounds = array<i64: 128, 256>}, {pipeline_mode = #tpu.pipeline_mode<synchronous>, transform_indices = @transform_12, window_bounds = array<i64: 256, 128>}, {transform_indices = @transform_13, window_bounds = array<i64: 128, 512>}, {transform_indices = @transform_14, window_bounds = array<i64: 1, 512>}, {transform_indices = @transform_15, window_bounds = array<i64: 16, 128>}, {transform_indices = @transform_16, window_bounds = array<i64: 16, 512>}]} {
    %c0_i32 = arith.constant 0 : i32
    %0 = arith.cmpi eq, %arg1, %c0_i32 : i32
    %1 = arith.extui %0 : i1 to i32
    %c0_i32_0 = arith.constant 0 : i32
    %2 = arith.cmpi ne, %1, %c0_i32_0 : i32
    scf.if %2 {
      %c0_8 = arith.constant 0 : index
      %c0_9 = arith.constant 0 : index
      %10 = vector.load %arg2[%c0_8, %c0_9] : memref<16x128xf32, #tpu.memory_space<vmem>>, vector<16x128xf32>
      %11 = arith.truncf %10 : vector<16x128xf32> to vector<16x128xbf16>
      %c0_10 = arith.constant 0 : index
      %c0_11 = arith.constant 0 : index
      %12 = vector.load %arg3[%c0_10, %c0_11] : memref<128x4xbf16, #tpu.memory_space<vmem>>, vector<128x4xbf16>
      %cst_12 = arith.constant dense<0.000000e+00> : vector<16x4xf32>
      %13 = tpu.matmul %11, %12, %cst_12 {dimension_numbers = #tpu.dot_dimension_numbers<[1], [0], [0], [1], [0, 0, 1, 1], [], []>} : vector<16x128xbf16>, vector<128x4xbf16>, vector<16x4xf32> -> vector<16x4xf32>
      %cst_13 = arith.constant dense<0xFF800000> : vector<16xf32>
      %14 = vector.multi_reduction <maximumf>, %13, %cst_13 [1] : vector<16x4xf32> to vector<16xf32>
      %15 = vector.shape_cast %14 : vector<16xf32> to vector<16x1xf32>
      %16 = vector.broadcast %15 : vector<16x1xf32> to vector<16x4xf32>
      %17 = arith.subf %13, %16 : vector<16x4xf32>
      %18 = math.exp %17 : vector<16x4xf32>
      %cst_14 = arith.constant dense<0.000000e+00> : vector<16xf32>
      %19 = vector.multi_reduction <add>, %18, %cst_14 [1] : vector<16x4xf32> to vector<16xf32>
      %20 = vector.shape_cast %19 : vector<16xf32> to vector<16x1xf32>
      %21 = tpu.reciprocal %20 {approx = true} : vector<16x1xf32> -> vector<16x1xf32>
      %22 = vector.broadcast %21 : vector<16x1xf32> to vector<16x4xf32>
      %23 = arith.mulf %18, %22 : vector<16x4xf32>
      %c0_15 = arith.constant 0 : index
      %c0_16 = arith.constant 0 : index
      %24 = vector.load %arg4[%c0_15, %c0_16] : memref<128x512xbf16, #tpu.memory_space<vmem>>, vector<128x512xbf16>
      %cst_17 = arith.constant dense<0.000000e+00> : vector<16x512xf32>
      %25 = tpu.matmul %11, %24, %cst_17 {dimension_numbers = #tpu.dot_dimension_numbers<[1], [0], [0], [1], [0, 0, 1, 1], [], []>} : vector<16x128xbf16>, vector<128x512xbf16>, vector<16x512xf32> -> vector<16x512xf32>
      %cst_18 = arith.constant 0.000000e+00 : f32
      %26 = vector.broadcast %cst_18 : f32 to vector<16x512xf32>
      %27 = arith.maximumf %25, %26 : vector<16x512xf32>
      %28 = arith.truncf %23 : vector<16x4xf32> to vector<16x4xbf16>
      %c0_19 = arith.constant 0 : index
      %c0_20 = arith.constant 0 : index
      %29 = vector.load %arg6[%c0_19, %c0_20] : memref<4x512xbf16, #tpu.memory_space<vmem>>, vector<4x512xbf16>
      %cst_21 = arith.constant dense<0.000000e+00> : vector<16x512xf32>
      %30 = tpu.matmul %28, %29, %cst_21 {dimension_numbers = #tpu.dot_dimension_numbers<[1], [0], [0], [1], [0, 0, 1, 1], [], []>} : vector<16x4xbf16>, vector<4x512xbf16>, vector<16x512xf32> -> vector<16x512xf32>
      %31 = arith.mulf %30, %27 : vector<16x512xf32>
      %32 = arith.truncf %31 : vector<16x512xf32> to vector<16x512xbf16>
      %c0_22 = arith.constant 0 : index
      %c0_23 = arith.constant 0 : index
      %33 = vector.load %arg5[%c0_22, %c0_23] : memref<512x128xbf16, #tpu.memory_space<vmem>>, vector<512x128xbf16>
      %cst_24 = arith.constant dense<0.000000e+00> : vector<16x128xf32>
      %34 = tpu.matmul %32, %33, %cst_24 {dimension_numbers = #tpu.dot_dimension_numbers<[1], [0], [0], [1], [0, 0, 1, 1], [], []>} : vector<16x512xbf16>, vector<512x128xbf16>, vector<16x128xf32> -> vector<16x128xf32>
      %c0_25 = arith.constant 0 : index
      %c0_26 = arith.constant 0 : index
      %35 = vector.load %arg7[%c0_25, %c0_26] : memref<128x128xbf16, #tpu.memory_space<vmem>>, vector<128x128xbf16>
      %cst_27 = arith.constant dense<0.000000e+00> : vector<16x128xf32>
      %36 = tpu.matmul %11, %35, %cst_27 {dimension_numbers = #tpu.dot_dimension_numbers<[1], [0], [0], [1], [0, 0, 1, 1], [], []>} : vector<16x128xbf16>, vector<128x128xbf16>, vector<16x128xf32> -> vector<16x128xf32>
      %cst_28 = arith.constant 0.0883883461 : f32
      %37 = vector.broadcast %cst_28 : f32 to vector<16x128xf32>
      %38 = arith.mulf %36, %37 : vector<16x128xf32>
      %cst_29 = arith.constant dense<0xFF800000> : vector<16xf32>
      %39 = vector.multi_reduction <maximumf>, %38, %cst_29 [1] : vector<16x128xf32> to vector<16xf32>
      %40 = vector.shape_cast %39 : vector<16xf32> to vector<16x1xf32>
      %41 = vector.broadcast %40 : vector<16x1xf32> to vector<16x128xf32>
      %42 = arith.subf %38, %41 : vector<16x128xf32>
      %43 = math.exp %42 : vector<16x128xf32>
      %cst_30 = arith.constant dense<0.000000e+00> : vector<16xf32>
      %44 = vector.multi_reduction <add>, %43, %cst_30 [1] : vector<16x128xf32> to vector<16xf32>
      %45 = vector.shape_cast %44 : vector<16xf32> to vector<16x1xf32>
      %46 = tpu.reciprocal %45 {approx = true} : vector<16x1xf32> -> vector<16x1xf32>
      %47 = vector.broadcast %46 : vector<16x1xf32> to vector<16x128xf32>
      %48 = arith.mulf %43, %47 : vector<16x128xf32>
      %49 = arith.truncf %48 : vector<16x128xf32> to vector<16x128xbf16>
      %c0_31 = arith.constant 0 : index
      %c0_32 = arith.constant 0 : index
      %50 = vector.load %arg8[%c0_31, %c0_32] : memref<128x128xbf16, #tpu.memory_space<vmem>>, vector<128x128xbf16>
      %cst_33 = arith.constant dense<0.000000e+00> : vector<16x128xf32>
      %51 = tpu.matmul %49, %50, %cst_33 {dimension_numbers = #tpu.dot_dimension_numbers<[1], [0], [0], [1], [0, 0, 1, 1], [], []>} : vector<16x128xbf16>, vector<128x128xbf16>, vector<16x128xf32> -> vector<16x128xf32>
      %52 = arith.addf %34, %51 : vector<16x128xf32>
      %53 = arith.truncf %52 : vector<16x128xf32> to vector<16x128xbf16>
      %c0_34 = arith.constant 0 : index
      %c0_35 = arith.constant 0 : index
      %54 = vector.load %arg9[%c0_34, %c0_35] : memref<128x256xbf16, #tpu.memory_space<vmem>>, vector<128x256xbf16>
      %cst_36 = arith.constant dense<0.000000e+00> : vector<16x256xf32>
      %55 = tpu.matmul %53, %54, %cst_36 {dimension_numbers = #tpu.dot_dimension_numbers<[1], [0], [0], [1], [0, 0, 1, 1], [], []>} : vector<16x128xbf16>, vector<128x256xbf16>, vector<16x256xf32> -> vector<16x256xf32>
      %cst_37 = arith.constant 5.000000e-01 : f32
      %56 = vector.broadcast %cst_37 : f32 to vector<16x256xf32>
      %57 = arith.mulf %56, %55 : vector<16x256xf32>
      %cst_38 = arith.constant 4.471500e-02 : f32
      %58 = vector.broadcast %cst_38 : f32 to vector<16x256xf32>
      %59 = arith.mulf %58, %55 : vector<16x256xf32>
      %60 = arith.mulf %59, %55 : vector<16x256xf32>
      %61 = arith.mulf %60, %55 : vector<16x256xf32>
      %62 = arith.addf %55, %61 : vector<16x256xf32>
      %cst_39 = arith.constant 0.797884583 : f32
      %63 = vector.broadcast %cst_39 : f32 to vector<16x256xf32>
      %64 = arith.mulf %63, %62 : vector<16x256xf32>
      %65 = math.tanh %64 : vector<16x256xf32>
      %cst_40 = arith.constant 1.000000e+00 : f32
      %66 = vector.broadcast %cst_40 : f32 to vector<16x256xf32>
      %67 = arith.addf %66, %65 : vector<16x256xf32>
      %68 = arith.mulf %57, %67 : vector<16x256xf32>
      %c0_41 = arith.constant 0 : index
      %c0_42 = arith.constant 0 : index
      %69 = vector.load %arg10[%c0_41, %c0_42] : memref<128x256xbf16, #tpu.memory_space<vmem>>, vector<128x256xbf16>
      %cst_43 = arith.constant dense<0.000000e+00> : vector<16x256xf32>
      %70 = tpu.matmul %53, %69, %cst_43 {dimension_numbers = #tpu.dot_dimension_numbers<[1], [0], [0], [1], [0, 0, 1, 1], [], []>} : vector<16x128xbf16>, vector<128x256xbf16>, vector<16x256xf32> -> vector<16x256xf32>
      %71 = arith.mulf %68, %70 : vector<16x256xf32>
      %72 = arith.truncf %71 : vector<16x256xf32> to vector<16x256xbf16>
      %c0_44 = arith.constant 0 : index
      %c0_45 = arith.constant 0 : index
      %73 = vector.load %arg11[%c0_44, %c0_45] : memref<256x128xbf16, #tpu.memory_space<vmem>>, vector<256x128xbf16>
      %cst_46 = arith.constant dense<0.000000e+00> : vector<16x128xf32>
      %74 = tpu.matmul %72, %73, %cst_46 {dimension_numbers = #tpu.dot_dimension_numbers<[1], [0], [0], [1], [0, 0, 1, 1], [], []>} : vector<16x256xbf16>, vector<256x128xbf16>, vector<16x128xf32> -> vector<16x128xf32>
      %75 = arith.addf %52, %74 : vector<16x128xf32>
      %76 = arith.truncf %75 : vector<16x128xf32> to vector<16x128xbf16>
      %c0_47 = arith.constant 0 : index
      %c0_48 = arith.constant 0 : index
      %77 = vector.load %arg12[%c0_47, %c0_48] : memref<128x256xbf16, #tpu.memory_space<vmem>>, vector<128x256xbf16>
      %cst_49 = arith.constant dense<0.000000e+00> : vector<16x256xf32>
      %78 = tpu.matmul %76, %77, %cst_49 {dimension_numbers = #tpu.dot_dimension_numbers<[1], [0], [0], [1], [0, 0, 1, 1], [], []>} : vector<16x128xbf16>, vector<128x256xbf16>, vector<16x256xf32> -> vector<16x256xf32>
      %cst_50 = arith.constant 5.000000e-01 : f32
      %79 = vector.broadcast %cst_50 : f32 to vector<16x256xf32>
      %80 = arith.mulf %79, %78 : vector<16x256xf32>
      %cst_51 = arith.constant 4.471500e-02 : f32
      %81 = vector.broadcast %cst_51 : f32 to vector<16x256xf32>
      %82 = arith.mulf %81, %78 : vector<16x256xf32>
      %83 = arith.mulf %82, %78 : vector<16x256xf32>
      %84 = arith.mulf %83, %78 : vector<16x256xf32>
      %85 = arith.addf %78, %84 : vector<16x256xf32>
      %cst_52 = arith.constant 0.797884583 : f32
      %86 = vector.broadcast %cst_52 : f32 to vector<16x256xf32>
      %87 = arith.mulf %86, %85 : vector<16x256xf32>
      %88 = math.tanh %87 : vector<16x256xf32>
      %cst_53 = arith.constant 1.000000e+00 : f32
      %89 = vector.broadcast %cst_53 : f32 to vector<16x256xf32>
      %90 = arith.addf %89, %88 : vector<16x256xf32>
      %91 = arith.mulf %80, %90 : vector<16x256xf32>
      %c0_54 = arith.constant 0 : index
      %c0_55 = arith.constant 0 : index
      %92 = vector.load %arg13[%c0_54, %c0_55] : memref<128x256xbf16, #tpu.memory_space<vmem>>, vector<128x256xbf16>
      %cst_56 = arith.constant dense<0.000000e+00> : vector<16x256xf32>
      %93 = tpu.matmul %76, %92, %cst_56 {dimension_numbers = #tpu.dot_dimension_numbers<[1], [0], [0], [1], [0, 0, 1, 1], [], []>} : vector<16x128xbf16>, vector<128x256xbf16>, vector<16x256xf32> -> vector<16x256xf32>
      %94 = arith.mulf %91, %93 : vector<16x256xf32>
      %95 = arith.truncf %94 : vector<16x256xf32> to vector<16x256xbf16>
      %c0_57 = arith.constant 0 : index
      %c0_58 = arith.constant 0 : index
      %96 = vector.load %arg14[%c0_57, %c0_58] : memref<256x128xbf16, #tpu.memory_space<vmem>>, vector<256x128xbf16>
      %cst_59 = arith.constant dense<0.000000e+00> : vector<16x128xf32>
      %97 = tpu.matmul %95, %96, %cst_59 {dimension_numbers = #tpu.dot_dimension_numbers<[1], [0], [0], [1], [0, 0, 1, 1], [], []>} : vector<16x256xbf16>, vector<256x128xbf16>, vector<16x128xf32> -> vector<16x128xf32>
      %98 = arith.addf %75, %97 : vector<16x128xf32>
      %c0_60 = arith.constant 0 : index
      %c0_61 = arith.constant 0 : index
      %99 = vector.load %arg17[%c0_60, %c0_61] : memref<16x128xf32, #tpu.memory_space<vmem>>, vector<16x128xf32>
      tpu.vector_store %arg17[%c0_60, %c0_61], %98 {strides = array<i32>} : memref<16x128xf32, #tpu.memory_space<vmem>>, vector<16x128xf32>,
      %100 = arith.truncf %98 : vector<16x128xf32> to vector<16x128xbf16>
      %c0_62 = arith.constant 0 : index
      %c0_63 = arith.constant 0 : index
      %101 = vector.load %arg19[%c0_62, %c0_63] : memref<16x128xbf16, #tpu.memory_space<vmem>>, vector<16x128xbf16>
      tpu.vector_store %arg19[%c0_62, %c0_63], %100 {strides = array<i32>} : memref<16x128xbf16, #tpu.memory_space<vmem>>, vector<16x128xbf16>,
    } else {
    }
    %c0 = arith.constant 0 : index
    %c0_1 = arith.constant 0 : index
    %3 = vector.load %arg19[%c0, %c0_1] : memref<16x128xbf16, #tpu.memory_space<vmem>>, vector<16x128xbf16>
    %c0_2 = arith.constant 0 : index
    %c0_3 = arith.constant 0 : index
    %4 = vector.load %arg15[%c0_2, %c0_3] : memref<128x512xbf16, #tpu.memory_space<vmem>>, vector<128x512xbf16>
    %cst = arith.constant dense<0.000000e+00> : vector<16x512xf32>
    %5 = tpu.matmul %3, %4, %cst {dimension_numbers = #tpu.dot_dimension_numbers<[1], [0], [0], [1], [0, 0, 1, 1], [], []>} : vector<16x128xbf16>, vector<128x512xbf16>, vector<16x512xf32> -> vector<16x512xf32>
    %c0_4 = arith.constant 0 : index
    %c0_5 = arith.constant 0 : index
    %6 = vector.load %arg16[%c0_4, %c0_5] : memref<1x512xf32, #tpu.memory_space<vmem>>, vector<1x512xf32>
    %7 = vector.broadcast %6 : vector<1x512xf32> to vector<16x512xf32>
    %8 = arith.addf %5, %7 : vector<16x512xf32>
    %c0_6 = arith.constant 0 : index
    %c0_7 = arith.constant 0 : index
    %9 = vector.load %arg18[%c0_6, %c0_7] : memref<16x512xf32, #tpu.memory_space<vmem>>, vector<16x512xf32>
    tpu.vector_store %arg18[%c0_6, %c0_7], %8 {strides = array<i32>} : memref<16x512xf32, #tpu.memory_space<vmem>>, vector<16x512xf32>,
    return
  }
  func.func @transform_0(%arg0: i32, %arg1: i32) -> (i32, i32) {
    %c0_i32 = arith.constant 0 : i32
    %c0_i32_0 = arith.constant 0 : i32
    return %arg0, %c0_i32 : i32, i32
  }
  func.func @transform_1(%arg0: i32, %arg1: i32) -> (i32, i32) {
    %c0_i32 = arith.constant 0 : i32
    %c0_i32_0 = arith.constant 0 : i32
    %c0_i32_1 = arith.constant 0 : i32
    return %c0_i32, %c0_i32_0 : i32, i32
  }
  func.func @transform_2(%arg0: i32, %arg1: i32) -> (i32, i32) {
    %c0_i32 = arith.constant 0 : i32
    %c0_i32_0 = arith.constant 0 : i32
    %c0_i32_1 = arith.constant 0 : i32
    return %c0_i32, %c0_i32_0 : i32, i32
  }
  func.func @transform_3(%arg0: i32, %arg1: i32) -> (i32, i32) {
    %c0_i32 = arith.constant 0 : i32
    %c0_i32_0 = arith.constant 0 : i32
    %c0_i32_1 = arith.constant 0 : i32
    return %c0_i32, %c0_i32_0 : i32, i32
  }
  func.func @transform_4(%arg0: i32, %arg1: i32) -> (i32, i32) {
    %c0_i32 = arith.constant 0 : i32
    %c0_i32_0 = arith.constant 0 : i32
    %c0_i32_1 = arith.constant 0 : i32
    return %c0_i32, %c0_i32_0 : i32, i32
  }
  func.func @transform_5(%arg0: i32, %arg1: i32) -> (i32, i32) {
    %c0_i32 = arith.constant 0 : i32
    %c0_i32_0 = arith.constant 0 : i32
    %c0_i32_1 = arith.constant 0 : i32
    return %c0_i32, %c0_i32_0 : i32, i32
  }
  func.func @transform_6(%arg0: i32, %arg1: i32) -> (i32, i32) {
    %c0_i32 = arith.constant 0 : i32
    %c0_i32_0 = arith.constant 0 : i32
    %c0_i32_1 = arith.constant 0 : i32
    return %c0_i32, %c0_i32_0 : i32, i32
  }
  func.func @transform_7(%arg0: i32, %arg1: i32) -> (i32, i32) {
    %c0_i32 = arith.constant 0 : i32
    %c0_i32_0 = arith.constant 0 : i32
    %c0_i32_1 = arith.constant 0 : i32
    return %c0_i32, %c0_i32_0 : i32, i32
  }
  func.func @transform_8(%arg0: i32, %arg1: i32) -> (i32, i32) {
    %c0_i32 = arith.constant 0 : i32
    %c0_i32_0 = arith.constant 0 : i32
    %c0_i32_1 = arith.constant 0 : i32
    return %c0_i32, %c0_i32_0 : i32, i32
  }
  func.func @transform_9(%arg0: i32, %arg1: i32) -> (i32, i32) {
    %c0_i32 = arith.constant 0 : i32
    %c0_i32_0 = arith.constant 0 : i32
    %c0_i32_1 = arith.constant 0 : i32
    return %c0_i32, %c0_i32_0 : i32, i32
  }
  func.func @transform_10(%arg0: i32, %arg1: i32) -> (i32, i32) {
    %c0_i32 = arith.constant 0 : i32
    %c0_i32_0 = arith.constant 0 : i32
    %c0_i32_1 = arith.constant 0 : i32
    return %c0_i32, %c0_i32_0 : i32, i32
  }
  func.func @transform_11(%arg0: i32, %arg1: i32) -> (i32, i32) {
    %c0_i32 = arith.constant 0 : i32
    %c0_i32_0 = arith.constant 0 : i32
    %c0_i32_1 = arith.constant 0 : i32
    return %c0_i32, %c0_i32_0 : i32, i32
  }
  func.func @transform_12(%arg0: i32, %arg1: i32) -> (i32, i32) {
    %c0_i32 = arith.constant 0 : i32
    %c0_i32_0 = arith.constant 0 : i32
    %c0_i32_1 = arith.constant 0 : i32
    return %c0_i32, %c0_i32_0 : i32, i32
  }
  func.func @transform_13(%arg0: i32, %arg1: i32) -> (i32, i32) {
    %c0_i32 = arith.constant 0 : i32
    %c0_i32_0 = arith.constant 0 : i32
    return %c0_i32, %arg1 : i32, i32
  }
  func.func @transform_14(%arg0: i32, %arg1: i32) -> (i32, i32) {
    %c0_i32 = arith.constant 0 : i32
    %c0_i32_0 = arith.constant 0 : i32
    return %c0_i32, %arg1 : i32, i32
  }
  func.func @transform_15(%arg0: i32, %arg1: i32) -> (i32, i32) {
    %c0_i32 = arith.constant 0 : i32
    %c0_i32_0 = arith.constant 0 : i32
    return %arg0, %c0_i32 : i32, i32
  }
  func.func @transform_16(%arg0: i32, %arg1: i32) -> (i32, i32) {
    %c0_i32 = arith.constant 0 : i32
    return %arg0, %arg1 : i32, i32
  }
}

</mosaic_0001>

<llo_original>
// kernel: tpu_custom_call.1
$region0: #{tpu_custom_call.1}
  #allocation0 [shape = 'u32[]', space=smem, size = 0x4, offset = 0x4, fixed_abs, tag = 'smem constant byte address 0x4 - core index']
  #allocation1 [shape = 'u32[144,128]{1,0:T(1,128)}', space=vmem, size = 0x12000, scoped, tag = 'internal scratch']
  #allocation2 [shape = 'bf16[16,128]{1,0:T(16,128)(2,1)}', space=vmem, size = 0x1000, scoped, tag = 'scratch operand']
  %s0 = inlined_call_operand.vmem [shape: f32[16,128], index: 0, kind: input, shape index: {}]
  %s1 = inlined_call_operand.vmem [shape: bf16[128,4], index: 1, kind: input, shape index: {}]
  %s2 = inlined_call_operand.hbm [shape: bf16[128,512], index: 2, kind: input, shape index: {}]
  %s3 = inlined_call_operand.hbm [shape: bf16[512,128], index: 3, kind: input, shape index: {}]
  %s4 = inlined_call_operand.hbm [shape: bf16[4,512], index: 4, kind: input, shape index: {}]
  %s5 = inlined_call_operand.vmem [shape: bf16[128,128], index: 5, kind: input, shape index: {}]
  %s6 = inlined_call_operand.hbm [shape: bf16[128,128], index: 6, kind: input, shape index: {}]
  %s7 = inlined_call_operand.hbm [shape: bf16[128,256], index: 7, kind: input, shape index: {}]
  %s8 = inlined_call_operand.hbm [shape: bf16[128,256], index: 8, kind: input, shape index: {}]
  %s9 = inlined_call_operand.hbm [shape: bf16[256,128], index: 9, kind: input, shape index: {}]
  %s10 = inlined_call_operand.hbm [shape: bf16[128,256], index: 10, kind: input, shape index: {}]
  %s11 = inlined_call_operand.hbm [shape: bf16[128,256], index: 11, kind: input, shape index: {}]
  %s12 = inlined_call_operand.hbm [shape: bf16[256,128], index: 12, kind: input, shape index: {}]
  %s13 = inlined_call_operand.hbm [shape: bf16[128,1024], index: 13, kind: input, shape index: {}]
  %s14 = inlined_call_operand.vmem [shape: f32[1,1024], index: 14, kind: input, shape index: {}]
  %s15 = inlined_call_operand.hbm [shape: f32[16,128], index: 15, kind: output, shape index: {0}]
  %s16 = inlined_call_operand.hbm [shape: f32[16,1024], index: 16, kind: output, shape index: {1}]
  %17 = xla_tuple %s15, %s16
  %s18 = sld [smem:[#allocation0]]
  $region149: #{tpu_custom_call.1} parent=0
    _
  %s20 = ssub.s32 1, %s18
  %s21 = scalar_select 0, %s20, %s18
  $region1: #{tpu_custom_call.1} parent=0
    #allocation3 [shape = 'u8[131072]{0}', space=vmem, size = 0x20000, scoped, tag = 'input window, operand 2, single buffered']
    #allocation4 [shape = 's32[2]{0}', space=sflag, size = 0x8, scoped, tag = 'scoped memory for tpu_custom_call.1']
    #allocation5 [shape = 's32[2]{0}', space=sflag, size = 0x8, scoped, tag = 'scoped memory for tpu_custom_call.1']
    #allocation6 [shape = 'u8[131072]{0}', space=vmem, size = 0x20000, scoped, tag = 'input window, operand 3, single buffered']
    #allocation7 [shape = 's32[1]{0}', space=sflag, size = 0x4, scoped, tag = 'scoped memory for tpu_custom_call.1']
    #allocation8 [shape = 'u8[4096]{0}', space=vmem, size = 0x1000, scoped, tag = 'input window, operand 4, single buffered']
    #allocation9 [shape = 'u8[32768]{0}', space=vmem, size = 0x8000, scoped, tag = 'input window, operand 6, single buffered']
    #allocation10 [shape = 's32[1]{0}', space=sflag, size = 0x4, scoped, tag = 'scoped memory for tpu_custom_call.1']
    #allocation11 [shape = 'u8[65536]{0}', space=vmem, size = 0x10000, scoped, tag = 'input window, operand 7, single buffered']
    #allocation12 [shape = 'u8[65536]{0}', space=vmem, size = 0x10000, scoped, tag = 'input window, operand 8, single buffered']
    #allocation13 [shape = 's32[1]{0}', space=sflag, size = 0x4, scoped, tag = 'scoped memory for tpu_custom_call.1']
    #allocation14 [shape = 'u8[65536]{0}', space=vmem, size = 0x10000, scoped, tag = 'input window, operand 9, single buffered']
    #allocation15 [shape = 'u8[65536]{0}', space=vmem, size = 0x10000, scoped, tag = 'input window, operand 10, single buffered']
    #allocation16 [shape = 's32[1]{0}', space=sflag, size = 0x4, scoped, tag = 'scoped memory for tpu_custom_call.1']
    #allocation17 [shape = 'u8[65536]{0}', space=vmem, size = 0x10000, scoped, tag = 'input window, operand 11, single buffered']
    #allocation18 [shape = 'u8[65536]{0}', space=vmem, size = 0x10000, scoped, tag = 'input window, operand 12, single buffered']
    #allocation19 [shape = 's32[1]{0}', space=sflag, size = 0x4, scoped, tag = 'scoped memory for tpu_custom_call.1']
    #allocation20 [shape = 'u8[262144]{0}', space=vmem, size = 0x40000, scoped, tag = 'input window, operand 13']
    #allocation21 [shape = 'u8[8192]{0}', space=vmem, size = 0x2000, scoped, tag = 'output window, operand 0, single buffered']
    #allocation22 [shape = 'u8[65536]{0}', space=vmem, size = 0x10000, scoped, tag = 'output window, operand 1']
    #allocation23 [shape = 's32[2]{0}', space=sflag, size = 0x8, scoped, tag = 'scoped memory for tpu_custom_call.1']
    %22 = vsyncpa [#allocation4], 0
    %23 = vsyncpa [#allocation7], 0
    %24 = vsyncpa [#allocation10], 0
    %25 = vsyncpa [#allocation13], 0
    %26 = vsyncpa [#allocation16], 0
    %27 = vsyncpa [#allocation19], 0
    %28 = vsyncpa [#allocation5], 0
    %29 = vsyncpa [#allocation23], 0
    %s30 = scalar_lea.sflag [#allocation23], 1
    %31 = vsyncpa %s30, 0
    loop: start=0, step=1, limit=4
    $region2: #{tpu_custom_call.1} parent=1 // loop_pre_header
      _
    $region3: #{tpu_custom_call.1} parent=1 // loop_header
      %s33 = sphi 0, %s37
      %p34 = scmp.ge.s32.totalorder %s33, 4
      %s40 = sphi 0, %s52
      %s41 = sphi 0, %s48
      %s42 = sphi 0, %s40
      %s43 = sphi 0, %s41
      %s44 = sphi 0, %s42
      %s45 = sphi 0, %s43
      %s55 = sphi 0, %s57
      %s58 = sphi 0, %s55
      %s59 = sphi 0, %s58
      %s75 = sphi 0, %s59
      %s79 = sphi 0, %s79
      %s81 = sphi 0, %s79
      %s82 = sphi 0, %s81
      %s96 = sphi 0, %s82
      %s100 = sphi 0, %s100
      %s102 = sphi 0, %s100
      %s103 = sphi 0, %s102
      %s117 = sphi 0, %s103
      %s121 = sphi 0, %s121
      %s123 = sphi 0, %s121
      %s124 = sphi 0, %s123
      %s138 = sphi 0, %s124
      %s142 = sphi 0, %s142
      %s144 = sphi 0, %s142
      %s145 = sphi 0, %s144
      %s159 = sphi 0, %s145
      %s163 = sphi 0, %s163
      %s165 = sphi 0, %s163
      %s166 = sphi 0, %s165
      %s180 = sphi 0, %s166
      %s184 = sphi 0, %s184
      %s186 = sphi 0, %s184
      %s187 = sphi 0, %s186
      %s201 = sphi 0, %s187
      %s205 = sphi 0, %s205
      %s207 = sphi 0, %s205
      %s208 = sphi 0, %s207
      %s222 = sphi 0, %s208
      %s226 = sphi 0, %s226
      %s228 = sphi 0, %s226
      %s229 = sphi 0, %s228
      %s243 = sphi 0, %s229
      %s247 = sphi 0, %s247
      %s249 = sphi 0, %s247
      %s250 = sphi 0, %s249
      %s264 = sphi 0, %s250
      %s268 = sphi 0, %s268
      %s270 = sphi 0, %s268
      %s271 = sphi 0, %s270
      %s285 = sphi 0, %s271
      %s289 = sphi 0, %s289
      %s291 = sphi 0, %s289
      %s292 = sphi 0, %s291
      %s306 = sphi 0, %s292
      %s310 = sphi 0, %s310
      %s312 = sphi 0, %s310
      %s313 = sphi 0, %s312
      %s327 = sphi 0, %s313
      %s333 = sphi 0, %s335
      %s336 = sphi 0, %s333
      %s337 = sphi 0, %s336
      %s353 = sphi 0, %s337
      %s359 = sphi 0, %s361
      %s362 = sphi 0, %s359
      %s363 = sphi 0, %s362
      %s379 = sphi 0, %s363
      %s385 = sphi 0, %s387
      %s388 = sphi 0, %s385
      %s389 = sphi 0, %s388
      %s405 = sphi 0, %s389
      %s413 = sphi 0, %s415
      %s416 = sphi 0, %s413
      %s417 = sphi 0, %s416
      %s433 = sphi 0, %s417
    $region4: #{tpu_custom_call.1} parent=1 // loop_header_branch
      %36 = sbr.rel (%p34) target = $region8
    $region5: #{tpu_custom_call.1} parent=1 // loop_body
      %s38 = ssub.s32 %s33, 1
      %s39 = ssub.s32 %s33, 2
      %s46 = sadd.s32 1, %s41
      %p47 = scmp.ge.s32.totalorder %s46, 2
      %s48 = scalar_select %p47, 0, %s46
      %s49 = sadd.s32 1, %s40
      %s50 = scalar_select %p47, %s49, %s40
      %p51 = scmp.ge.s32.totalorder %s50, 1
      %s52 = scalar_select %p51, 0, %s50
      %s53 = ssub.s32 %s40, %s52
      %p54 = scmp.eq.s32.totalorder %s53, 0
      %s56 = sadd.s32 %s55, 1
      %s57 = scalar_select %p54, %s55, %s56
      %p60 = pneg %p54
      %p61 = scmp.eq.s32.totalorder %s33, 1
      %p62 = por %p60, %p61
      %p63 = scmp.ne.s32.totalorder %s55, %s58
      %p64 = scmp.eq.s32.totalorder %s33, 0
      %p65 = por %p63, %p64
      %p66 = scmp.ne.s32.totalorder %s55, %s58
      %p67 = scmp.eq.s32.totalorder %s38, 1
      %p68 = por %p66, %p67
      %p69 = scmp.ne.s32.totalorder %s58, %s59
      %p70 = scmp.eq.s32.totalorder %s38, 0
      %p71 = por %p69, %p70
      %p72 = scmp.ne.s32.totalorder %s58, %s59
      %p73 = scmp.eq.s32.totalorder %s39, 1
      %p74 = por %p72, %p73
      %p76 = scmp.ne.s32.totalorder %s59, %s75
      %p77 = scmp.eq.s32.totalorder %s39, 0
      %p78 = por %p76, %p77
      %s80 = sadd.s32 %s79, 1
      %p83 = scmp.eq.s32.totalorder %s33, 1
      %p84 = scmp.ne.s32.totalorder %s79, %s81
      %p85 = scmp.eq.s32.totalorder %s33, 0
      %p86 = por %p84, %p85
      %p87 = scmp.ne.s32.totalorder %s79, %s81
      %p88 = scmp.eq.s32.totalorder %s38, 1
      %p89 = por %p87, %p88
      %p90 = scmp.ne.s32.totalorder %s81, %s82
      %p91 = scmp.eq.s32.totalorder %s38, 0
      %p92 = por %p90, %p91
      %p93 = scmp.ne.s32.totalorder %s81, %s82
      %p94 = scmp.eq.s32.totalorder %s39, 1
      %p95 = por %p93, %p94
      %p97 = scmp.ne.s32.totalorder %s82, %s96
      %p98 = scmp.eq.s32.totalorder %s39, 0
      %p99 = por %p97, %p98
      %s101 = sadd.s32 %s100, 1
      %p104 = scmp.eq.s32.totalorder %s33, 1
      %p105 = scmp.ne.s32.totalorder %s100, %s102
      %p106 = scmp.eq.s32.totalorder %s33, 0
      %p107 = por %p105, %p106
      %p108 = scmp.ne.s32.totalorder %s100, %s102
      %p109 = scmp.eq.s32.totalorder %s38, 1
      %p110 = por %p108, %p109
      %p111 = scmp.ne.s32.totalorder %s102, %s103
      %p112 = scmp.eq.s32.totalorder %s38, 0
      %p113 = por %p111, %p112
      %p114 = scmp.ne.s32.totalorder %s102, %s103
      %p115 = scmp.eq.s32.totalorder %s39, 1
      %p116 = por %p114, %p115
      %p118 = scmp.ne.s32.totalorder %s103, %s117
      %p119 = scmp.eq.s32.totalorder %s39, 0
      %p120 = por %p118, %p119
      %s122 = sadd.s32 %s121, 1
      %p125 = scmp.eq.s32.totalorder %s33, 1
      %p126 = scmp.ne.s32.totalorder %s121, %s123
      %p127 = scmp.eq.s32.totalorder %s33, 0
      %p128 = por %p126, %p127
      %p129 = scmp.ne.s32.totalorder %s121, %s123
      %p130 = scmp.eq.s32.totalorder %s38, 1
      %p131 = por %p129, %p130
      %p132 = scmp.ne.s32.totalorder %s123, %s124
      %p133 = scmp.eq.s32.totalorder %s38, 0
      %p134 = por %p132, %p133
      %p135 = scmp.ne.s32.totalorder %s123, %s124
      %p136 = scmp.eq.s32.totalorder %s39, 1
      %p137 = por %p135, %p136
      %p139 = scmp.ne.s32.totalorder %s124, %s138
      %p140 = scmp.eq.s32.totalorder %s39, 0
      %p141 = por %p139, %p140
      %s143 = sadd.s32 %s142, 1
      %p146 = scmp.eq.s32.totalorder %s33, 1
      %p147 = scmp.ne.s32.totalorder %s142, %s144
      %p148 = scmp.eq.s32.totalorder %s33, 0
      %p149 = por %p147, %p148
      %p150 = scmp.ne.s32.totalorder %s142, %s144
      %p151 = scmp.eq.s32.totalorder %s38, 1
      %p152 = por %p150, %p151
      %p153 = scmp.ne.s32.totalorder %s144, %s145
      %p154 = scmp.eq.s32.totalorder %s38, 0
      %p155 = por %p153, %p154
      %p156 = scmp.ne.s32.totalorder %s144, %s145
      %p157 = scmp.eq.s32.totalorder %s39, 1
      %p158 = por %p156, %p157
      %p160 = scmp.ne.s32.totalorder %s145, %s159
      %p161 = scmp.eq.s32.totalorder %s39, 0
      %p162 = por %p160, %p161
      %s164 = sadd.s32 %s163, 1
      %p167 = scmp.eq.s32.totalorder %s33, 1
      %p168 = scmp.ne.s32.totalorder %s163, %s165
      %p169 = scmp.eq.s32.totalorder %s33, 0
      %p170 = por %p168, %p169
      %p171 = scmp.ne.s32.totalorder %s163, %s165
      %p172 = scmp.eq.s32.totalorder %s38, 1
      %p173 = por %p171, %p172
      %p174 = scmp.ne.s32.totalorder %s165, %s166
      %p175 = scmp.eq.s32.totalorder %s38, 0
      %p176 = por %p174, %p175
      %p177 = scmp.ne.s32.totalorder %s165, %s166
      %p178 = scmp.eq.s32.totalorder %s39, 1
      %p179 = por %p177, %p178
      %p181 = scmp.ne.s32.totalorder %s166, %s180
      %p182 = scmp.eq.s32.totalorder %s39, 0
      %p183 = por %p181, %p182
      %s185 = sadd.s32 %s184, 1
      %p188 = scmp.eq.s32.totalorder %s33, 1
      %p189 = scmp.ne.s32.totalorder %s184, %s186
      %p190 = scmp.eq.s32.totalorder %s33, 0
      %p191 = por %p189, %p190
      %p192 = scmp.ne.s32.totalorder %s184, %s186
      %p193 = scmp.eq.s32.totalorder %s38, 1
      %p194 = por %p192, %p193
      %p195 = scmp.ne.s32.totalorder %s186, %s187
      %p196 = scmp.eq.s32.totalorder %s38, 0
      %p197 = por %p195, %p196
      %p198 = scmp.ne.s32.totalorder %s186, %s187
      %p199 = scmp.eq.s32.totalorder %s39, 1
      %p200 = por %p198, %p199
      %p202 = scmp.ne.s32.totalorder %s187, %s201
      %p203 = scmp.eq.s32.totalorder %s39, 0
      %p204 = por %p202, %p203
      %s206 = sadd.s32 %s205, 1
      %p209 = scmp.eq.s32.totalorder %s33, 1
      %p210 = scmp.ne.s32.totalorder %s205, %s207
      %p211 = scmp.eq.s32.totalorder %s33, 0
      %p212 = por %p210, %p211
      %p213 = scmp.ne.s32.totalorder %s205, %s207
      %p214 = scmp.eq.s32.totalorder %s38, 1
      %p215 = por %p213, %p214
      %p216 = scmp.ne.s32.totalorder %s207, %s208
      %p217 = scmp.eq.s32.totalorder %s38, 0
      %p218 = por %p216, %p217
      %p219 = scmp.ne.s32.totalorder %s207, %s208
      %p220 = scmp.eq.s32.totalorder %s39, 1
      %p221 = por %p219, %p220
      %p223 = scmp.ne.s32.totalorder %s208, %s222
      %p224 = scmp.eq.s32.totalorder %s39, 0
      %p225 = por %p223, %p224
      %s227 = sadd.s32 %s226, 1
      %p230 = scmp.eq.s32.totalorder %s33, 1
      %p231 = scmp.ne.s32.totalorder %s226, %s228
      %p232 = scmp.eq.s32.totalorder %s33, 0
      %p233 = por %p231, %p232
      %p234 = scmp.ne.s32.totalorder %s226, %s228
      %p235 = scmp.eq.s32.totalorder %s38, 1
      %p236 = por %p234, %p235
      %p237 = scmp.ne.s32.totalorder %s228, %s229
      %p238 = scmp.eq.s32.totalorder %s38, 0
      %p239 = por %p237, %p238
      %p240 = scmp.ne.s32.totalorder %s228, %s229
      %p241 = scmp.eq.s32.totalorder %s39, 1
      %p242 = por %p240, %p241
      %p244 = scmp.ne.s32.totalorder %s229, %s243
      %p245 = scmp.eq.s32.totalorder %s39, 0
      %p246 = por %p244, %p245
      %s248 = sadd.s32 %s247, 1
      %p251 = scmp.eq.s32.totalorder %s33, 1
      %p252 = scmp.ne.s32.totalorder %s247, %s249
      %p253 = scmp.eq.s32.totalorder %s33, 0
      %p254 = por %p252, %p253
      %p255 = scmp.ne.s32.totalorder %s247, %s249
      %p256 = scmp.eq.s32.totalorder %s38, 1
      %p257 = por %p255, %p256
      %p258 = scmp.ne.s32.totalorder %s249, %s250
      %p259 = scmp.eq.s32.totalorder %s38, 0
      %p260 = por %p258, %p259
      %p261 = scmp.ne.s32.totalorder %s249, %s250
      %p262 = scmp.eq.s32.totalorder %s39, 1
      %p263 = por %p261, %p262
      %p265 = scmp.ne.s32.totalorder %s250, %s264
      %p266 = scmp.eq.s32.totalorder %s39, 0
      %p267 = por %p265, %p266
      %s269 = sadd.s32 %s268, 1
      %p272 = scmp.eq.s32.totalorder %s33, 1
      %p273 = scmp.ne.s32.totalorder %s268, %s270
      %p274 = scmp.eq.s32.totalorder %s33, 0
      %p275 = por %p273, %p274
      %p276 = scmp.ne.s32.totalorder %s268, %s270
      %p277 = scmp.eq.s32.totalorder %s38, 1
      %p278 = por %p276, %p277
      %p279 = scmp.ne.s32.totalorder %s270, %s271
      %p280 = scmp.eq.s32.totalorder %s38, 0
      %p281 = por %p279, %p280
      %p282 = scmp.ne.s32.totalorder %s270, %s271
      %p283 = scmp.eq.s32.totalorder %s39, 1
      %p284 = por %p282, %p283
      %p286 = scmp.ne.s32.totalorder %s271, %s285
      %p287 = scmp.eq.s32.totalorder %s39, 0
      %p288 = por %p286, %p287
      %s290 = sadd.s32 %s289, 1
      %p293 = scmp.eq.s32.totalorder %s33, 1
      %p294 = scmp.ne.s32.totalorder %s289, %s291
      %p295 = scmp.eq.s32.totalorder %s33, 0
      %p296 = por %p294, %p295
      %p297 = scmp.ne.s32.totalorder %s289, %s291
      %p298 = scmp.eq.s32.totalorder %s38, 1
      %p299 = por %p297, %p298
      %p300 = scmp.ne.s32.totalorder %s291, %s292
      %p301 = scmp.eq.s32.totalorder %s38, 0
      %p302 = por %p300, %p301
      %p303 = scmp.ne.s32.totalorder %s291, %s292
      %p304 = scmp.eq.s32.totalorder %s39, 1
      %p305 = por %p303, %p304
      %p307 = scmp.ne.s32.totalorder %s292, %s306
      %p308 = scmp.eq.s32.totalorder %s39, 0
      %p309 = por %p307, %p308
      %s311 = sadd.s32 %s310, 1
      %p314 = scmp.eq.s32.totalorder %s33, 1
      %p315 = scmp.ne.s32.totalorder %s310, %s312
      %p316 = scmp.eq.s32.totalorder %s33, 0
      %p317 = por %p315, %p316
      %p318 = scmp.ne.s32.totalorder %s310, %s312
      %p319 = scmp.eq.s32.totalorder %s38, 1
      %p320 = por %p318, %p319
      %p321 = scmp.ne.s32.totalorder %s312, %s313
      %p322 = scmp.eq.s32.totalorder %s38, 0
      %p323 = por %p321, %p322
      %p324 = scmp.ne.s32.totalorder %s312, %s313
      %p325 = scmp.eq.s32.totalorder %s39, 1
      %p326 = por %p324, %p325
      %p328 = scmp.ne.s32.totalorder %s313, %s327
      %p329 = scmp.eq.s32.totalorder %s39, 0
      %p330 = por %p328, %p329
      %s331 = ssub.s32 %s41, %s48
      %p332 = scmp.eq.s32.totalorder %s331, 0
      %s334 = sadd.s32 %s333, 1
      %s335 = scalar_select %p332, %s333, %s334
      %p338 = pneg %p332
      %p339 = scmp.eq.s32.totalorder %s33, 1
      %p340 = por %p338, %p339
      %p341 = scmp.ne.s32.totalorder %s333, %s336
      %p342 = scmp.eq.s32.totalorder %s33, 0
      %p343 = por %p341, %p342
      %p344 = scmp.ne.s32.totalorder %s333, %s336
      %p345 = scmp.eq.s32.totalorder %s38, 1
      %p346 = por %p344, %p345
      %p347 = scmp.ne.s32.totalorder %s336, %s337
      %p348 = scmp.eq.s32.totalorder %s38, 0
      %p349 = por %p347, %p348
      %p350 = scmp.ne.s32.totalorder %s336, %s337
      %p351 = scmp.eq.s32.totalorder %s39, 1
      %p352 = por %p350, %p351
      %p354 = scmp.ne.s32.totalorder %s337, %s353
      %p355 = scmp.eq.s32.totalorder %s39, 0
      %p356 = por %p354, %p355
      %s357 = ssub.s32 %s41, %s48
      %p358 = scmp.eq.s32.totalorder %s357, 0
      %s360 = sadd.s32 %s359, 1
      %s361 = scalar_select %p358, %s359, %s360
      %p364 = pneg %p358
      %p365 = scmp.eq.s32.totalorder %s33, 1
      %p366 = por %p364, %p365
      %p367 = scmp.ne.s32.totalorder %s359, %s362
      %p368 = scmp.eq.s32.totalorder %s33, 0
      %p369 = por %p367, %p368
      %p370 = scmp.ne.s32.totalorder %s359, %s362
      %p371 = scmp.eq.s32.totalorder %s38, 1
      %p372 = por %p370, %p371
      %p373 = scmp.ne.s32.totalorder %s362, %s363
      %p374 = scmp.eq.s32.totalorder %s38, 0
      %p375 = por %p373, %p374
      %p376 = scmp.ne.s32.totalorder %s362, %s363
      %p377 = scmp.eq.s32.totalorder %s39, 1
      %p378 = por %p376, %p377
      %p380 = scmp.ne.s32.totalorder %s363, %s379
      %p381 = scmp.eq.s32.totalorder %s39, 0
      %p382 = por %p380, %p381
      %s383 = ssub.s32 %s40, %s52
      %p384 = scmp.eq.s32.totalorder %s383, 0
      %s386 = sadd.s32 %s385, 1
      %s387 = scalar_select %p384, %s385, %s386
      %p390 = pneg %p384
      %p391 = scmp.eq.s32.totalorder %s33, 1
      %p392 = por %p390, %p391
      %p393 = scmp.ne.s32.totalorder %s385, %s388
      %p394 = scmp.eq.s32.totalorder %s33, 0
      %p395 = por %p393, %p394
      %p396 = scmp.ne.s32.totalorder %s385, %s388
      %p397 = scmp.eq.s32.totalorder %s38, 1
      %p398 = por %p396, %p397
      %p399 = scmp.ne.s32.totalorder %s388, %s389
      %p400 = scmp.eq.s32.totalorder %s38, 0
      %p401 = por %p399, %p400
      %p402 = scmp.ne.s32.totalorder %s388, %s389
      %p403 = scmp.eq.s32.totalorder %s39, 1
      %p404 = por %p402, %p403
      %p406 = scmp.ne.s32.totalorder %s389, %s405
      %p407 = scmp.eq.s32.totalorder %s39, 0
      %p408 = por %p406, %p407
      %s409 = ssub.s32 %s40, %s52
      %s410 = ssub.s32 %s41, %s48
      %s411 = sor.u32 %s409, %s410
      %p412 = scmp.eq.s32.totalorder %s411, 0
      %s414 = sadd.s32 %s413, 1
      %s415 = scalar_select %p412, %s413, %s414
      %p418 = pneg %p412
      %p419 = scmp.eq.s32.totalorder %s33, 1
      %p420 = por %p418, %p419
      %p421 = scmp.ne.s32.totalorder %s413, %s416
      %p422 = scmp.eq.s32.totalorder %s33, 0
      %p423 = por %p421, %p422
      %p424 = scmp.ne.s32.totalorder %s413, %s416
      %p425 = scmp.eq.s32.totalorder %s38, 1
      %p426 = por %p424, %p425
      %p427 = scmp.ne.s32.totalorder %s416, %s417
      %p428 = scmp.eq.s32.totalorder %s38, 0
      %p429 = por %p427, %p428
      %p430 = scmp.ne.s32.totalorder %s416, %s417
      %p431 = scmp.eq.s32.totalorder %s39, 1
      %p432 = por %p430, %p431
      %p434 = scmp.ne.s32.totalorder %s417, %s433
      %p435 = scmp.eq.s32.totalorder %s39, 0
      %p436 = por %p434, %p435
      %p437 = scmp.le.s32.totalorder 1, %s33
      %p438 = scmp.lt.s32.totalorder %s33, 3
      %p439 = pnand %p437, %p438
      %p440 = pneg %p439
      // Predicated region
      $region9: #{tpu_custom_call.1} parent=5 // pred_check
        _
      $region10: #{tpu_custom_call.1} parent=5 // pred_check_branch
        %442 = sbr.rel (%p439) target = $region12
      $region11: #{tpu_custom_call.1} parent=5 // pred_region
        %s443 = ssub.s32 %s33, 1
        // Predicated region
        $region13: #{tpu_custom_call.1} parent=11 // pred_check
          %p444 = pneg %p71
        $region14: #{tpu_custom_call.1} parent=11 // pred_check_branch
          %446 = sbr.rel (%p444) target = $region16
        $region15: #{tpu_custom_call.1} parent=11 // pred_region
          %s447 = smul.u32 2, %s42
          %p448 = scmp.lt.s32.totalorder %s447, 1
          %s449 = scalar_select %p448, %s447, 1
          %s450 = smul.addr %s449, 8
          %s451 = scalar_lea.vmem %s0, %s450
          %s452 = smul.u32 2, %s42
        $region16: #{tpu_custom_call.1} parent=11 // pred_fallthru
          _
        // Predicated region
        $region17: #{tpu_custom_call.1} parent=11 // pred_check
          %p453 = pneg %p92
        $region18: #{tpu_custom_call.1} parent=11 // pred_check_branch
          %455 = sbr.rel (%p453) target = $region20
        $region19: #{tpu_custom_call.1} parent=11 // pred_region
          _
        $region20: #{tpu_custom_call.1} parent=11 // pred_fallthru
          _
        // Predicated region
        $region21: #{tpu_custom_call.1} parent=11 // pred_check
          %p456 = pneg %p113
        $region22: #{tpu_custom_call.1} parent=11 // pred_check_branch
          %458 = sbr.rel (%p456) target = $region24
        $region23: #{tpu_custom_call.1} parent=11 // pred_region
          %s460 = ssub.s32 4096, 4096
          %461 = vsyncadd [#allocation4], %s460
          %s462 = sshll.u32 [#allocation3], 4
          %s463 = int_to_ptr.vmem [resolvable:$true] %s462
          %468 = dma.hbm_to_vmem [thread:$0]  %s2, 4096, %s463, [#allocation4], 256, 256, 16
        $region24: #{tpu_custom_call.1} parent=11 // pred_fallthru
          _
        // Predicated region
        $region25: #{tpu_custom_call.1} parent=11 // pred_check
          %p469 = pneg %p134
        $region26: #{tpu_custom_call.1} parent=11 // pred_check_branch
          %471 = sbr.rel (%p469) target = $region28
        $region27: #{tpu_custom_call.1} parent=11 // pred_region
          %s473 = ssub.s32 4096, 4096
          %474 = vsyncadd [#allocation7], %s473
          %s475 = sshll.u32 [#allocation6], 4
          %s476 = int_to_ptr.vmem [resolvable:$true] %s475
          %481 = dma.hbm_to_vmem [thread:$0]  %s3, 4096, %s476, [#allocation7], 64, 64, 4
        $region28: #{tpu_custom_call.1} parent=11 // pred_fallthru
          _
        // Predicated region
        $region29: #{tpu_custom_call.1} parent=11 // pred_check
          %p482 = pneg %p155
        $region30: #{tpu_custom_call.1} parent=11 // pred_check_branch
          %484 = sbr.rel (%p482) target = $region32
        $region31: #{tpu_custom_call.1} parent=11 // pred_region
          %s486 = ssub.s32 128, 128
          %487 = vsyncadd [#allocation7], %s486
          %s489 = sshll.u32 [#allocation8], 4
          %s490 = int_to_ptr.vmem [resolvable:$true] %s489
          %492 = dma.hbm_to_vmem [thread:$0]  %s4, 128, %s490, [#allocation7]
        $region32: #{tpu_custom_call.1} parent=11 // pred_fallthru
          _
        // Predicated region
        $region33: #{tpu_custom_call.1} parent=11 // pred_check
          %p493 = pneg %p176
        $region34: #{tpu_custom_call.1} parent=11 // pred_check_branch
          %495 = sbr.rel (%p493) target = $region36
        $region35: #{tpu_custom_call.1} parent=11 // pred_region
          _
        $region36: #{tpu_custom_call.1} parent=11 // pred_fallthru
          _
        // Predicated region
        $region37: #{tpu_custom_call.1} parent=11 // pred_check
          %p496 = pneg %p197
        $region38: #{tpu_custom_call.1} parent=11 // pred_check_branch
          %498 = sbr.rel (%p496) target = $region40
        $region39: #{tpu_custom_call.1} parent=11 // pred_region
          %s500 = ssub.s32 1024, 1024
          %501 = vsyncadd [#allocation10], %s500
          %s502 = sshll.u32 [#allocation9], 4
          %s503 = int_to_ptr.vmem [resolvable:$true] %s502
          %508 = dma.hbm_to_vmem [thread:$0]  %s6, 1024, %s503, [#allocation10], 64, 64, 4
        $region40: #{tpu_custom_call.1} parent=11 // pred_fallthru
          _
        // Predicated region
        $region41: #{tpu_custom_call.1} parent=11 // pred_check
          %p509 = pneg %p218
        $region42: #{tpu_custom_call.1} parent=11 // pred_check_branch
          %511 = sbr.rel (%p509) target = $region44
        $region43: #{tpu_custom_call.1} parent=11 // pred_region
          %s513 = ssub.s32 2048, 2048
          %514 = vsyncadd [#allocation10], %s513
          %s515 = sshll.u32 [#allocation11], 4
          %s516 = int_to_ptr.vmem [resolvable:$true] %s515
          %521 = dma.hbm_to_vmem [thread:$0]  %s7, 2048, %s516, [#allocation10], 128, 128, 8
        $region44: #{tpu_custom_call.1} parent=11 // pred_fallthru
          _
        // Predicated region
        $region45: #{tpu_custom_call.1} parent=11 // pred_check
          %p522 = pneg %p239
        $region46: #{tpu_custom_call.1} parent=11 // pred_check_branch
          %524 = sbr.rel (%p522) target = $region48
        $region47: #{tpu_custom_call.1} parent=11 // pred_region
          %s526 = ssub.s32 2048, 2048
          %527 = vsyncadd [#allocation13], %s526
          %s528 = sshll.u32 [#allocation12], 4
          %s529 = int_to_ptr.vmem [resolvable:$true] %s528
          %534 = dma.hbm_to_vmem [thread:$0]  %s8, 2048, %s529, [#allocation13], 128, 128, 8
        $region48: #{tpu_custom_call.1} parent=11 // pred_fallthru
          _
        // Predicated region
        $region49: #{tpu_custom_call.1} parent=11 // pred_check
          %p535 = pneg %p260
        $region50: #{tpu_custom_call.1} parent=11 // pred_check_branch
          %537 = sbr.rel (%p535) target = $region52
        $region51: #{tpu_custom_call.1} parent=11 // pred_region
          %s539 = ssub.s32 2048, 2048
          %540 = vsyncadd [#allocation13], %s539
          %s541 = sshll.u32 [#allocation14], 4
          %s542 = int_to_ptr.vmem [resolvable:$true] %s541
          %547 = dma.hbm_to_vmem [thread:$0]  %s9, 2048, %s542, [#allocation13], 64, 64, 4
        $region52: #{tpu_custom_call.1} parent=11 // pred_fallthru
          _
        // Predicated region
        $region53: #{tpu_custom_call.1} parent=11 // pred_check
          %p548 = pneg %p281
        $region54: #{tpu_custom_call.1} parent=11 // pred_check_branch
          %550 = sbr.rel (%p548) target = $region56
        $region55: #{tpu_custom_call.1} parent=11 // pred_region
          %s552 = ssub.s32 2048, 2048
          %553 = vsyncadd [#allocation16], %s552
          %s554 = sshll.u32 [#allocation15], 4
          %s555 = int_to_ptr.vmem [resolvable:$true] %s554
          %560 = dma.hbm_to_vmem [thread:$0]  %s10, 2048, %s555, [#allocation16], 128, 128, 8
        $region56: #{tpu_custom_call.1} parent=11 // pred_fallthru
          _
        // Predicated region
        $region57: #{tpu_custom_call.1} parent=11 // pred_check
          %p561 = pneg %p302
        $region58: #{tpu_custom_call.1} parent=11 // pred_check_branch
          %563 = sbr.rel (%p561) target = $region60
        $region59: #{tpu_custom_call.1} parent=11 // pred_region
          %s565 = ssub.s32 2048, 2048
          %566 = vsyncadd [#allocation16], %s565
          %s567 = sshll.u32 [#allocation17], 4
          %s568 = int_to_ptr.vmem [resolvable:$true] %s567
          %573 = dma.hbm_to_vmem [thread:$0]  %s11, 2048, %s568, [#allocation16], 128, 128, 8
        $region60: #{tpu_custom_call.1} parent=11 // pred_fallthru
          _
        // Predicated region
        $region61: #{tpu_custom_call.1} parent=11 // pred_check
          %p574 = pneg %p323
        $region62: #{tpu_custom_call.1} parent=11 // pred_check_branch
          %576 = sbr.rel (%p574) target = $region64
        $region63: #{tpu_custom_call.1} parent=11 // pred_region
          %s578 = ssub.s32 2048, 2048
          %579 = vsyncadd [#allocation19], %s578
          %s580 = sshll.u32 [#allocation18], 4
          %s581 = int_to_ptr.vmem [resolvable:$true] %s580
          %586 = dma.hbm_to_vmem [thread:$0]  %s12, 2048, %s581, [#allocation19], 64, 64, 4
        $region64: #{tpu_custom_call.1} parent=11 // pred_fallthru
          _
      $region12: #{tpu_custom_call.1} parent=5 // pred_fallthru
        _
      %p587 = scmp.lt.s32.totalorder %s33, 2
      // Predicated region
      $region65: #{tpu_custom_call.1} parent=5 // pred_check
        %p588 = pneg %p587
      $region66: #{tpu_custom_call.1} parent=5 // pred_check_branch
        %590 = sbr.rel (%p588) target = $region68
      $region67: #{tpu_custom_call.1} parent=5 // pred_region
        // Predicated region
        $region69: #{tpu_custom_call.1} parent=67 // pred_check
          %p591 = pneg %p343
        $region70: #{tpu_custom_call.1} parent=67 // pred_check_branch
          %593 = sbr.rel (%p591) target = $region72
        $region71: #{tpu_custom_call.1} parent=67 // pred_region
          %s594 = sand.u32 %s33, 1
          %s595 = scalar_lea.sflag [#allocation4], %s594
          %s596 = sand.u32 %s333, 1
          %s597 = smul.addr %s596, 256
          %s598 = scalar_lea.vmem [#allocation20], %s597
          %s599 = smul.u32 4, %s41
          %s601 = ssub.s32 4096, 4096
          %602 = vsyncadd %s595, %s601
          %s603 = smul.addr %s599, 64
          %s604 = scalar_lea.hbm %s13, %s603
          %s605 = sshll.u32 %s598, 4
          %s606 = int_to_ptr.vmem [resolvable:$true] %s605
          %611 = dma.hbm_to_vmem [thread:$0]  %s604, 4096, %s606, %s595, 512, 256, 16
        $region72: #{tpu_custom_call.1} parent=67 // pred_fallthru
          _
        // Predicated region
        $region73: #{tpu_custom_call.1} parent=67 // pred_check
          %p612 = pneg %p369
        $region74: #{tpu_custom_call.1} parent=67 // pred_check_branch
          %614 = sbr.rel (%p612) target = $region76
        $region75: #{tpu_custom_call.1} parent=67 // pred_region
          %s615 = smul.u32 4, %s41
          %p616 = scmp.lt.s32.totalorder %s615, 7
          %s617 = scalar_select %p616, %s615, 7
          %s618 = scalar_lea.vmem %s14, %s617
          %s619 = smul.u32 4, %s41
        $region76: #{tpu_custom_call.1} parent=67 // pred_fallthru
          _
      $region68: #{tpu_custom_call.1} parent=5 // pred_fallthru
        _
      %p620 = scmp.le.s32.totalorder 1, %s33
      %p621 = scmp.lt.s32.totalorder %s33, 3
      %p622 = pnand %p620, %p621
      %p623 = pneg %p622
      // Predicated region
      $region77: #{tpu_custom_call.1} parent=5 // pred_check
        _
      $region78: #{tpu_custom_call.1} parent=5 // pred_check_branch
        %625 = sbr.rel (%p622) target = $region80
      $region79: #{tpu_custom_call.1} parent=5 // pred_region
        %s626 = ssub.s32 %s33, 1
        // Predicated region
        $region81: #{tpu_custom_call.1} parent=79 // pred_check
          %p627 = pneg %p113
        $region82: #{tpu_custom_call.1} parent=79 // pred_check_branch
          %629 = sbr.rel (%p627) target = $region84
        $region83: #{tpu_custom_call.1} parent=79 // pred_region
          %630 = dma.done [#allocation4], 4096
        $region84: #{tpu_custom_call.1} parent=79 // pred_fallthru
          _
        // Predicated region
        $region85: #{tpu_custom_call.1} parent=79 // pred_check
          %p631 = pneg %p134
        $region86: #{tpu_custom_call.1} parent=79 // pred_check_branch
          %633 = sbr.rel (%p631) target = $region88
        $region87: #{tpu_custom_call.1} parent=79 // pred_region
          %634 = dma.done [#allocation7], 4096
        $region88: #{tpu_custom_call.1} parent=79 // pred_fallthru
          _
        // Predicated region
        $region89: #{tpu_custom_call.1} parent=79 // pred_check
          %p635 = pneg %p155
        $region90: #{tpu_custom_call.1} parent=79 // pred_check_branch
          %637 = sbr.rel (%p635) target = $region92
        $region91: #{tpu_custom_call.1} parent=79 // pred_region
          %638 = dma.done [#allocation7], 128
        $region92: #{tpu_custom_call.1} parent=79 // pred_fallthru
          _
        // Predicated region
        $region93: #{tpu_custom_call.1} parent=79 // pred_check
          %p639 = pneg %p197
        $region94: #{tpu_custom_call.1} parent=79 // pred_check_branch
          %641 = sbr.rel (%p639) target = $region96
        $region95: #{tpu_custom_call.1} parent=79 // pred_region
          %642 = dma.done [#allocation10], 1024
        $region96: #{tpu_custom_call.1} parent=79 // pred_fallthru
          _
        // Predicated region
        $region97: #{tpu_custom_call.1} parent=79 // pred_check
          %p643 = pneg %p218
        $region98: #{tpu_custom_call.1} parent=79 // pred_check_branch
          %645 = sbr.rel (%p643) target = $region100
        $region99: #{tpu_custom_call.1} parent=79 // pred_region
          %646 = dma.done [#allocation10], 2048
        $region100: #{tpu_custom_call.1} parent=79 // pred_fallthru
          _
        // Predicated region
        $region101: #{tpu_custom_call.1} parent=79 // pred_check
          %p647 = pneg %p239
        $region102: #{tpu_custom_call.1} parent=79 // pred_check_branch
          %649 = sbr.rel (%p647) target = $region104
        $region103: #{tpu_custom_call.1} parent=79 // pred_region
          %650 = dma.done [#allocation13], 2048
        $region104: #{tpu_custom_call.1} parent=79 // pred_fallthru
          _
        // Predicated region
        $region105: #{tpu_custom_call.1} parent=79 // pred_check
          %p651 = pneg %p260
        $region106: #{tpu_custom_call.1} parent=79 // pred_check_branch
          %653 = sbr.rel (%p651) target = $region108
        $region107: #{tpu_custom_call.1} parent=79 // pred_region
          %654 = dma.done [#allocation13], 2048
        $region108: #{tpu_custom_call.1} parent=79 // pred_fallthru
          _
        // Predicated region
        $region109: #{tpu_custom_call.1} parent=79 // pred_check
          %p655 = pneg %p281
        $region110: #{tpu_custom_call.1} parent=79 // pred_check_branch
          %657 = sbr.rel (%p655) target = $region112
        $region111: #{tpu_custom_call.1} parent=79 // pred_region
          %658 = dma.done [#allocation16], 2048
        $region112: #{tpu_custom_call.1} parent=79 // pred_fallthru
          _
        // Predicated region
        $region113: #{tpu_custom_call.1} parent=79 // pred_check
          %p659 = pneg %p302
        $region114: #{tpu_custom_call.1} parent=79 // pred_check_branch
          %661 = sbr.rel (%p659) target = $region116
        $region115: #{tpu_custom_call.1} parent=79 // pred_region
          %662 = dma.done [#allocation16], 2048
        $region116: #{tpu_custom_call.1} parent=79 // pred_fallthru
          _
        // Predicated region
        $region117: #{tpu_custom_call.1} parent=79 // pred_check
          %p663 = pneg %p323
        $region118: #{tpu_custom_call.1} parent=79 // pred_check_branch
          %665 = sbr.rel (%p663) target = $region120
        $region119: #{tpu_custom_call.1} parent=79 // pred_region
          %666 = dma.done [#allocation19], 2048
        $region120: #{tpu_custom_call.1} parent=79 // pred_fallthru
          _
        %s667 = sand.u32 %s38, 1
        %s668 = scalar_lea.sflag [#allocation4], %s667
        %s669 = sand.u32 %s336, 1
        %s670 = smul.addr %s669, 256
        %s671 = scalar_lea.vmem [#allocation20], %s670
        // Predicated region
        $region121: #{tpu_custom_call.1} parent=79 // pred_check
          %p672 = pneg %p349
        $region122: #{tpu_custom_call.1} parent=79 // pred_check_branch
          %674 = sbr.rel (%p672) target = $region124
        $region123: #{tpu_custom_call.1} parent=79 // pred_region
          %675 = dma.done %s668, 4096
        $region124: #{tpu_custom_call.1} parent=79 // pred_fallthru
          _
        %s676 = smul.u32 2, %s42
        %p677 = scmp.lt.s32.totalorder %s676, 1
        %s678 = scalar_select %p677, %s676, 1
        %s679 = smul.addr %s678, 8
        %s680 = scalar_lea.vmem %s0, %s679
        %p681 = pneg %p71
        %p682 = pneg %p68
        %p683 = pneg %p92
        %p684 = pneg %p89
        %p685 = pneg %p113
        %p686 = pneg %p110
        %p687 = pneg %p134
        %p688 = pneg %p131
        %p689 = pneg %p155
        %p690 = pneg %p152
        %p691 = pneg %p176
        %p692 = pneg %p173
        %p693 = pneg %p197
        %p694 = pneg %p194
        %p695 = pneg %p218
        %p696 = pneg %p215
        %p697 = pneg %p239
        %p698 = pneg %p236
        %p699 = pneg %p260
        %p700 = pneg %p257
        %p701 = pneg %p281
        %p702 = pneg %p278
        %p703 = pneg %p302
        %p704 = pneg %p299
        %p705 = pneg %p323
        %p706 = pneg %p320
        %s707 = sand.u32 %s38, 1
        %s708 = scalar_lea.sflag [#allocation4], %s707
        %s709 = sand.u32 %s336, 1
        %s710 = smul.addr %s709, 256
        %s711 = scalar_lea.vmem [#allocation20], %s710
        %p712 = pneg %p349
        %p713 = pneg %p346
        %s714 = smul.u32 4, %s43
        %p715 = scmp.lt.s32.totalorder %s714, 7
        %s716 = scalar_select %p715, %s714, 7
        %s717 = scalar_lea.vmem %s14, %s716
        %p718 = pneg %p375
        %p719 = pneg %p372
        %p720 = pneg %p401
        %p721 = pneg %p398
        %p722 = pneg %p429
        %p723 = pneg %p426
        %s724 = sand.u32 %s416, 1
        %s725 = scalar_lea.sflag [#allocation23], %s724
        %s726 = sand.u32 %s416, 1
        %s727 = smul.addr %s726, 64
        %s728 = scalar_lea.vmem [#allocation22], %s727
        %s729 = smul.u32 2, %s42
        %p730 = scmp.lt.s32.totalorder %s729, 1
        %s731 = scalar_select %p730, %s729, 1
        %s732 = smul.addr %s731, 8
        %s733 = scalar_lea.vmem %s0, %s732
        %s734 = smul.u32 2, %s42
        %s735 = smul.u32 4, %s43
        %s736 = smul.u32 4, %s43
        %p737 = scmp.lt.s32.totalorder %s736, 7
        %s738 = scalar_select %p737, %s736, 7
        %s739 = scalar_lea.vmem %s14, %s738
        %s740 = smul.u32 4, %s43
        %s741 = smul.u32 2, %s42
        %s742 = smul.u32 2, %s42
        %s743 = smul.u32 4, %s43
        %p745 = scmp.eq.s32.totalorder %s43, 0
        // Predicated region
        $region125: #{tpu_custom_call.1} parent=79 // pred_check
          %p746 = pneg %p745
        $region126: #{tpu_custom_call.1} parent=79 // pred_check_branch
          %748 = sbr.rel (%p746) target = $region128
        $region127: #{tpu_custom_call.1} parent=79 // pred_region
          %v749 = vld [vmem:[%s733] sm:$0xff]
          %v750 = vld [vmem:[%s733 + $0x8] sm:$0xff]
          %v751 = vpack.c.bf16 %v750, %v749
          %v752 = vld [vmem:[%s1] sm:$0xf]
          %v753 = vld [vmem:[%s1 + $0x4] sm:$0xf]
          %v754 = vld [vmem:[%s1 + $0x8] sm:$0xf]
          %v755 = vld [vmem:[%s1 + $0xc] sm:$0xf]
          %v756 = vld [vmem:[%s1 + $0x10] sm:$0xf]
          %v757 = vld [vmem:[%s1 + $0x14] sm:$0xf]
          %v758 = vld [vmem:[%s1 + $0x18] sm:$0xf]
          %v759 = vld [vmem:[%s1 + $0x1c] sm:$0xf]
          %v760 = vld [vmem:[%s1 + $0x20] sm:$0xf]
          %v761 = vld [vmem:[%s1 + $0x24] sm:$0xf]
          %v762 = vld [vmem:[%s1 + $0x28] sm:$0xf]
          %v763 = vld [vmem:[%s1 + $0x2c] sm:$0xf]
          %v764 = vld [vmem:[%s1 + $0x30] sm:$0xf]
          %v765 = vld [vmem:[%s1 + $0x34] sm:$0xf]
          %v766 = vld [vmem:[%s1 + $0x38] sm:$0xf]
          %v767 = vld [vmem:[%s1 + $0x3c] sm:$0xf]
          %v784 = vunpack.c.l.b16 %v752
          %v785 = vunpack.c.l.b16 %v753
          %v786 = vunpack.c.l.b16 %v754
          %v787 = vunpack.c.l.b16 %v755
          %v788 = vunpack.c.l.b16 %v756
          %v789 = vunpack.c.l.b16 %v757
          %v790 = vunpack.c.l.b16 %v758
          %v791 = vunpack.c.l.b16 %v759
          %v792 = vunpack.c.l.b16 %v760
          %v793 = vunpack.c.l.b16 %v761
          %v794 = vunpack.c.l.b16 %v762
          %v795 = vunpack.c.l.b16 %v763
          %v796 = vunpack.c.l.b16 %v764
          %v797 = vunpack.c.l.b16 %v765
          %v798 = vunpack.c.l.b16 %v766
          %v799 = vunpack.c.l.b16 %v767
          %v800 = vpack.c.b16 %v785, %v784
          %v801 = vpack.c.b16 %v787, %v786
          %v802 = vpack.c.b16 %v789, %v788
          %v803 = vpack.c.b16 %v791, %v790
          %v804 = vpack.c.b16 %v793, %v792
          %v805 = vpack.c.b16 %v795, %v794
          %v806 = vpack.c.b16 %v797, %v796
          %v807 = vpack.c.b16 %v799, %v798
          %816 = vmatprep.subr.bf16.mxu0 0
          %817 = vmatpush1.bf16.msra.mxu0 %v800
          %818 = vmatprep.subr.bf16.mxu0 0
          %819 = vmatpush1.bf16.msra.mxu0 %v801
          %820 = vmatprep.subr.bf16.mxu0 0
          %821 = vmatpush1.bf16.msra.mxu0 %v802
          %822 = vmatprep.subr.bf16.mxu0 0
          %823 = vmatpush1.bf16.msra.mxu0 %v803
          %824 = vmatprep.subr.bf16.mxu0 0
          %825 = vmatpush1.bf16.msra.mxu0 %v804
          %826 = vmatprep.subr.bf16.mxu0 0
          %827 = vmatpush1.bf16.msra.mxu0 %v805
          %828 = vmatprep.subr.bf16.mxu0 0
          %829 = vmatpush1.bf16.msra.mxu0 %v806
          %830 = vmatprep.subr.bf16.mxu0 0
          %831 = vmatpush1.bf16.msra.mxu0 %v807
          %832 = vmatprep.subr.bf16.mxu0 0
          %833 = vmatpush1.bf16.msra.mxu0 0
          %834 = vmatprep.subr.bf16.mxu0 0
          %835 = vmatpush1.bf16.msra.mxu0 0
          %836 = vmatprep.subr.bf16.mxu0 0
          %837 = vmatpush1.bf16.msra.mxu0 0
          %838 = vmatprep.subr.bf16.mxu0 0
          %839 = vmatpush1.bf16.msra.mxu0 0
          %840 = vmatprep.subr.bf16.mxu0 0
          %841 = vmatpush1.bf16.msra.mxu0 0
          %842 = vmatprep.subr.bf16.mxu0 0
          %843 = vmatpush1.bf16.msra.mxu0 0
          %844 = vmatprep.subr.bf16.mxu0 0
          %845 = vmatpush1.bf16.msra.mxu0 0
          %846 = vmatprep.subr.bf16.mxu0 0
          %847 = vmatpush1.bf16.msra.mxu0 0
          %848 = vmatprep.mubr.bf16.mxu0 0
          %849 = vmatmul.mubr.bf16.gmra.mrb[0].mxu0 %v751
          %v850 = vpop.f32.mrb[0].mxu0
          %v851 = vadd.f32 0.0, %v850
          %v852 = vpop.f32.mrb[0].mxu0
          %v853 = vpop.f32.mrb[0].mxu0
          %v854 = vadd.f32 0.0, %v853
          %v855 = vpop.f32.mrb[0].mxu0
          %856 = vdwg.mxu0
          %vm857 = vcmask 31744
          %v858 = vsel %vm857, %v851, -inf
          %859 = vmax.xlane.f32.xlu0 %v858
          %v860 = vpop.xlane.xlu0 %859
          %v861 = vsel %vm857, %v854, -inf
          %862 = vmax.xlane.f32.xlu0 %v861
          %v863 = vpop.xlane.xlu0 %862
          %v864 = vsub.f32 %v851, %v860
          %v865 = vsub.f32 %v854, %v863
          %v866 = vmul.f32 %v864, 1.442695
          %v867 = vpow.pop %v866
          %v868 = vmul.f32 %v865, 1.442695
          %v869 = vpow.pop %v868
          %v870 = vsel %vm857, %v867, 0.0
          %871 = vadd.xlane.f32.xlu0 %v870
          %v872 = vpop.xlane.xlu0 %871
          %v873 = vsel %vm857, %v869, 0.0
          %874 = vadd.xlane.f32.xlu0 %v873
          %v875 = vpop.xlane.xlu0 %874
          %v876 = vrcp.pop %v872
          %v877 = vrcp.pop %v875
          %v878 = vmul.f32 %v867, %v876
          %v879 = vmul.f32 %v869, %v877
          %v880 = vld [vmem:[#allocation3] sm:$0xff]
          %v881 = vld [vmem:[#allocation3 + $0x8] sm:$0xff]
          %v882 = vld [vmem:[#allocation3 + $0x10] sm:$0xff]
          %v883 = vld [vmem:[#allocation3 + $0x18] sm:$0xff]
          %v884 = vld [vmem:[#allocation3 + $0x20] sm:$0xff]
          %v885 = vld [vmem:[#allocation3 + $0x28] sm:$0xff]
          %v886 = vld [vmem:[#allocation3 + $0x30] sm:$0xff]
          %v887 = vld [vmem:[#allocation3 + $0x38] sm:$0xff]
          %v888 = vld [vmem:[#allocation3 + $0x40] sm:$0xff]
          %v889 = vld [vmem:[#allocation3 + $0x48] sm:$0xff]
          %v890 = vld [vmem:[#allocation3 + $0x50] sm:$0xff]
          %v891 = vld [vmem:[#allocation3 + $0x58] sm:$0xff]
          %v892 = vld [vmem:[#allocation3 + $0x60] sm:$0xff]
          %v893 = vld [vmem:[#allocation3 + $0x68] sm:$0xff]
          %v894 = vld [vmem:[#allocation3 + $0x70] sm:$0xff]
          %v895 = vld [vmem:[#allocation3 + $0x78] sm:$0xff]
          %v896 = vld [vmem:[#allocation3 + $0x80] sm:$0xff]
          %v897 = vld [vmem:[#allocation3 + $0x88] sm:$0xff]
          %v898 = vld [vmem:[#allocation3 + $0x90] sm:$0xff]
          %v899 = vld [vmem:[#allocation3 + $0x98] sm:$0xff]
          %v900 = vld [vmem:[#allocation3 + $0xa0] sm:$0xff]
          %v901 = vld [vmem:[#allocation3 + $0xa8] sm:$0xff]
          %v902 = vld [vmem:[#allocation3 + $0xb0] sm:$0xff]
          %v903 = vld [vmem:[#allocation3 + $0xb8] sm:$0xff]
          %v904 = vld [vmem:[#allocation3 + $0xc0] sm:$0xff]
          %v905 = vld [vmem:[#allocation3 + $0xc8] sm:$0xff]
          %v906 = vld [vmem:[#allocation3 + $0xd0] sm:$0xff]
          %v907 = vld [vmem:[#allocation3 + $0xd8] sm:$0xff]
          %v908 = vld [vmem:[#allocation3 + $0xe0] sm:$0xff]
          %v909 = vld [vmem:[#allocation3 + $0xe8] sm:$0xff]
          %v910 = vld [vmem:[#allocation3 + $0xf0] sm:$0xff]
          %v911 = vld [vmem:[#allocation3 + $0xf8] sm:$0xff]
          %v944 = vunpack.c.l.b16 %v880
          %v945 = vunpack.c.h.b16 %v880
          %v946 = vunpack.c.l.b16 %v881
          %v947 = vunpack.c.h.b16 %v881
          %v948 = vunpack.c.l.b16 %v882
          %v949 = vunpack.c.h.b16 %v882
          %v950 = vunpack.c.l.b16 %v883
          %v951 = vunpack.c.h.b16 %v883
          %v952 = vunpack.c.l.b16 %v884
          %v953 = vunpack.c.h.b16 %v884
          %v954 = vunpack.c.l.b16 %v885
          %v955 = vunpack.c.h.b16 %v885
          %v956 = vunpack.c.l.b16 %v886
          %v957 = vunpack.c.h.b16 %v886
          %v958 = vunpack.c.l.b16 %v887
          %v959 = vunpack.c.h.b16 %v887
          %v960 = vunpack.c.l.b16 %v888
          %v961 = vunpack.c.h.b16 %v888
          %v962 = vunpack.c.l.b16 %v889
          %v963 = vunpack.c.h.b16 %v889
          %v964 = vunpack.c.l.b16 %v890
          %v965 = vunpack.c.h.b16 %v890
          %v966 = vunpack.c.l.b16 %v891
          %v967 = vunpack.c.h.b16 %v891
          %v968 = vunpack.c.l.b16 %v892
          %v969 = vunpack.c.h.b16 %v892
          %v970 = vunpack.c.l.b16 %v893
          %v971 = vunpack.c.h.b16 %v893
          %v972 = vunpack.c.l.b16 %v894
          %v973 = vunpack.c.h.b16 %v894
          %v974 = vunpack.c.l.b16 %v895
          %v975 = vunpack.c.h.b16 %v895
          %v976 = vunpack.c.l.b16 %v896
          %v977 = vunpack.c.h.b16 %v896
          %v978 = vunpack.c.l.b16 %v897
          %v979 = vunpack.c.h.b16 %v897
          %v980 = vunpack.c.l.b16 %v898
          %v981 = vunpack.c.h.b16 %v898
          %v982 = vunpack.c.l.b16 %v899
          %v983 = vunpack.c.h.b16 %v899
          %v984 = vunpack.c.l.b16 %v900
          %v985 = vunpack.c.h.b16 %v900
          %v986 = vunpack.c.l.b16 %v901
          %v987 = vunpack.c.h.b16 %v901
          %v988 = vunpack.c.l.b16 %v902
          %v989 = vunpack.c.h.b16 %v902
          %v990 = vunpack.c.l.b16 %v903
          %v991 = vunpack.c.h.b16 %v903
          %v992 = vunpack.c.l.b16 %v904
          %v993 = vunpack.c.h.b16 %v904
          %v994 = vunpack.c.l.b16 %v905
          %v995 = vunpack.c.h.b16 %v905
          %v996 = vunpack.c.l.b16 %v906
          %v997 = vunpack.c.h.b16 %v906
          %v998 = vunpack.c.l.b16 %v907
          %v999 = vunpack.c.h.b16 %v907
          %v1000 = vunpack.c.l.b16 %v908
          %v1001 = vunpack.c.h.b16 %v908
          %v1002 = vunpack.c.l.b16 %v909
          %v1003 = vunpack.c.h.b16 %v909
          %v1004 = vunpack.c.l.b16 %v910
          %v1005 = vunpack.c.h.b16 %v910
          %v1006 = vunpack.c.l.b16 %v911
          %v1007 = vunpack.c.h.b16 %v911
          %v1008 = vpack.c.b16 %v948, %v944
          %v1009 = vpack.c.b16 %v949, %v945
          %v1010 = vpack.c.b16 %v950, %v946
          %v1011 = vpack.c.b16 %v951, %v947
          %v1012 = vpack.c.b16 %v956, %v952
          %v1013 = vpack.c.b16 %v957, %v953
          %v1014 = vpack.c.b16 %v958, %v954
          %v1015 = vpack.c.b16 %v959, %v955
          %v1016 = vpack.c.b16 %v964, %v960
          %v1017 = vpack.c.b16 %v965, %v961
          %v1018 = vpack.c.b16 %v966, %v962
          %v1019 = vpack.c.b16 %v967, %v963
          %v1020 = vpack.c.b16 %v972, %v968
          %v1021 = vpack.c.b16 %v973, %v969
          %v1022 = vpack.c.b16 %v974, %v970
          %v1023 = vpack.c.b16 %v975, %v971
          %v1024 = vpack.c.b16 %v980, %v976
          %v1025 = vpack.c.b16 %v981, %v977
          %v1026 = vpack.c.b16 %v982, %v978
          %v1027 = vpack.c.b16 %v983, %v979
          %v1028 = vpack.c.b16 %v988, %v984
          %v1029 = vpack.c.b16 %v989, %v985
          %v1030 = vpack.c.b16 %v990, %v986
          %v1031 = vpack.c.b16 %v991, %v987
          %v1032 = vpack.c.b16 %v996, %v992
          %v1033 = vpack.c.b16 %v997, %v993
          %v1034 = vpack.c.b16 %v998, %v994
          %v1035 = vpack.c.b16 %v999, %v995
          %v1036 = vpack.c.b16 %v1004, %v1000
          %v1037 = vpack.c.b16 %v1005, %v1001
          %v1038 = vpack.c.b16 %v1006, %v1002
          %v1039 = vpack.c.b16 %v1007, %v1003
          %1072 = vmatprep.subr.bf16.mxu0 %v1009
          %1073 = vmatpush1.bf16.msra.mxu0 %v1008
          %1074 = vmatprep.subr.bf16.mxu0 %v1013
          %1075 = vmatpush1.bf16.msra.mxu0 %v1012
          %1076 = vmatprep.subr.bf16.mxu0 %v1017
          %1077 = vmatpush1.bf16.msra.mxu0 %v1016
          %1078 = vmatprep.subr.bf16.mxu0 %v1021
          %1079 = vmatpush1.bf16.msra.mxu0 %v1020
          %1080 = vmatprep.subr.bf16.mxu0 %v1025
          %1081 = vmatpush1.bf16.msra.mxu0 %v1024
          %1082 = vmatprep.subr.bf16.mxu0 %v1029
          %1083 = vmatpush1.bf16.msra.mxu0 %v1028
          %1084 = vmatprep.subr.bf16.mxu0 %v1033
          %1085 = vmatpush1.bf16.msra.mxu0 %v1032
          %1086 = vmatprep.subr.bf16.mxu0 %v1037
          %1087 = vmatpush1.bf16.msra.mxu0 %v1036
          %1088 = vmatprep.subr.bf16.mxu0 0
          %1089 = vmatpush1.bf16.msra.mxu0 0
          %1090 = vmatprep.subr.bf16.mxu0 0
          %1091 = vmatpush1.bf16.msra.mxu0 0
          %1092 = vmatprep.subr.bf16.mxu0 0
          %1093 = vmatpush1.bf16.msra.mxu0 0
          %1094 = vmatprep.subr.bf16.mxu0 0
          %1095 = vmatpush1.bf16.msra.mxu0 0
          %1096 = vmatprep.subr.bf16.mxu0 0
          %1097 = vmatpush1.bf16.msra.mxu0 0
          %1098 = vmatprep.subr.bf16.mxu0 0
          %1099 = vmatpush1.bf16.msra.mxu0 0
          %1100 = vmatprep.subr.bf16.mxu0 0
          %1101 = vmatpush1.bf16.msra.mxu0 0
          %1102 = vmatprep.subr.bf16.mxu0 0
          %1103 = vmatpush1.bf16.msra.mxu0 0
          %1104 = vmatprep.mubr.bf16.mxu0 0
          %1105 = vmatmul.mubr.bf16.gmra.mrb[0].mxu0 %v751
          %v1106 = vpop.f32.mrb[0].mxu0
          %v1107 = vadd.f32 0.0, %v1106
          %v1108 = vpop.f32.mrb[0].mxu0
          %v1109 = vadd.f32 0.0, %v1108
          %v1110 = vpop.f32.mrb[0].mxu0
          %v1111 = vadd.f32 0.0, %v1110
          %v1112 = vpop.f32.mrb[0].mxu0
          %v1113 = vadd.f32 0.0, %v1112
          %1114 = vdwg.mxu0
          %1115 = vmatprep.subr.bf16.mxu0 %v1011
          %1116 = vmatpush1.bf16.msra.mxu0 %v1010
          %1117 = vmatprep.subr.bf16.mxu0 %v1015
          %1118 = vmatpush1.bf16.msra.mxu0 %v1014
          %1119 = vmatprep.subr.bf16.mxu0 %v1019
          %1120 = vmatpush1.bf16.msra.mxu0 %v1018
          %1121 = vmatprep.subr.bf16.mxu0 %v1023
          %1122 = vmatpush1.bf16.msra.mxu0 %v1022
          %1123 = vmatprep.subr.bf16.mxu0 %v1027
          %1124 = vmatpush1.bf16.msra.mxu0 %v1026
          %1125 = vmatprep.subr.bf16.mxu0 %v1031
          %1126 = vmatpush1.bf16.msra.mxu0 %v1030
          %1127 = vmatprep.subr.bf16.mxu0 %v1035
          %1128 = vmatpush1.bf16.msra.mxu0 %v1034
          %1129 = vmatprep.subr.bf16.mxu0 %v1039
          %1130 = vmatpush1.bf16.msra.mxu0 %v1038
          %1131 = vmatprep.subr.bf16.mxu0 0
          %1132 = vmatpush1.bf16.msra.mxu0 0
          %1133 = vmatprep.subr.bf16.mxu0 0
          %1134 = vmatpush1.bf16.msra.mxu0 0
          %1135 = vmatprep.subr.bf16.mxu0 0
          %1136 = vmatpush1.bf16.msra.mxu0 0
          %1137 = vmatprep.subr.bf16.mxu0 0
          %1138 = vmatpush1.bf16.msra.mxu0 0
          %1139 = vmatprep.subr.bf16.mxu0 0
          %1140 = vmatpush1.bf16.msra.mxu0 0
          %1141 = vmatprep.subr.bf16.mxu0 0
          %1142 = vmatpush1.bf16.msra.mxu0 0
          %1143 = vmatprep.subr.bf16.mxu0 0
          %1144 = vmatpush1.bf16.msra.mxu0 0
          %1145 = vmatprep.subr.bf16.mxu0 0
          %1146 = vmatpush1.bf16.msra.mxu0 0
          %1147 = vmatprep.mubr.bf16.mxu0 0
          %1148 = vmatmul.mubr.bf16.gmra.mrb[0].mxu0 %v751
          %v1149 = vpop.f32.mrb[0].mxu0
          %v1150 = vadd.f32 0.0, %v1149
          %v1151 = vpop.f32.mrb[0].mxu0
          %v1152 = vadd.f32 0.0, %v1151
          %v1153 = vpop.f32.mrb[0].mxu0
          %v1154 = vadd.f32 0.0, %v1153
          %v1155 = vpop.f32.mrb[0].mxu0
          %v1156 = vadd.f32 0.0, %v1155
          %1157 = vdwg.mxu0
          %v1158 = vmax.f32 %v1107, 0.0
          %v1159 = vmax.f32 %v1109, 0.0
          %v1160 = vmax.f32 %v1150, 0.0
          %v1161 = vmax.f32 %v1152, 0.0
          %v1162 = vmax.f32 %v1111, 0.0
          %v1163 = vmax.f32 %v1113, 0.0
          %v1164 = vmax.f32 %v1154, 0.0
          %v1165 = vmax.f32 %v1156, 0.0
          %v1166 = vpack.c.bf16 %v879, %v878
          %v1167 = vld [vmem:[#allocation8] sm:$0xff]
          %v1169 = vcombine.high %v1167, %v1167
          %v1171 = vunpack.c.l.s4 1983009808
          %v1172 = vunpack.c.0.s8 %v1171
          %v1173 = vlaneseq
          %v1174 = vshrl.u32 %v1173, 7
          %v1175 = vsub.s32 %v1172, %v1174
          %v1176 = vrot.slane %v1167, %v1175
          %v1178 = vunpack.c.l.s4 1983009808
          %v1179 = vunpack.c.0.s8 %v1178
          %v1180 = vlaneseq
          %v1181 = vshrl.u32 %v1180, 7
          %v1182 = vsub.s32 %v1179, %v1181
          %v1183 = vrot.slane %v1169, %v1182
          %v1184 = vcombine.high %v1176, %v1176
          %v1185 = vcombine.high %v1183, %v1183
          %v1187 = vsel %vm857, %v1166, 0
          %vm1189 = vcmask 1041408
          %v1191 = vsel %vm1189, %v1176, 0
          %v1194 = vsel %vm1189, %v1184, 0
          %v1197 = vsel %vm1189, %v1183, 0
          %v1200 = vsel %vm1189, %v1185, 0
          %1202 = vmatprep.subr.bf16.mxu0 %v1194
          %1203 = vmatpush1.bf16.msra.mxu0 %v1191
          %1204 = vmatprep.subr.bf16.mxu0 0
          %1205 = vmatpush1.bf16.msra.mxu0 0
          %1206 = vmatprep.subr.bf16.mxu0 0
          %1207 = vmatpush1.bf16.msra.mxu0 0
          %1208 = vmatprep.subr.bf16.mxu0 0
          %1209 = vmatpush1.bf16.msra.mxu0 0
          %1210 = vmatprep.subr.bf16.mxu0 0
          %1211 = vmatpush1.bf16.msra.mxu0 0
          %1212 = vmatprep.subr.bf16.mxu0 0
          %1213 = vmatpush1.bf16.msra.mxu0 0
          %1214 = vmatprep.subr.bf16.mxu0 0
          %1215 = vmatpush1.bf16.msra.mxu0 0
          %1216 = vmatprep.subr.bf16.mxu0 0
          %1217 = vmatpush1.bf16.msra.mxu0 0
          %1218 = vmatprep.subr.bf16.mxu0 0
          %1219 = vmatpush1.bf16.msra.mxu0 0
          %1220 = vmatprep.subr.bf16.mxu0 0
          %1221 = vmatpush1.bf16.msra.mxu0 0
          %1222 = vmatprep.subr.bf16.mxu0 0
          %1223 = vmatpush1.bf16.msra.mxu0 0
          %1224 = vmatprep.subr.bf16.mxu0 0
          %1225 = vmatpush1.bf16.msra.mxu0 0
          %1226 = vmatprep.subr.bf16.mxu0 0
          %1227 = vmatpush1.bf16.msra.mxu0 0
          %1228 = vmatprep.subr.bf16.mxu0 0
          %1229 = vmatpush1.bf16.msra.mxu0 0
          %1230 = vmatprep.subr.bf16.mxu0 0
          %1231 = vmatpush1.bf16.msra.mxu0 0
          %1232 = vmatprep.subr.bf16.mxu0 0
          %1233 = vmatpush1.bf16.msra.mxu0 0
          %1234 = vmatprep.mubr.bf16.mxu0 0
          %1235 = vmatmul.mubr.bf16.gmra.mrb[0].mxu0 %v1187
          %v1236 = vpop.f32.mrb[0].mxu0
          %v1237 = vadd.f32 0.0, %v1236
          %v1238 = vpop.f32.mrb[0].mxu0
          %v1239 = vadd.f32 0.0, %v1238
          %v1240 = vpop.f32.mrb[0].mxu0
          %v1241 = vadd.f32 0.0, %v1240
          %v1242 = vpop.f32.mrb[0].mxu0
          %v1243 = vadd.f32 0.0, %v1242
          %1244 = vdwg.mxu0
          %1245 = vmatprep.subr.bf16.mxu0 %v1200
          %1246 = vmatpush1.bf16.msra.mxu0 %v1197
          %1247 = vmatprep.subr.bf16.mxu0 0
          %1248 = vmatpush1.bf16.msra.mxu0 0
          %1249 = vmatprep.subr.bf16.mxu0 0
          %1250 = vmatpush1.bf16.msra.mxu0 0
          %1251 = vmatprep.subr.bf16.mxu0 0
          %1252 = vmatpush1.bf16.msra.mxu0 0
          %1253 = vmatprep.subr.bf16.mxu0 0
          %1254 = vmatpush1.bf16.msra.mxu0 0
          %1255 = vmatprep.subr.bf16.mxu0 0
          %1256 = vmatpush1.bf16.msra.mxu0 0
          %1257 = vmatprep.subr.bf16.mxu0 0
          %1258 = vmatpush1.bf16.msra.mxu0 0
          %1259 = vmatprep.subr.bf16.mxu0 0
          %1260 = vmatpush1.bf16.msra.mxu0 0
          %1261 = vmatprep.subr.bf16.mxu0 0
          %1262 = vmatpush1.bf16.msra.mxu0 0
          %1263 = vmatprep.subr.bf16.mxu0 0
          %1264 = vmatpush1.bf16.msra.mxu0 0
          %1265 = vmatprep.subr.bf16.mxu0 0
          %1266 = vmatpush1.bf16.msra.mxu0 0
          %1267 = vmatprep.subr.bf16.mxu0 0
          %1268 = vmatpush1.bf16.msra.mxu0 0
          %1269 = vmatprep.subr.bf16.mxu0 0
          %1270 = vmatpush1.bf16.msra.mxu0 0
          %1271 = vmatprep.subr.bf16.mxu0 0
          %1272 = vmatpush1.bf16.msra.mxu0 0
          %1273 = vmatprep.subr.bf16.mxu0 0
          %1274 = vmatpush1.bf16.msra.mxu0 0
          %1275 = vmatprep.subr.bf16.mxu0 0
          %1276 = vmatpush1.bf16.msra.mxu0 0
          %1277 = vmatprep.mubr.bf16.mxu0 0
          %1278 = vmatmul.mubr.bf16.gmra.mrb[0].mxu0 %v1187
          %v1279 = vpop.f32.mrb[0].mxu0
          %v1280 = vadd.f32 0.0, %v1279
          %v1281 = vpop.f32.mrb[0].mxu0
          %v1282 = vadd.f32 0.0, %v1281
          %v1283 = vpop.f32.mrb[0].mxu0
          %v1284 = vadd.f32 0.0, %v1283
          %v1285 = vpop.f32.mrb[0].mxu0
          %v1286 = vadd.f32 0.0, %v1285
          %1287 = vdwg.mxu0
          %v1288 = vmul.f32 %v1237, %v1158
          %v1289 = vmul.f32 %v1239, %v1159
          %v1290 = vmul.f32 %v1280, %v1160
          %v1291 = vmul.f32 %v1282, %v1161
          %v1292 = vmul.f32 %v1241, %v1162
          %v1293 = vmul.f32 %v1243, %v1163
          %v1294 = vmul.f32 %v1284, %v1164
          %v1295 = vmul.f32 %v1286, %v1165
          %v1296 = vpack.c.bf16 %v1292, %v1288
          %v1297 = vpack.c.bf16 %v1293, %v1289
          %v1298 = vpack.c.bf16 %v1294, %v1290
          %v1299 = vpack.c.bf16 %v1295, %v1291
          %v1300 = vld [vmem:[#allocation6] sm:$0xf]
          %v1301 = vld [vmem:[#allocation6 + $0x4] sm:$0xf]
          %v1302 = vld [vmem:[#allocation6 + $0x8] sm:$0xf]
          %v1303 = vld [vmem:[#allocation6 + $0xc] sm:$0xf]
          %v1304 = vld [vmem:[#allocation6 + $0x10] sm:$0xf]
          %v1305 = vld [vmem:[#allocation6 + $0x14] sm:$0xf]
          %v1306 = vld [vmem:[#allocation6 + $0x18] sm:$0xf]
          %v1307 = vld [vmem:[#allocation6 + $0x1c] sm:$0xf]
          %v1308 = vld [vmem:[#allocation6 + $0x20] sm:$0xf]
          %v1309 = vld [vmem:[#allocation6 + $0x24] sm:$0xf]
          %v1310 = vld [vmem:[#allocation6 + $0x28] sm:$0xf]
          %v1311 = vld [vmem:[#allocation6 + $0x2c] sm:$0xf]
          %v1312 = vld [vmem:[#allocation6 + $0x30] sm:$0xf]
          %v1313 = vld [vmem:[#allocation6 + $0x34] sm:$0xf]
          %v1314 = vld [vmem:[#allocation6 + $0x38] sm:$0xf]
          %v1315 = vld [vmem:[#allocation6 + $0x3c] sm:$0xf]
          %v1316 = vld [vmem:[#allocation6 + $0x40] sm:$0xf]
          %v1317 = vld [vmem:[#allocation6 + $0x44] sm:$0xf]
          %v1318 = vld [vmem:[#allocation6 + $0x48] sm:$0xf]
          %v1319 = vld [vmem:[#allocation6 + $0x4c] sm:$0xf]
          %v1320 = vld [vmem:[#allocation6 + $0x50] sm:$0xf]
          %v1321 = vld [vmem:[#allocation6 + $0x54] sm:$0xf]
          %v1322 = vld [vmem:[#allocation6 + $0x58] sm:$0xf]
          %v1323 = vld [vmem:[#allocation6 + $0x5c] sm:$0xf]
          %v1324 = vld [vmem:[#allocation6 + $0x60] sm:$0xf]
          %v1325 = vld [vmem:[#allocation6 + $0x64] sm:$0xf]
          %v1326 = vld [vmem:[#allocation6 + $0x68] sm:$0xf]
          %v1327 = vld [vmem:[#allocation6 + $0x6c] sm:$0xf]
          %v1328 = vld [vmem:[#allocation6 + $0x70] sm:$0xf]
          %v1329 = vld [vmem:[#allocation6 + $0x74] sm:$0xf]
          %v1330 = vld [vmem:[#allocation6 + $0x78] sm:$0xf]
          %v1331 = vld [vmem:[#allocation6 + $0x7c] sm:$0xf]
          %v1332 = vld [vmem:[#allocation6 + $0x80] sm:$0xf]
          %v1333 = vld [vmem:[#allocation6 + $0x84] sm:$0xf]
          %v1334 = vld [vmem:[#allocation6 + $0x88] sm:$0xf]
          %v1335 = vld [vmem:[#allocation6 + $0x8c] sm:$0xf]
          %v1336 = vld [vmem:[#allocation6 + $0x90] sm:$0xf]
          %v1337 = vld [vmem:[#allocation6 + $0x94] sm:$0xf]
          %v1338 = vld [vmem:[#allocation6 + $0x98] sm:$0xf]
          %v1339 = vld [vmem:[#allocation6 + $0x9c] sm:$0xf]
          %v1340 = vld [vmem:[#allocation6 + $0xa0] sm:$0xf]
          %v1341 = vld [vmem:[#allocation6 + $0xa4] sm:$0xf]
          %v1342 = vld [vmem:[#allocation6 + $0xa8] sm:$0xf]
          %v1343 = vld [vmem:[#allocation6 + $0xac] sm:$0xf]
          %v1344 = vld [vmem:[#allocation6 + $0xb0] sm:$0xf]
          %v1345 = vld [vmem:[#allocation6 + $0xb4] sm:$0xf]
          %v1346 = vld [vmem:[#allocation6 + $0xb8] sm:$0xf]
          %v1347 = vld [vmem:[#allocation6 + $0xbc] sm:$0xf]
          %v1348 = vld [vmem:[#allocation6 + $0xc0] sm:$0xf]
          %v1349 = vld [vmem:[#allocation6 + $0xc4] sm:$0xf]
          %v1350 = vld [vmem:[#allocation6 + $0xc8] sm:$0xf]
          %v1351 = vld [vmem:[#allocation6 + $0xcc] sm:$0xf]
          %v1352 = vld [vmem:[#allocation6 + $0xd0] sm:$0xf]
          %v1353 = vld [vmem:[#allocation6 + $0xd4] sm:$0xf]
          %v1354 = vld [vmem:[#allocation6 + $0xd8] sm:$0xf]
          %v1355 = vld [vmem:[#allocation6 + $0xdc] sm:$0xf]
          %v1356 = vld [vmem:[#allocation6 + $0xe0] sm:$0xf]
          %v1357 = vld [vmem:[#allocation6 + $0xe4] sm:$0xf]
          %v1358 = vld [vmem:[#allocation6 + $0xe8] sm:$0xf]
          %v1359 = vld [vmem:[#allocation6 + $0xec] sm:$0xf]
          %v1360 = vld [vmem:[#allocation6 + $0xf0] sm:$0xf]
          %v1361 = vld [vmem:[#allocation6 + $0xf4] sm:$0xf]
          %v1362 = vld [vmem:[#allocation6 + $0xf8] sm:$0xf]
          %v1363 = vld [vmem:[#allocation6 + $0xfc] sm:$0xf]
          %v1364 = vld [vmem:[%s5] sm:$0xf]
          %v1365 = vld [vmem:[%s5 + $0x4] sm:$0xf]
          %v1366 = vld [vmem:[%s5 + $0x8] sm:$0xf]
          %v1367 = vld [vmem:[%s5 + $0xc] sm:$0xf]
          %v1368 = vld [vmem:[%s5 + $0x10] sm:$0xf]
          %v1369 = vld [vmem:[%s5 + $0x14] sm:$0xf]
          %v1370 = vld [vmem:[%s5 + $0x18] sm:$0xf]
          %v1371 = vld [vmem:[%s5 + $0x1c] sm:$0xf]
          %v1372 = vld [vmem:[%s5 + $0x20] sm:$0xf]
          %v1373 = vld [vmem:[%s5 + $0x24] sm:$0xf]
          %v1374 = vld [vmem:[%s5 + $0x28] sm:$0xf]
          %v1375 = vld [vmem:[%s5 + $0x2c] sm:$0xf]
          %v1376 = vld [vmem:[%s5 + $0x30] sm:$0xf]
          %v1377 = vld [vmem:[%s5 + $0x34] sm:$0xf]
          %v1378 = vld [vmem:[%s5 + $0x38] sm:$0xf]
          %v1379 = vld [vmem:[%s5 + $0x3c] sm:$0xf]
          %v1396 = vunpack.c.l.b16 %v1364
          %v1397 = vunpack.c.l.b16 %v1365
          %v1398 = vunpack.c.l.b16 %v1366
          %v1399 = vunpack.c.l.b16 %v1367
          %v1400 = vunpack.c.l.b16 %v1368
          %v1401 = vunpack.c.l.b16 %v1369
          %v1402 = vunpack.c.l.b16 %v1370
          %v1403 = vunpack.c.l.b16 %v1371
          %v1404 = vunpack.c.l.b16 %v1372
          %v1405 = vunpack.c.l.b16 %v1373
          %v1406 = vunpack.c.l.b16 %v1374
          %v1407 = vunpack.c.l.b16 %v1375
          %v1408 = vunpack.c.l.b16 %v1376
          %v1409 = vunpack.c.l.b16 %v1377
          %v1410 = vunpack.c.l.b16 %v1378
          %v1411 = vunpack.c.l.b16 %v1379
          %v1412 = vpack.c.b16 %v1397, %v1396
          %v1413 = vpack.c.b16 %v1399, %v1398
          %v1414 = vpack.c.b16 %v1401, %v1400
          %v1415 = vpack.c.b16 %v1403, %v1402
          %v1416 = vpack.c.b16 %v1405, %v1404
          %v1417 = vpack.c.b16 %v1407, %v1406
          %v1418 = vpack.c.b16 %v1409, %v1408
          %v1419 = vpack.c.b16 %v1411, %v1410
          %1428 = vmatprep.subr.bf16.mxu0 0
          %1429 = vmatpush1.bf16.msra.mxu0 %v1412
          %1430 = vmatprep.subr.bf16.mxu0 0
          %1431 = vmatpush1.bf16.msra.mxu0 %v1413
          %1432 = vmatprep.subr.bf16.mxu0 0
          %1433 = vmatpush1.bf16.msra.mxu0 %v1414
          %1434 = vmatprep.subr.bf16.mxu0 0
          %1435 = vmatpush1.bf16.msra.mxu0 %v1415
          %1436 = vmatprep.subr.bf16.mxu0 0
          %1437 = vmatpush1.bf16.msra.mxu0 %v1416
          %1438 = vmatprep.subr.bf16.mxu0 0
          %1439 = vmatpush1.bf16.msra.mxu0 %v1417
          %1440 = vmatprep.subr.bf16.mxu0 0
          %1441 = vmatpush1.bf16.msra.mxu0 %v1418
          %1442 = vmatprep.subr.bf16.mxu0 0
          %1443 = vmatpush1.bf16.msra.mxu0 %v1419
          %1444 = vmatprep.subr.bf16.mxu0 0
          %1445 = vmatpush1.bf16.msra.mxu0 0
          %1446 = vmatprep.subr.bf16.mxu0 0
          %1447 = vmatpush1.bf16.msra.mxu0 0
          %1448 = vmatprep.subr.bf16.mxu0 0
          %1449 = vmatpush1.bf16.msra.mxu0 0
          %1450 = vmatprep.subr.bf16.mxu0 0
          %1451 = vmatpush1.bf16.msra.mxu0 0
          %1452 = vmatprep.subr.bf16.mxu0 0
          %1453 = vmatpush1.bf16.msra.mxu0 0
          %1454 = vmatprep.subr.bf16.mxu0 0
          %1455 = vmatpush1.bf16.msra.mxu0 0
          %1456 = vmatprep.subr.bf16.mxu0 0
          %1457 = vmatpush1.bf16.msra.mxu0 0
          %1458 = vmatprep.subr.bf16.mxu0 0
          %1459 = vmatpush1.bf16.msra.mxu0 0
          %1460 = vmatprep.mubr.bf16.mxu0 0
          %1461 = vmatmul.mubr.bf16.gmra.mrb[0].mxu0 %v751
          %v1462 = vpop.f32.mrb[0].mxu0
          %v1463 = vadd.f32 0.0, %v1462
          %v1464 = vpop.f32.mrb[0].mxu0
          %v1465 = vpop.f32.mrb[0].mxu0
          %v1466 = vadd.f32 0.0, %v1465
          %v1467 = vpop.f32.mrb[0].mxu0
          %1468 = vdwg.mxu0
          %v1469 = vmul.f32 %v1463, 0.088388346
          %v1470 = vmul.f32 %v1466, 0.088388346
          %1471 = vmax.xlane.f32.xlu0 %v1469
          %v1472 = vpop.xlane.xlu0 %1471
          %1473 = vmax.xlane.f32.xlu0 %v1470
          %v1474 = vpop.xlane.xlu0 %1473
          %v1475 = vsub.f32 %v1469, %v1472
          %v1476 = vsub.f32 %v1470, %v1474
          %v1477 = vmul.f32 %v1475, 1.442695
          %v1478 = vpow.pop %v1477
          %v1479 = vmul.f32 %v1476, 1.442695
          %v1480 = vpow.pop %v1479
          %1481 = vadd.xlane.f32.xlu0 %v1478
          %v1482 = vpop.xlane.xlu0 %1481
          %1483 = vadd.xlane.f32.xlu0 %v1480
          %v1484 = vpop.xlane.xlu0 %1483
          %v1485 = vrcp.pop %v1482
          %v1486 = vrcp.pop %v1484
          %v1487 = vmul.f32 %v1478, %v1485
          %v1488 = vmul.f32 %v1480, %v1486
          %v1489 = vpack.c.bf16 %v1488, %v1487
          %v1490 = vld [vmem:[#allocation9] sm:$0xf]
          %v1491 = vld [vmem:[#allocation9 + $0x4] sm:$0xf]
          %v1492 = vld [vmem:[#allocation9 + $0x8] sm:$0xf]
          %v1493 = vld [vmem:[#allocation9 + $0xc] sm:$0xf]
          %v1494 = vld [vmem:[#allocation9 + $0x10] sm:$0xf]
          %v1495 = vld [vmem:[#allocation9 + $0x14] sm:$0xf]
          %v1496 = vld [vmem:[#allocation9 + $0x18] sm:$0xf]
          %v1497 = vld [vmem:[#allocation9 + $0x1c] sm:$0xf]
          %v1498 = vld [vmem:[#allocation9 + $0x20] sm:$0xf]
          %v1499 = vld [vmem:[#allocation9 + $0x24] sm:$0xf]
          %v1500 = vld [vmem:[#allocation9 + $0x28] sm:$0xf]
          %v1501 = vld [vmem:[#allocation9 + $0x2c] sm:$0xf]
          %v1502 = vld [vmem:[#allocation9 + $0x30] sm:$0xf]
          %v1503 = vld [vmem:[#allocation9 + $0x34] sm:$0xf]
          %v1504 = vld [vmem:[#allocation9 + $0x38] sm:$0xf]
          %v1505 = vld [vmem:[#allocation9 + $0x3c] sm:$0xf]
          %v1522 = vunpack.c.l.b16 %v1490
          %v1523 = vunpack.c.l.b16 %v1491
          %v1524 = vunpack.c.l.b16 %v1492
          %v1525 = vunpack.c.l.b16 %v1493
          %v1526 = vunpack.c.l.b16 %v1494
          %v1527 = vunpack.c.l.b16 %v1495
          %v1528 = vunpack.c.l.b16 %v1496
          %v1529 = vunpack.c.l.b16 %v1497
          %v1530 = vunpack.c.l.b16 %v1498
          %v1531 = vunpack.c.l.b16 %v1499
          %v1532 = vunpack.c.l.b16 %v1500
          %v1533 = vunpack.c.l.b16 %v1501
          %v1534 = vunpack.c.l.b16 %v1502
          %v1535 = vunpack.c.l.b16 %v1503
          %v1536 = vunpack.c.l.b16 %v1504
          %v1537 = vunpack.c.l.b16 %v1505
          %v1538 = vpack.c.b16 %v1523, %v1522
          %v1539 = vpack.c.b16 %v1525, %v1524
          %v1540 = vpack.c.b16 %v1527, %v1526
          %v1541 = vpack.c.b16 %v1529, %v1528
          %v1542 = vpack.c.b16 %v1531, %v1530
          %v1543 = vpack.c.b16 %v1533, %v1532
          %v1544 = vpack.c.b16 %v1535, %v1534
          %v1545 = vpack.c.b16 %v1537, %v1536
          %1554 = vmatprep.subr.bf16.mxu0 0
          %1555 = vmatpush1.bf16.msra.mxu0 %v1538
          %1556 = vmatprep.subr.bf16.mxu0 0
          %1557 = vmatpush1.bf16.msra.mxu0 %v1539
          %1558 = vmatprep.subr.bf16.mxu0 0
          %1559 = vmatpush1.bf16.msra.mxu0 %v1540
          %1560 = vmatprep.subr.bf16.mxu0 0
          %1561 = vmatpush1.bf16.msra.mxu0 %v1541
          %1562 = vmatprep.subr.bf16.mxu0 0
          %1563 = vmatpush1.bf16.msra.mxu0 %v1542
          %1564 = vmatprep.subr.bf16.mxu0 0
          %1565 = vmatpush1.bf16.msra.mxu0 %v1543
          %1566 = vmatprep.subr.bf16.mxu0 0
          %1567 = vmatpush1.bf16.msra.mxu0 %v1544
          %1568 = vmatprep.subr.bf16.mxu0 0
          %1569 = vmatpush1.bf16.msra.mxu0 %v1545
          %1570 = vmatprep.subr.bf16.mxu0 0
          %1571 = vmatpush1.bf16.msra.mxu0 0
          %1572 = vmatprep.subr.bf16.mxu0 0
          %1573 = vmatpush1.bf16.msra.mxu0 0
          %1574 = vmatprep.subr.bf16.mxu0 0
          %1575 = vmatpush1.bf16.msra.mxu0 0
          %1576 = vmatprep.subr.bf16.mxu0 0
          %1577 = vmatpush1.bf16.msra.mxu0 0
          %1578 = vmatprep.subr.bf16.mxu0 0
          %1579 = vmatpush1.bf16.msra.mxu0 0
          %1580 = vmatprep.subr.bf16.mxu0 0
          %1581 = vmatpush1.bf16.msra.mxu0 0
          %1582 = vmatprep.subr.bf16.mxu0 0
          %1583 = vmatpush1.bf16.msra.mxu0 0
          %1584 = vmatprep.subr.bf16.mxu0 0
          %1585 = vmatpush1.bf16.msra.mxu0 0
          %1586 = vmatprep.mubr.bf16.mxu0 0
          %1587 = vmatmul.mubr.bf16.gmra.mrb[0].mxu0 %v1489
          %v1588 = vpop.f32.mrb[0].mxu0
          %v1589 = vadd.f32 0.0, %v1588
          %v1590 = vpop.f32.mrb[0].mxu0
          %v1591 = vpop.f32.mrb[0].mxu0
          %v1592 = vadd.f32 0.0, %v1591
          %v1593 = vpop.f32.mrb[0].mxu0
          %1594 = vdwg.mxu0
          %v1659 = vunpack.c.l.b16 %v1300
          %v1660 = vunpack.c.l.b16 %v1301
          %v1661 = vunpack.c.l.b16 %v1302
          %v1662 = vunpack.c.l.b16 %v1303
          %v1663 = vunpack.c.l.b16 %v1304
          %v1664 = vunpack.c.l.b16 %v1305
          %v1665 = vunpack.c.l.b16 %v1306
          %v1666 = vunpack.c.l.b16 %v1307
          %v1667 = vunpack.c.l.b16 %v1308
          %v1668 = vunpack.c.l.b16 %v1309
          %v1669 = vunpack.c.l.b16 %v1310
          %v1670 = vunpack.c.l.b16 %v1311
          %v1671 = vunpack.c.l.b16 %v1312
          %v1672 = vunpack.c.l.b16 %v1313
          %v1673 = vunpack.c.l.b16 %v1314
          %v1674 = vunpack.c.l.b16 %v1315
          %v1675 = vunpack.c.l.b16 %v1316
          %v1676 = vunpack.c.l.b16 %v1317
          %v1677 = vunpack.c.l.b16 %v1318
          %v1678 = vunpack.c.l.b16 %v1319
          %v1679 = vunpack.c.l.b16 %v1320
          %v1680 = vunpack.c.l.b16 %v1321
          %v1681 = vunpack.c.l.b16 %v1322
          %v1682 = vunpack.c.l.b16 %v1323
          %v1683 = vunpack.c.l.b16 %v1324
          %v1684 = vunpack.c.l.b16 %v1325
          %v1685 = vunpack.c.l.b16 %v1326
          %v1686 = vunpack.c.l.b16 %v1327
          %v1687 = vunpack.c.l.b16 %v1328
          %v1688 = vunpack.c.l.b16 %v1329
          %v1689 = vunpack.c.l.b16 %v1330
          %v1690 = vunpack.c.l.b16 %v1331
          %v1691 = vunpack.c.l.b16 %v1332
          %v1692 = vunpack.c.l.b16 %v1333
          %v1693 = vunpack.c.l.b16 %v1334
          %v1694 = vunpack.c.l.b16 %v1335
          %v1695 = vunpack.c.l.b16 %v1336
          %v1696 = vunpack.c.l.b16 %v1337
          %v1697 = vunpack.c.l.b16 %v1338
          %v1698 = vunpack.c.l.b16 %v1339
          %v1699 = vunpack.c.l.b16 %v1340
          %v1700 = vunpack.c.l.b16 %v1341
          %v1701 = vunpack.c.l.b16 %v1342
          %v1702 = vunpack.c.l.b16 %v1343
          %v1703 = vunpack.c.l.b16 %v1344
          %v1704 = vunpack.c.l.b16 %v1345
          %v1705 = vunpack.c.l.b16 %v1346
          %v1706 = vunpack.c.l.b16 %v1347
          %v1707 = vunpack.c.l.b16 %v1348
          %v1708 = vunpack.c.l.b16 %v1349
          %v1709 = vunpack.c.l.b16 %v1350
          %v1710 = vunpack.c.l.b16 %v1351
          %v1711 = vunpack.c.l.b16 %v1352
          %v1712 = vunpack.c.l.b16 %v1353
          %v1713 = vunpack.c.l.b16 %v1354
          %v1714 = vunpack.c.l.b16 %v1355
          %v1715 = vunpack.c.l.b16 %v1356
          %v1716 = vunpack.c.l.b16 %v1357
          %v1717 = vunpack.c.l.b16 %v1358
          %v1718 = vunpack.c.l.b16 %v1359
          %v1719 = vunpack.c.l.b16 %v1360
          %v1720 = vunpack.c.l.b16 %v1361
          %v1721 = vunpack.c.l.b16 %v1362
          %v1722 = vunpack.c.l.b16 %v1363
          %v1723 = vpack.c.b16 %v1660, %v1659
          %v1724 = vpack.c.b16 %v1662, %v1661
          %v1725 = vpack.c.b16 %v1664, %v1663
          %v1726 = vpack.c.b16 %v1666, %v1665
          %v1727 = vpack.c.b16 %v1668, %v1667
          %v1728 = vpack.c.b16 %v1670, %v1669
          %v1729 = vpack.c.b16 %v1672, %v1671
          %v1730 = vpack.c.b16 %v1674, %v1673
          %v1731 = vpack.c.b16 %v1676, %v1675
          %v1732 = vpack.c.b16 %v1678, %v1677
          %v1733 = vpack.c.b16 %v1680, %v1679
          %v1734 = vpack.c.b16 %v1682, %v1681
          %v1735 = vpack.c.b16 %v1684, %v1683
          %v1736 = vpack.c.b16 %v1686, %v1685
          %v1737 = vpack.c.b16 %v1688, %v1687
          %v1738 = vpack.c.b16 %v1690, %v1689
          %v1739 = vpack.c.b16 %v1692, %v1691
          %v1740 = vpack.c.b16 %v1694, %v1693
          %v1741 = vpack.c.b16 %v1696, %v1695
          %v1742 = vpack.c.b16 %v1698, %v1697
          %v1743 = vpack.c.b16 %v1700, %v1699
          %v1744 = vpack.c.b16 %v1702, %v1701
          %v1745 = vpack.c.b16 %v1704, %v1703
          %v1746 = vpack.c.b16 %v1706, %v1705
          %v1747 = vpack.c.b16 %v1708, %v1707
          %v1748 = vpack.c.b16 %v1710, %v1709
          %v1749 = vpack.c.b16 %v1712, %v1711
          %v1750 = vpack.c.b16 %v1714, %v1713
          %v1751 = vpack.c.b16 %v1716, %v1715
          %v1752 = vpack.c.b16 %v1718, %v1717
          %v1753 = vpack.c.b16 %v1720, %v1719
          %v1754 = vpack.c.b16 %v1722, %v1721
          %1787 = vmatprep.subr.bf16.mxu0 0
          %1788 = vmatpush1.bf16.msra.mxu0 %v1723
          %1789 = vmatprep.subr.bf16.mxu0 0
          %1790 = vmatpush1.bf16.msra.mxu0 %v1724
          %1791 = vmatprep.subr.bf16.mxu0 0
          %1792 = vmatpush1.bf16.msra.mxu0 %v1725
          %1793 = vmatprep.subr.bf16.mxu0 0
          %1794 = vmatpush1.bf16.msra.mxu0 %v1726
          %1795 = vmatprep.subr.bf16.mxu0 0
          %1796 = vmatpush1.bf16.msra.mxu0 %v1727
          %1797 = vmatprep.subr.bf16.mxu0 0
          %1798 = vmatpush1.bf16.msra.mxu0 %v1728
          %1799 = vmatprep.subr.bf16.mxu0 0
          %1800 = vmatpush1.bf16.msra.mxu0 %v1729
          %1801 = vmatprep.subr.bf16.mxu0 0
          %1802 = vmatpush1.bf16.msra.mxu0 %v1730
          %1803 = vmatprep.subr.bf16.mxu0 0
          %1804 = vmatpush1.bf16.msra.mxu0 %v1731
          %1805 = vmatprep.subr.bf16.mxu0 0
          %1806 = vmatpush1.bf16.msra.mxu0 %v1732
          %1807 = vmatprep.subr.bf16.mxu0 0
          %1808 = vmatpush1.bf16.msra.mxu0 %v1733
          %1809 = vmatprep.subr.bf16.mxu0 0
          %1810 = vmatpush1.bf16.msra.mxu0 %v1734
          %1811 = vmatprep.subr.bf16.mxu0 0
          %1812 = vmatpush1.bf16.msra.mxu0 %v1735
          %1813 = vmatprep.subr.bf16.mxu0 0
          %1814 = vmatpush1.bf16.msra.mxu0 %v1736
          %1815 = vmatprep.subr.bf16.mxu0 0
          %1816 = vmatpush1.bf16.msra.mxu0 %v1737
          %1817 = vmatprep.subr.bf16.mxu0 0
          %1818 = vmatpush1.bf16.msra.mxu0 %v1738
          %1819 = vmatprep.mubr.bf16.mxu0 %v1297
          %1820 = vmatmul.mubr.bf16.gmra.mrb[0].mxu0 %v1296
          %v1821 = vpop.f32.mrb[0].mxu0
          %v1822 = vadd.f32 %v1589, %v1821
          %v1823 = vpop.f32.mrb[0].mxu0
          %v1824 = vpop.f32.mrb[0].mxu0
          %v1825 = vadd.f32 %v1592, %v1824
          %v1826 = vpop.f32.mrb[0].mxu0
          %1827 = vdwg.mxu0
          %1828 = vmatprep.subr.bf16.mxu0 0
          %1829 = vmatpush1.bf16.msra.mxu0 %v1739
          %1830 = vmatprep.subr.bf16.mxu0 0
          %1831 = vmatpush1.bf16.msra.mxu0 %v1740
          %1832 = vmatprep.subr.bf16.mxu0 0
          %1833 = vmatpush1.bf16.msra.mxu0 %v1741
          %1834 = vmatprep.subr.bf16.mxu0 0
          %1835 = vmatpush1.bf16.msra.mxu0 %v1742
          %1836 = vmatprep.subr.bf16.mxu0 0
          %1837 = vmatpush1.bf16.msra.mxu0 %v1743
          %1838 = vmatprep.subr.bf16.mxu0 0
          %1839 = vmatpush1.bf16.msra.mxu0 %v1744
          %1840 = vmatprep.subr.bf16.mxu0 0
          %1841 = vmatpush1.bf16.msra.mxu0 %v1745
          %1842 = vmatprep.subr.bf16.mxu0 0
          %1843 = vmatpush1.bf16.msra.mxu0 %v1746
          %1844 = vmatprep.subr.bf16.mxu0 0
          %1845 = vmatpush1.bf16.msra.mxu0 %v1747
          %1846 = vmatprep.subr.bf16.mxu0 0
          %1847 = vmatpush1.bf16.msra.mxu0 %v1748
          %1848 = vmatprep.subr.bf16.mxu0 0
          %1849 = vmatpush1.bf16.msra.mxu0 %v1749
          %1850 = vmatprep.subr.bf16.mxu0 0
          %1851 = vmatpush1.bf16.msra.mxu0 %v1750
          %1852 = vmatprep.subr.bf16.mxu0 0
          %1853 = vmatpush1.bf16.msra.mxu0 %v1751
          %1854 = vmatprep.subr.bf16.mxu0 0
          %1855 = vmatpush1.bf16.msra.mxu0 %v1752
          %1856 = vmatprep.subr.bf16.mxu0 0
          %1857 = vmatpush1.bf16.msra.mxu0 %v1753
          %1858 = vmatprep.subr.bf16.mxu0 0
          %1859 = vmatpush1.bf16.msra.mxu0 %v1754
          %1860 = vmatprep.mubr.bf16.mxu0 %v1299
          %1861 = vmatmul.mubr.bf16.gmra.mrb[0].mxu0 %v1298
          %v1862 = vpop.f32.mrb[0].mxu0
          %v1863 = vadd.f32 %v1822, %v1862
          %v1864 = vpop.f32.mrb[0].mxu0
          %v1865 = vpop.f32.mrb[0].mxu0
          %v1866 = vadd.f32 %v1825, %v1865
          %v1867 = vpop.f32.mrb[0].mxu0
          %1868 = vdwg.mxu0
          %v1869 = vpack.c.bf16 %v1866, %v1863
          %v1870 = vld [vmem:[#allocation11] sm:$0xff]
          %v1871 = vld [vmem:[#allocation11 + $0x8] sm:$0xff]
          %v1872 = vld [vmem:[#allocation11 + $0x10] sm:$0xff]
          %v1873 = vld [vmem:[#allocation11 + $0x18] sm:$0xff]
          %v1874 = vld [vmem:[#allocation11 + $0x20] sm:$0xff]
          %v1875 = vld [vmem:[#allocation11 + $0x28] sm:$0xff]
          %v1876 = vld [vmem:[#allocation11 + $0x30] sm:$0xff]
          %v1877 = vld [vmem:[#allocation11 + $0x38] sm:$0xff]
          %v1878 = vld [vmem:[#allocation11 + $0x40] sm:$0xff]
          %v1879 = vld [vmem:[#allocation11 + $0x48] sm:$0xff]
          %v1880 = vld [vmem:[#allocation11 + $0x50] sm:$0xff]
          %v1881 = vld [vmem:[#allocation11 + $0x58] sm:$0xff]
          %v1882 = vld [vmem:[#allocation11 + $0x60] sm:$0xff]
          %v1883 = vld [vmem:[#allocation11 + $0x68] sm:$0xff]
          %v1884 = vld [vmem:[#allocation11 + $0x70] sm:$0xff]
          %v1885 = vld [vmem:[#allocation11 + $0x78] sm:$0xff]
          %v1902 = vunpack.c.l.b16 %v1870
          %v1903 = vunpack.c.h.b16 %v1870
          %v1904 = vunpack.c.l.b16 %v1871
          %v1905 = vunpack.c.h.b16 %v1871
          %v1906 = vunpack.c.l.b16 %v1872
          %v1907 = vunpack.c.h.b16 %v1872
          %v1908 = vunpack.c.l.b16 %v1873
          %v1909 = vunpack.c.h.b16 %v1873
          %v1910 = vunpack.c.l.b16 %v1874
          %v1911 = vunpack.c.h.b16 %v1874
          %v1912 = vunpack.c.l.b16 %v1875
          %v1913 = vunpack.c.h.b16 %v1875
          %v1914 = vunpack.c.l.b16 %v1876
          %v1915 = vunpack.c.h.b16 %v1876
          %v1916 = vunpack.c.l.b16 %v1877
          %v1917 = vunpack.c.h.b16 %v1877
          %v1918 = vunpack.c.l.b16 %v1878
          %v1919 = vunpack.c.h.b16 %v1878
          %v1920 = vunpack.c.l.b16 %v1879
          %v1921 = vunpack.c.h.b16 %v1879
          %v1922 = vunpack.c.l.b16 %v1880
          %v1923 = vunpack.c.h.b16 %v1880
          %v1924 = vunpack.c.l.b16 %v1881
          %v1925 = vunpack.c.h.b16 %v1881
          %v1926 = vunpack.c.l.b16 %v1882
          %v1927 = vunpack.c.h.b16 %v1882
          %v1928 = vunpack.c.l.b16 %v1883
          %v1929 = vunpack.c.h.b16 %v1883
          %v1930 = vunpack.c.l.b16 %v1884
          %v1931 = vunpack.c.h.b16 %v1884
          %v1932 = vunpack.c.l.b16 %v1885
          %v1933 = vunpack.c.h.b16 %v1885
          %v1934 = vpack.c.b16 %v1904, %v1902
          %v1935 = vpack.c.b16 %v1905, %v1903
          %v1936 = vpack.c.b16 %v1908, %v1906
          %v1937 = vpack.c.b16 %v1909, %v1907
          %v1938 = vpack.c.b16 %v1912, %v1910
          %v1939 = vpack.c.b16 %v1913, %v1911
          %v1940 = vpack.c.b16 %v1916, %v1914
          %v1941 = vpack.c.b16 %v1917, %v1915
          %v1942 = vpack.c.b16 %v1920, %v1918
          %v1943 = vpack.c.b16 %v1921, %v1919
          %v1944 = vpack.c.b16 %v1924, %v1922
          %v1945 = vpack.c.b16 %v1925, %v1923
          %v1946 = vpack.c.b16 %v1928, %v1926
          %v1947 = vpack.c.b16 %v1929, %v1927
          %v1948 = vpack.c.b16 %v1932, %v1930
          %v1949 = vpack.c.b16 %v1933, %v1931
          %1966 = vmatprep.subr.bf16.mxu0 %v1935
          %1967 = vmatpush1.bf16.msra.mxu0 %v1934
          %1968 = vmatprep.subr.bf16.mxu0 %v1937
          %1969 = vmatpush1.bf16.msra.mxu0 %v1936
          %1970 = vmatprep.subr.bf16.mxu0 %v1939
          %1971 = vmatpush1.bf16.msra.mxu0 %v1938
          %1972 = vmatprep.subr.bf16.mxu0 %v1941
          %1973 = vmatpush1.bf16.msra.mxu0 %v1940
          %1974 = vmatprep.subr.bf16.mxu0 %v1943
          %1975 = vmatpush1.bf16.msra.mxu0 %v1942
          %1976 = vmatprep.subr.bf16.mxu0 %v1945
          %1977 = vmatpush1.bf16.msra.mxu0 %v1944
          %1978 = vmatprep.subr.bf16.mxu0 %v1947
          %1979 = vmatpush1.bf16.msra.mxu0 %v1946
          %1980 = vmatprep.subr.bf16.mxu0 %v1949
          %1981 = vmatpush1.bf16.msra.mxu0 %v1948
          %1982 = vmatprep.subr.bf16.mxu0 0
          %1983 = vmatpush1.bf16.msra.mxu0 0
          %1984 = vmatprep.subr.bf16.mxu0 0
          %1985 = vmatpush1.bf16.msra.mxu0 0
          %1986 = vmatprep.subr.bf16.mxu0 0
          %1987 = vmatpush1.bf16.msra.mxu0 0
          %1988 = vmatprep.subr.bf16.mxu0 0
          %1989 = vmatpush1.bf16.msra.mxu0 0
          %1990 = vmatprep.subr.bf16.mxu0 0
          %1991 = vmatpush1.bf16.msra.mxu0 0
          %1992 = vmatprep.subr.bf16.mxu0 0
          %1993 = vmatpush1.bf16.msra.mxu0 0
          %1994 = vmatprep.subr.bf16.mxu0 0
          %1995 = vmatpush1.bf16.msra.mxu0 0
          %1996 = vmatprep.subr.bf16.mxu0 0
          %1997 = vmatpush1.bf16.msra.mxu0 0
          %1998 = vmatprep.mubr.bf16.mxu0 0
          %1999 = vmatmul.mubr.bf16.gmra.mrb[0].mxu0 %v1869
          %v2000 = vpop.f32.mrb[0].mxu0
          %v2001 = vadd.f32 0.0, %v2000
          %v2002 = vpop.f32.mrb[0].mxu0
          %v2003 = vadd.f32 0.0, %v2002
          %v2004 = vpop.f32.mrb[0].mxu0
          %v2005 = vadd.f32 0.0, %v2004
          %v2006 = vpop.f32.mrb[0].mxu0
          %v2007 = vadd.f32 0.0, %v2006
          %2008 = vdwg.mxu0
          %v2009 = vmul.f32 %v2001, 0.5
          %v2010 = vmul.f32 %v2003, 0.5
          %v2011 = vmul.f32 %v2005, 0.5
          %v2012 = vmul.f32 %v2007, 0.5
          %v2013 = vmul.f32 %v2001, 0.044715
          %v2014 = vmul.f32 %v2003, 0.044715
          %v2015 = vmul.f32 %v2005, 0.044715
          %v2016 = vmul.f32 %v2007, 0.044715
          %v2017 = vmul.f32 %v2013, %v2001
          %v2018 = vmul.f32 %v2014, %v2003
          %v2019 = vmul.f32 %v2015, %v2005
          %v2020 = vmul.f32 %v2016, %v2007
          %v2021 = vmul.f32 %v2017, %v2001
          %v2022 = vmul.f32 %v2018, %v2003
          %v2023 = vmul.f32 %v2019, %v2005
          %v2024 = vmul.f32 %v2020, %v2007
          %v2025 = vadd.f32 %v2001, %v2021
          %v2026 = vadd.f32 %v2003, %v2022
          %v2027 = vadd.f32 %v2005, %v2023
          %v2028 = vadd.f32 %v2007, %v2024
          %v2029 = vmul.f32 %v2025, 0.7978846
          %v2030 = vmul.f32 %v2026, 0.7978846
          %v2031 = vmul.f32 %v2027, 0.7978846
          %v2032 = vmul.f32 %v2028, 0.7978846
          %v2033 = vtanh.pop %v2029
          %v2034 = vtanh.pop %v2030
          %v2035 = vtanh.pop %v2031
          %v2036 = vtanh.pop %v2032
          %v2037 = vadd.f32 %v2033, 1.0
          %v2038 = vadd.f32 %v2034, 1.0
          %v2039 = vadd.f32 %v2035, 1.0
          %v2040 = vadd.f32 %v2036, 1.0
          %v2041 = vmul.f32 %v2009, %v2037
          %v2042 = vmul.f32 %v2010, %v2038
          %v2043 = vmul.f32 %v2011, %v2039
          %v2044 = vmul.f32 %v2012, %v2040
          %v2045 = vld [vmem:[#allocation12] sm:$0xff]
          %v2046 = vld [vmem:[#allocation12 + $0x8] sm:$0xff]
          %v2047 = vld [vmem:[#allocation12 + $0x10] sm:$0xff]
          %v2048 = vld [vmem:[#allocation12 + $0x18] sm:$0xff]
          %v2049 = vld [vmem:[#allocation12 + $0x20] sm:$0xff]
          %v2050 = vld [vmem:[#allocation12 + $0x28] sm:$0xff]
          %v2051 = vld [vmem:[#allocation12 + $0x30] sm:$0xff]
          %v2052 = vld [vmem:[#allocation12 + $0x38] sm:$0xff]
          %v2053 = vld [vmem:[#allocation12 + $0x40] sm:$0xff]
          %v2054 = vld [vmem:[#allocation12 + $0x48] sm:$0xff]
          %v2055 = vld [vmem:[#allocation12 + $0x50] sm:$0xff]
          %v2056 = vld [vmem:[#allocation12 + $0x58] sm:$0xff]
          %v2057 = vld [vmem:[#allocation12 + $0x60] sm:$0xff]
          %v2058 = vld [vmem:[#allocation12 + $0x68] sm:$0xff]
          %v2059 = vld [vmem:[#allocation12 + $0x70] sm:$0xff]
          %v2060 = vld [vmem:[#allocation12 + $0x78] sm:$0xff]
          %v2077 = vunpack.c.l.b16 %v2045
          %v2078 = vunpack.c.h.b16 %v2045
          %v2079 = vunpack.c.l.b16 %v2046
          %v2080 = vunpack.c.h.b16 %v2046
          %v2081 = vunpack.c.l.b16 %v2047
          %v2082 = vunpack.c.h.b16 %v2047
          %v2083 = vunpack.c.l.b16 %v2048
          %v2084 = vunpack.c.h.b16 %v2048
          %v2085 = vunpack.c.l.b16 %v2049
          %v2086 = vunpack.c.h.b16 %v2049
          %v2087 = vunpack.c.l.b16 %v2050
          %v2088 = vunpack.c.h.b16 %v2050
          %v2089 = vunpack.c.l.b16 %v2051
          %v2090 = vunpack.c.h.b16 %v2051
          %v2091 = vunpack.c.l.b16 %v2052
          %v2092 = vunpack.c.h.b16 %v2052
          %v2093 = vunpack.c.l.b16 %v2053
          %v2094 = vunpack.c.h.b16 %v2053
          %v2095 = vunpack.c.l.b16 %v2054
          %v2096 = vunpack.c.h.b16 %v2054
          %v2097 = vunpack.c.l.b16 %v2055
          %v2098 = vunpack.c.h.b16 %v2055
          %v2099 = vunpack.c.l.b16 %v2056
          %v2100 = vunpack.c.h.b16 %v2056
          %v2101 = vunpack.c.l.b16 %v2057
          %v2102 = vunpack.c.h.b16 %v2057
          %v2103 = vunpack.c.l.b16 %v2058
          %v2104 = vunpack.c.h.b16 %v2058
          %v2105 = vunpack.c.l.b16 %v2059
          %v2106 = vunpack.c.h.b16 %v2059
          %v2107 = vunpack.c.l.b16 %v2060
          %v2108 = vunpack.c.h.b16 %v2060
          %v2109 = vpack.c.b16 %v2079, %v2077
          %v2110 = vpack.c.b16 %v2080, %v2078
          %v2111 = vpack.c.b16 %v2083, %v2081
          %v2112 = vpack.c.b16 %v2084, %v2082
          %v2113 = vpack.c.b16 %v2087, %v2085
          %v2114 = vpack.c.b16 %v2088, %v2086
          %v2115 = vpack.c.b16 %v2091, %v2089
          %v2116 = vpack.c.b16 %v2092, %v2090
          %v2117 = vpack.c.b16 %v2095, %v2093
          %v2118 = vpack.c.b16 %v2096, %v2094
          %v2119 = vpack.c.b16 %v2099, %v2097
          %v2120 = vpack.c.b16 %v2100, %v2098
          %v2121 = vpack.c.b16 %v2103, %v2101
          %v2122 = vpack.c.b16 %v2104, %v2102
          %v2123 = vpack.c.b16 %v2107, %v2105
          %v2124 = vpack.c.b16 %v2108, %v2106
          %2141 = vmatprep.subr.bf16.mxu0 %v2110
          %2142 = vmatpush1.bf16.msra.mxu0 %v2109
          %2143 = vmatprep.subr.bf16.mxu0 %v2112
          %2144 = vmatpush1.bf16.msra.mxu0 %v2111
          %2145 = vmatprep.subr.bf16.mxu0 %v2114
          %2146 = vmatpush1.bf16.msra.mxu0 %v2113
          %2147 = vmatprep.subr.bf16.mxu0 %v2116
          %2148 = vmatpush1.bf16.msra.mxu0 %v2115
          %2149 = vmatprep.subr.bf16.mxu0 %v2118
          %2150 = vmatpush1.bf16.msra.mxu0 %v2117
          %2151 = vmatprep.subr.bf16.mxu0 %v2120
          %2152 = vmatpush1.bf16.msra.mxu0 %v2119
          %2153 = vmatprep.subr.bf16.mxu0 %v2122
          %2154 = vmatpush1.bf16.msra.mxu0 %v2121
          %2155 = vmatprep.subr.bf16.mxu0 %v2124
          %2156 = vmatpush1.bf16.msra.mxu0 %v2123
          %2157 = vmatprep.subr.bf16.mxu0 0
          %2158 = vmatpush1.bf16.msra.mxu0 0
          %2159 = vmatprep.subr.bf16.mxu0 0
          %2160 = vmatpush1.bf16.msra.mxu0 0
          %2161 = vmatprep.subr.bf16.mxu0 0
          %2162 = vmatpush1.bf16.msra.mxu0 0
          %2163 = vmatprep.subr.bf16.mxu0 0
          %2164 = vmatpush1.bf16.msra.mxu0 0
          %2165 = vmatprep.subr.bf16.mxu0 0
          %2166 = vmatpush1.bf16.msra.mxu0 0
          %2167 = vmatprep.subr.bf16.mxu0 0
          %2168 = vmatpush1.bf16.msra.mxu0 0
          %2169 = vmatprep.subr.bf16.mxu0 0
          %2170 = vmatpush1.bf16.msra.mxu0 0
          %2171 = vmatprep.subr.bf16.mxu0 0
          %2172 = vmatpush1.bf16.msra.mxu0 0
          %2173 = vmatprep.mubr.bf16.mxu0 0
          %2174 = vmatmul.mubr.bf16.gmra.mrb[0].mxu0 %v1869
          %v2175 = vpop.f32.mrb[0].mxu0
          %v2176 = vadd.f32 0.0, %v2175
          %v2177 = vpop.f32.mrb[0].mxu0
          %v2178 = vadd.f32 0.0, %v2177
          %v2179 = vpop.f32.mrb[0].mxu0
          %v2180 = vadd.f32 0.0, %v2179
          %v2181 = vpop.f32.mrb[0].mxu0
          %v2182 = vadd.f32 0.0, %v2181
          %2183 = vdwg.mxu0
          %v2184 = vmul.f32 %v2041, %v2176
          %v2185 = vmul.f32 %v2042, %v2178
          %v2186 = vmul.f32 %v2043, %v2180
          %v2187 = vmul.f32 %v2044, %v2182
          %v2188 = vpack.c.bf16 %v2186, %v2184
          %v2189 = vpack.c.bf16 %v2187, %v2185
          %v2190 = vld [vmem:[#allocation14] sm:$0xf]
          %v2191 = vld [vmem:[#allocation14 + $0x4] sm:$0xf]
          %v2192 = vld [vmem:[#allocation14 + $0x8] sm:$0xf]
          %v2193 = vld [vmem:[#allocation14 + $0xc] sm:$0xf]
          %v2194 = vld [vmem:[#allocation14 + $0x10] sm:$0xf]
          %v2195 = vld [vmem:[#allocation14 + $0x14] sm:$0xf]
          %v2196 = vld [vmem:[#allocation14 + $0x18] sm:$0xf]
          %v2197 = vld [vmem:[#allocation14 + $0x1c] sm:$0xf]
          %v2198 = vld [vmem:[#allocation14 + $0x20] sm:$0xf]
          %v2199 = vld [vmem:[#allocation14 + $0x24] sm:$0xf]
          %v2200 = vld [vmem:[#allocation14 + $0x28] sm:$0xf]
          %v2201 = vld [vmem:[#allocation14 + $0x2c] sm:$0xf]
          %v2202 = vld [vmem:[#allocation14 + $0x30] sm:$0xf]
          %v2203 = vld [vmem:[#allocation14 + $0x34] sm:$0xf]
          %v2204 = vld [vmem:[#allocation14 + $0x38] sm:$0xf]
          %v2205 = vld [vmem:[#allocation14 + $0x3c] sm:$0xf]
          %v2206 = vld [vmem:[#allocation14 + $0x40] sm:$0xf]
          %v2207 = vld [vmem:[#allocation14 + $0x44] sm:$0xf]
          %v2208 = vld [vmem:[#allocation14 + $0x48] sm:$0xf]
          %v2209 = vld [vmem:[#allocation14 + $0x4c] sm:$0xf]
          %v2210 = vld [vmem:[#allocation14 + $0x50] sm:$0xf]
          %v2211 = vld [vmem:[#allocation14 + $0x54] sm:$0xf]
          %v2212 = vld [vmem:[#allocation14 + $0x58] sm:$0xf]
          %v2213 = vld [vmem:[#allocation14 + $0x5c] sm:$0xf]
          %v2214 = vld [vmem:[#allocation14 + $0x60] sm:$0xf]
          %v2215 = vld [vmem:[#allocation14 + $0x64] sm:$0xf]
          %v2216 = vld [vmem:[#allocation14 + $0x68] sm:$0xf]
          %v2217 = vld [vmem:[#allocation14 + $0x6c] sm:$0xf]
          %v2218 = vld [vmem:[#allocation14 + $0x70] sm:$0xf]
          %v2219 = vld [vmem:[#allocation14 + $0x74] sm:$0xf]
          %v2220 = vld [vmem:[#allocation14 + $0x78] sm:$0xf]
          %v2221 = vld [vmem:[#allocation14 + $0x7c] sm:$0xf]
          %v2254 = vunpack.c.l.b16 %v2190
          %v2255 = vunpack.c.l.b16 %v2191
          %v2256 = vunpack.c.l.b16 %v2192
          %v2257 = vunpack.c.l.b16 %v2193
          %v2258 = vunpack.c.l.b16 %v2194
          %v2259 = vunpack.c.l.b16 %v2195
          %v2260 = vunpack.c.l.b16 %v2196
          %v2261 = vunpack.c.l.b16 %v2197
          %v2262 = vunpack.c.l.b16 %v2198
          %v2263 = vunpack.c.l.b16 %v2199
          %v2264 = vunpack.c.l.b16 %v2200
          %v2265 = vunpack.c.l.b16 %v2201
          %v2266 = vunpack.c.l.b16 %v2202
          %v2267 = vunpack.c.l.b16 %v2203
          %v2268 = vunpack.c.l.b16 %v2204
          %v2269 = vunpack.c.l.b16 %v2205
          %v2270 = vunpack.c.l.b16 %v2206
          %v2271 = vunpack.c.l.b16 %v2207
          %v2272 = vunpack.c.l.b16 %v2208
          %v2273 = vunpack.c.l.b16 %v2209
          %v2274 = vunpack.c.l.b16 %v2210
          %v2275 = vunpack.c.l.b16 %v2211
          %v2276 = vunpack.c.l.b16 %v2212
          %v2277 = vunpack.c.l.b16 %v2213
          %v2278 = vunpack.c.l.b16 %v2214
          %v2279 = vunpack.c.l.b16 %v2215
          %v2280 = vunpack.c.l.b16 %v2216
          %v2281 = vunpack.c.l.b16 %v2217
          %v2282 = vunpack.c.l.b16 %v2218
          %v2283 = vunpack.c.l.b16 %v2219
          %v2284 = vunpack.c.l.b16 %v2220
          %v2285 = vunpack.c.l.b16 %v2221
          %v2286 = vpack.c.b16 %v2255, %v2254
          %v2287 = vpack.c.b16 %v2257, %v2256
          %v2288 = vpack.c.b16 %v2259, %v2258
          %v2289 = vpack.c.b16 %v2261, %v2260
          %v2290 = vpack.c.b16 %v2263, %v2262
          %v2291 = vpack.c.b16 %v2265, %v2264
          %v2292 = vpack.c.b16 %v2267, %v2266
          %v2293 = vpack.c.b16 %v2269, %v2268
          %v2294 = vpack.c.b16 %v2271, %v2270
          %v2295 = vpack.c.b16 %v2273, %v2272
          %v2296 = vpack.c.b16 %v2275, %v2274
          %v2297 = vpack.c.b16 %v2277, %v2276
          %v2298 = vpack.c.b16 %v2279, %v2278
          %v2299 = vpack.c.b16 %v2281, %v2280
          %v2300 = vpack.c.b16 %v2283, %v2282
          %v2301 = vpack.c.b16 %v2285, %v2284
          %2318 = vmatprep.subr.bf16.mxu0 0
          %2319 = vmatpush1.bf16.msra.mxu0 %v2286
          %2320 = vmatprep.subr.bf16.mxu0 0
          %2321 = vmatpush1.bf16.msra.mxu0 %v2287
          %2322 = vmatprep.subr.bf16.mxu0 0
          %2323 = vmatpush1.bf16.msra.mxu0 %v2288
          %2324 = vmatprep.subr.bf16.mxu0 0
          %2325 = vmatpush1.bf16.msra.mxu0 %v2289
          %2326 = vmatprep.subr.bf16.mxu0 0
          %2327 = vmatpush1.bf16.msra.mxu0 %v2290
          %2328 = vmatprep.subr.bf16.mxu0 0
          %2329 = vmatpush1.bf16.msra.mxu0 %v2291
          %2330 = vmatprep.subr.bf16.mxu0 0
          %2331 = vmatpush1.bf16.msra.mxu0 %v2292
          %2332 = vmatprep.subr.bf16.mxu0 0
          %2333 = vmatpush1.bf16.msra.mxu0 %v2293
          %2334 = vmatprep.subr.bf16.mxu0 0
          %2335 = vmatpush1.bf16.msra.mxu0 %v2294
          %2336 = vmatprep.subr.bf16.mxu0 0
          %2337 = vmatpush1.bf16.msra.mxu0 %v2295
          %2338 = vmatprep.subr.bf16.mxu0 0
          %2339 = vmatpush1.bf16.msra.mxu0 %v2296
          %2340 = vmatprep.subr.bf16.mxu0 0
          %2341 = vmatpush1.bf16.msra.mxu0 %v2297
          %2342 = vmatprep.subr.bf16.mxu0 0
          %2343 = vmatpush1.bf16.msra.mxu0 %v2298
          %2344 = vmatprep.subr.bf16.mxu0 0
          %2345 = vmatpush1.bf16.msra.mxu0 %v2299
          %2346 = vmatprep.subr.bf16.mxu0 0
          %2347 = vmatpush1.bf16.msra.mxu0 %v2300
          %2348 = vmatprep.subr.bf16.mxu0 0
          %2349 = vmatpush1.bf16.msra.mxu0 %v2301
          %2350 = vmatprep.mubr.bf16.mxu0 %v2189
          %2351 = vmatmul.mubr.bf16.gmra.mrb[0].mxu0 %v2188
          %v2352 = vpop.f32.mrb[0].mxu0
          %v2353 = vadd.f32 0.0, %v2352
          %v2354 = vpop.f32.mrb[0].mxu0
          %v2355 = vpop.f32.mrb[0].mxu0
          %v2356 = vadd.f32 0.0, %v2355
          %v2357 = vpop.f32.mrb[0].mxu0
          %2358 = vdwg.mxu0
          %v2359 = vadd.f32 %v1863, %v2353
          %v2360 = vadd.f32 %v1866, %v2356
          %v2361 = vpack.c.bf16 %v2360, %v2359
          %v2362 = vld [vmem:[#allocation15] sm:$0xff]
          %v2363 = vld [vmem:[#allocation15 + $0x8] sm:$0xff]
          %v2364 = vld [vmem:[#allocation15 + $0x10] sm:$0xff]
          %v2365 = vld [vmem:[#allocation15 + $0x18] sm:$0xff]
          %v2366 = vld [vmem:[#allocation15 + $0x20] sm:$0xff]
          %v2367 = vld [vmem:[#allocation15 + $0x28] sm:$0xff]
          %v2368 = vld [vmem:[#allocation15 + $0x30] sm:$0xff]
          %v2369 = vld [vmem:[#allocation15 + $0x38] sm:$0xff]
          %v2370 = vld [vmem:[#allocation15 + $0x40] sm:$0xff]
          %v2371 = vld [vmem:[#allocation15 + $0x48] sm:$0xff]
          %v2372 = vld [vmem:[#allocation15 + $0x50] sm:$0xff]
          %v2373 = vld [vmem:[#allocation15 + $0x58] sm:$0xff]
          %v2374 = vld [vmem:[#allocation15 + $0x60] sm:$0xff]
          %v2375 = vld [vmem:[#allocation15 + $0x68] sm:$0xff]
          %v2376 = vld [vmem:[#allocation15 + $0x70] sm:$0xff]
          %v2377 = vld [vmem:[#allocation15 + $0x78] sm:$0xff]
          %v2394 = vunpack.c.l.b16 %v2362
          %v2395 = vunpack.c.h.b16 %v2362
          %v2396 = vunpack.c.l.b16 %v2363
          %v2397 = vunpack.c.h.b16 %v2363
          %v2398 = vunpack.c.l.b16 %v2364
          %v2399 = vunpack.c.h.b16 %v2364
          %v2400 = vunpack.c.l.b16 %v2365
          %v2401 = vunpack.c.h.b16 %v2365
          %v2402 = vunpack.c.l.b16 %v2366
          %v2403 = vunpack.c.h.b16 %v2366
          %v2404 = vunpack.c.l.b16 %v2367
          %v2405 = vunpack.c.h.b16 %v2367
          %v2406 = vunpack.c.l.b16 %v2368
          %v2407 = vunpack.c.h.b16 %v2368
          %v2408 = vunpack.c.l.b16 %v2369
          %v2409 = vunpack.c.h.b16 %v2369
          %v2410 = vunpack.c.l.b16 %v2370
          %v2411 = vunpack.c.h.b16 %v2370
          %v2412 = vunpack.c.l.b16 %v2371
          %v2413 = vunpack.c.h.b16 %v2371
          %v2414 = vunpack.c.l.b16 %v2372
          %v2415 = vunpack.c.h.b16 %v2372
          %v2416 = vunpack.c.l.b16 %v2373
          %v2417 = vunpack.c.h.b16 %v2373
          %v2418 = vunpack.c.l.b16 %v2374
          %v2419 = vunpack.c.h.b16 %v2374
          %v2420 = vunpack.c.l.b16 %v2375
          %v2421 = vunpack.c.h.b16 %v2375
          %v2422 = vunpack.c.l.b16 %v2376
          %v2423 = vunpack.c.h.b16 %v2376
          %v2424 = vunpack.c.l.b16 %v2377
          %v2425 = vunpack.c.h.b16 %v2377
          %v2426 = vpack.c.b16 %v2396, %v2394
          %v2427 = vpack.c.b16 %v2397, %v2395
          %v2428 = vpack.c.b16 %v2400, %v2398
          %v2429 = vpack.c.b16 %v2401, %v2399
          %v2430 = vpack.c.b16 %v2404, %v2402
          %v2431 = vpack.c.b16 %v2405, %v2403
          %v2432 = vpack.c.b16 %v2408, %v2406
          %v2433 = vpack.c.b16 %v2409, %v2407
          %v2434 = vpack.c.b16 %v2412, %v2410
          %v2435 = vpack.c.b16 %v2413, %v2411
          %v2436 = vpack.c.b16 %v2416, %v2414
          %v2437 = vpack.c.b16 %v2417, %v2415
          %v2438 = vpack.c.b16 %v2420, %v2418
          %v2439 = vpack.c.b16 %v2421, %v2419
          %v2440 = vpack.c.b16 %v2424, %v2422
          %v2441 = vpack.c.b16 %v2425, %v2423
          %2458 = vmatprep.subr.bf16.mxu0 %v2427
          %2459 = vmatpush1.bf16.msra.mxu0 %v2426
          %2460 = vmatprep.subr.bf16.mxu0 %v2429
          %2461 = vmatpush1.bf16.msra.mxu0 %v2428
          %2462 = vmatprep.subr.bf16.mxu0 %v2431
          %2463 = vmatpush1.bf16.msra.mxu0 %v2430
          %2464 = vmatprep.subr.bf16.mxu0 %v2433
          %2465 = vmatpush1.bf16.msra.mxu0 %v2432
          %2466 = vmatprep.subr.bf16.mxu0 %v2435
          %2467 = vmatpush1.bf16.msra.mxu0 %v2434
          %2468 = vmatprep.subr.bf16.mxu0 %v2437
          %2469 = vmatpush1.bf16.msra.mxu0 %v2436
          %2470 = vmatprep.subr.bf16.mxu0 %v2439
          %2471 = vmatpush1.bf16.msra.mxu0 %v2438
          %2472 = vmatprep.subr.bf16.mxu0 %v2441
          %2473 = vmatpush1.bf16.msra.mxu0 %v2440
          %2474 = vmatprep.subr.bf16.mxu0 0
          %2475 = vmatpush1.bf16.msra.mxu0 0
          %2476 = vmatprep.subr.bf16.mxu0 0
          %2477 = vmatpush1.bf16.msra.mxu0 0
          %2478 = vmatprep.subr.bf16.mxu0 0
          %2479 = vmatpush1.bf16.msra.mxu0 0
          %2480 = vmatprep.subr.bf16.mxu0 0
          %2481 = vmatpush1.bf16.msra.mxu0 0
          %2482 = vmatprep.subr.bf16.mxu0 0
          %2483 = vmatpush1.bf16.msra.mxu0 0
          %2484 = vmatprep.subr.bf16.mxu0 0
          %2485 = vmatpush1.bf16.msra.mxu0 0
          %2486 = vmatprep.subr.bf16.mxu0 0
          %2487 = vmatpush1.bf16.msra.mxu0 0
          %2488 = vmatprep.subr.bf16.mxu0 0
          %2489 = vmatpush1.bf16.msra.mxu0 0
          %2490 = vmatprep.mubr.bf16.mxu0 0
          %2491 = vmatmul.mubr.bf16.gmra.mrb[0].mxu0 %v2361
          %v2492 = vpop.f32.mrb[0].mxu0
          %v2493 = vadd.f32 0.0, %v2492
          %v2494 = vpop.f32.mrb[0].mxu0
          %v2495 = vadd.f32 0.0, %v2494
          %v2496 = vpop.f32.mrb[0].mxu0
          %v2497 = vadd.f32 0.0, %v2496
          %v2498 = vpop.f32.mrb[0].mxu0
          %v2499 = vadd.f32 0.0, %v2498
          %2500 = vdwg.mxu0
          %v2501 = vmul.f32 %v2493, 0.5
          %v2502 = vmul.f32 %v2495, 0.5
          %v2503 = vmul.f32 %v2497, 0.5
          %v2504 = vmul.f32 %v2499, 0.5
          %v2505 = vmul.f32 %v2493, 0.044715
          %v2506 = vmul.f32 %v2495, 0.044715
          %v2507 = vmul.f32 %v2497, 0.044715
          %v2508 = vmul.f32 %v2499, 0.044715
          %v2509 = vmul.f32 %v2505, %v2493
          %v2510 = vmul.f32 %v2506, %v2495
          %v2511 = vmul.f32 %v2507, %v2497
          %v2512 = vmul.f32 %v2508, %v2499
          %v2513 = vmul.f32 %v2509, %v2493
          %v2514 = vmul.f32 %v2510, %v2495
          %v2515 = vmul.f32 %v2511, %v2497
          %v2516 = vmul.f32 %v2512, %v2499
          %v2517 = vadd.f32 %v2493, %v2513
          %v2518 = vadd.f32 %v2495, %v2514
          %v2519 = vadd.f32 %v2497, %v2515
          %v2520 = vadd.f32 %v2499, %v2516
          %v2521 = vmul.f32 %v2517, 0.7978846
          %v2522 = vmul.f32 %v2518, 0.7978846
          %v2523 = vmul.f32 %v2519, 0.7978846
          %v2524 = vmul.f32 %v2520, 0.7978846
          %v2525 = vtanh.pop %v2521
          %v2526 = vtanh.pop %v2522
          %v2527 = vtanh.pop %v2523
          %v2528 = vtanh.pop %v2524
          %v2529 = vadd.f32 %v2525, 1.0
          %v2530 = vadd.f32 %v2526, 1.0
          %v2531 = vadd.f32 %v2527, 1.0
          %v2532 = vadd.f32 %v2528, 1.0
          %v2533 = vmul.f32 %v2501, %v2529
          %v2534 = vmul.f32 %v2502, %v2530
          %v2535 = vmul.f32 %v2503, %v2531
          %v2536 = vmul.f32 %v2504, %v2532
          %v2537 = vld [vmem:[#allocation17] sm:$0xff]
          %v2538 = vld [vmem:[#allocation17 + $0x8] sm:$0xff]
          %v2539 = vld [vmem:[#allocation17 + $0x10] sm:$0xff]
          %v2540 = vld [vmem:[#allocation17 + $0x18] sm:$0xff]
          %v2541 = vld [vmem:[#allocation17 + $0x20] sm:$0xff]
          %v2542 = vld [vmem:[#allocation17 + $0x28] sm:$0xff]
          %v2543 = vld [vmem:[#allocation17 + $0x30] sm:$0xff]
          %v2544 = vld [vmem:[#allocation17 + $0x38] sm:$0xff]
          %v2545 = vld [vmem:[#allocation17 + $0x40] sm:$0xff]
          %v2546 = vld [vmem:[#allocation17 + $0x48] sm:$0xff]
          %v2547 = vld [vmem:[#allocation17 + $0x50] sm:$0xff]
          %v2548 = vld [vmem:[#allocation17 + $0x58] sm:$0xff]
          %v2549 = vld [vmem:[#allocation17 + $0x60] sm:$0xff]
          %v2550 = vld [vmem:[#allocation17 + $0x68] sm:$0xff]
          %v2551 = vld [vmem:[#allocation17 + $0x70] sm:$0xff]
          %v2552 = vld [vmem:[#allocation17 + $0x78] sm:$0xff]
          %v2569 = vunpack.c.l.b16 %v2537
          %v2570 = vunpack.c.h.b16 %v2537
          %v2571 = vunpack.c.l.b16 %v2538
          %v2572 = vunpack.c.h.b16 %v2538
          %v2573 = vunpack.c.l.b16 %v2539
          %v2574 = vunpack.c.h.b16 %v2539
          %v2575 = vunpack.c.l.b16 %v2540
          %v2576 = vunpack.c.h.b16 %v2540
          %v2577 = vunpack.c.l.b16 %v2541
          %v2578 = vunpack.c.h.b16 %v2541
          %v2579 = vunpack.c.l.b16 %v2542
          %v2580 = vunpack.c.h.b16 %v2542
          %v2581 = vunpack.c.l.b16 %v2543
          %v2582 = vunpack.c.h.b16 %v2543
          %v2583 = vunpack.c.l.b16 %v2544
          %v2584 = vunpack.c.h.b16 %v2544
          %v2585 = vunpack.c.l.b16 %v2545
          %v2586 = vunpack.c.h.b16 %v2545
          %v2587 = vunpack.c.l.b16 %v2546
          %v2588 = vunpack.c.h.b16 %v2546
          %v2589 = vunpack.c.l.b16 %v2547
          %v2590 = vunpack.c.h.b16 %v2547
          %v2591 = vunpack.c.l.b16 %v2548
          %v2592 = vunpack.c.h.b16 %v2548
          %v2593 = vunpack.c.l.b16 %v2549
          %v2594 = vunpack.c.h.b16 %v2549
          %v2595 = vunpack.c.l.b16 %v2550
          %v2596 = vunpack.c.h.b16 %v2550
          %v2597 = vunpack.c.l.b16 %v2551
          %v2598 = vunpack.c.h.b16 %v2551
          %v2599 = vunpack.c.l.b16 %v2552
          %v2600 = vunpack.c.h.b16 %v2552
          %v2601 = vpack.c.b16 %v2571, %v2569
          %v2602 = vpack.c.b16 %v2572, %v2570
          %v2603 = vpack.c.b16 %v2575, %v2573
          %v2604 = vpack.c.b16 %v2576, %v2574
          %v2605 = vpack.c.b16 %v2579, %v2577
          %v2606 = vpack.c.b16 %v2580, %v2578
          %v2607 = vpack.c.b16 %v2583, %v2581
          %v2608 = vpack.c.b16 %v2584, %v2582
          %v2609 = vpack.c.b16 %v2587, %v2585
          %v2610 = vpack.c.b16 %v2588, %v2586
          %v2611 = vpack.c.b16 %v2591, %v2589
          %v2612 = vpack.c.b16 %v2592, %v2590
          %v2613 = vpack.c.b16 %v2595, %v2593
          %v2614 = vpack.c.b16 %v2596, %v2594
          %v2615 = vpack.c.b16 %v2599, %v2597
          %v2616 = vpack.c.b16 %v2600, %v2598
          %2633 = vmatprep.subr.bf16.mxu0 %v2602
          %2634 = vmatpush1.bf16.msra.mxu0 %v2601
          %2635 = vmatprep.subr.bf16.mxu0 %v2604
          %2636 = vmatpush1.bf16.msra.mxu0 %v2603
          %2637 = vmatprep.subr.bf16.mxu0 %v2606
          %2638 = vmatpush1.bf16.msra.mxu0 %v2605
          %2639 = vmatprep.subr.bf16.mxu0 %v2608
          %2640 = vmatpush1.bf16.msra.mxu0 %v2607
          %2641 = vmatprep.subr.bf16.mxu0 %v2610
          %2642 = vmatpush1.bf16.msra.mxu0 %v2609
          %2643 = vmatprep.subr.bf16.mxu0 %v2612
          %2644 = vmatpush1.bf16.msra.mxu0 %v2611
          %2645 = vmatprep.subr.bf16.mxu0 %v2614
          %2646 = vmatpush1.bf16.msra.mxu0 %v2613
          %2647 = vmatprep.subr.bf16.mxu0 %v2616
          %2648 = vmatpush1.bf16.msra.mxu0 %v2615
          %2649 = vmatprep.subr.bf16.mxu0 0
          %2650 = vmatpush1.bf16.msra.mxu0 0
          %2651 = vmatprep.subr.bf16.mxu0 0
          %2652 = vmatpush1.bf16.msra.mxu0 0
          %2653 = vmatprep.subr.bf16.mxu0 0
          %2654 = vmatpush1.bf16.msra.mxu0 0
          %2655 = vmatprep.subr.bf16.mxu0 0
          %2656 = vmatpush1.bf16.msra.mxu0 0
          %2657 = vmatprep.subr.bf16.mxu0 0
          %2658 = vmatpush1.bf16.msra.mxu0 0
          %2659 = vmatprep.subr.bf16.mxu0 0
          %2660 = vmatpush1.bf16.msra.mxu0 0
          %2661 = vmatprep.subr.bf16.mxu0 0
          %2662 = vmatpush1.bf16.msra.mxu0 0
          %2663 = vmatprep.subr.bf16.mxu0 0
          %2664 = vmatpush1.bf16.msra.mxu0 0
          %2665 = vmatprep.mubr.bf16.mxu0 0
          %2666 = vmatmul.mubr.bf16.gmra.mrb[0].mxu0 %v2361
          %v2667 = vpop.f32.mrb[0].mxu0
          %v2668 = vadd.f32 0.0, %v2667
          %v2669 = vpop.f32.mrb[0].mxu0
          %v2670 = vadd.f32 0.0, %v2669
          %v2671 = vpop.f32.mrb[0].mxu0
          %v2672 = vadd.f32 0.0, %v2671
          %v2673 = vpop.f32.mrb[0].mxu0
          %v2674 = vadd.f32 0.0, %v2673
          %2675 = vdwg.mxu0
          %v2676 = vmul.f32 %v2533, %v2668
          %v2677 = vmul.f32 %v2534, %v2670
          %v2678 = vmul.f32 %v2535, %v2672
          %v2679 = vmul.f32 %v2536, %v2674
          %v2680 = vpack.c.bf16 %v2678, %v2676
          %v2681 = vpack.c.bf16 %v2679, %v2677
          %v2682 = vld [vmem:[#allocation18] sm:$0xf]
          %v2683 = vld [vmem:[#allocation18 + $0x4] sm:$0xf]
          %v2684 = vld [vmem:[#allocation18 + $0x8] sm:$0xf]
          %v2685 = vld [vmem:[#allocation18 + $0xc] sm:$0xf]
          %v2686 = vld [vmem:[#allocation18 + $0x10] sm:$0xf]
          %v2687 = vld [vmem:[#allocation18 + $0x14] sm:$0xf]
          %v2688 = vld [vmem:[#allocation18 + $0x18] sm:$0xf]
          %v2689 = vld [vmem:[#allocation18 + $0x1c] sm:$0xf]
          %v2690 = vld [vmem:[#allocation18 + $0x20] sm:$0xf]
          %v2691 = vld [vmem:[#allocation18 + $0x24] sm:$0xf]
          %v2692 = vld [vmem:[#allocation18 + $0x28] sm:$0xf]
          %v2693 = vld [vmem:[#allocation18 + $0x2c] sm:$0xf]
          %v2694 = vld [vmem:[#allocation18 + $0x30] sm:$0xf]
          %v2695 = vld [vmem:[#allocation18 + $0x34] sm:$0xf]
          %v2696 = vld [vmem:[#allocation18 + $0x38] sm:$0xf]
          %v2697 = vld [vmem:[#allocation18 + $0x3c] sm:$0xf]
          %v2698 = vld [vmem:[#allocation18 + $0x40] sm:$0xf]
          %v2699 = vld [vmem:[#allocation18 + $0x44] sm:$0xf]
          %v2700 = vld [vmem:[#allocation18 + $0x48] sm:$0xf]
          %v2701 = vld [vmem:[#allocation18 + $0x4c] sm:$0xf]
          %v2702 = vld [vmem:[#allocation18 + $0x50] sm:$0xf]
          %v2703 = vld [vmem:[#allocation18 + $0x54] sm:$0xf]
          %v2704 = vld [vmem:[#allocation18 + $0x58] sm:$0xf]
          %v2705 = vld [vmem:[#allocation18 + $0x5c] sm:$0xf]
          %v2706 = vld [vmem:[#allocation18 + $0x60] sm:$0xf]
          %v2707 = vld [vmem:[#allocation18 + $0x64] sm:$0xf]
          %v2708 = vld [vmem:[#allocation18 + $0x68] sm:$0xf]
          %v2709 = vld [vmem:[#allocation18 + $0x6c] sm:$0xf]
          %v2710 = vld [vmem:[#allocation18 + $0x70] sm:$0xf]
          %v2711 = vld [vmem:[#allocation18 + $0x74] sm:$0xf]
          %v2712 = vld [vmem:[#allocation18 + $0x78] sm:$0xf]
          %v2713 = vld [vmem:[#allocation18 + $0x7c] sm:$0xf]
          %v2746 = vunpack.c.l.b16 %v2682
          %v2747 = vunpack.c.l.b16 %v2683
          %v2748 = vunpack.c.l.b16 %v2684
          %v2749 = vunpack.c.l.b16 %v2685
          %v2750 = vunpack.c.l.b16 %v2686
          %v2751 = vunpack.c.l.b16 %v2687
          %v2752 = vunpack.c.l.b16 %v2688
          %v2753 = vunpack.c.l.b16 %v2689
          %v2754 = vunpack.c.l.b16 %v2690
          %v2755 = vunpack.c.l.b16 %v2691
          %v2756 = vunpack.c.l.b16 %v2692
          %v2757 = vunpack.c.l.b16 %v2693
          %v2758 = vunpack.c.l.b16 %v2694
          %v2759 = vunpack.c.l.b16 %v2695
          %v2760 = vunpack.c.l.b16 %v2696
          %v2761 = vunpack.c.l.b16 %v2697
          %v2762 = vunpack.c.l.b16 %v2698
          %v2763 = vunpack.c.l.b16 %v2699
          %v2764 = vunpack.c.l.b16 %v2700
          %v2765 = vunpack.c.l.b16 %v2701
          %v2766 = vunpack.c.l.b16 %v2702
          %v2767 = vunpack.c.l.b16 %v2703
          %v2768 = vunpack.c.l.b16 %v2704
          %v2769 = vunpack.c.l.b16 %v2705
          %v2770 = vunpack.c.l.b16 %v2706
          %v2771 = vunpack.c.l.b16 %v2707
          %v2772 = vunpack.c.l.b16 %v2708
          %v2773 = vunpack.c.l.b16 %v2709
          %v2774 = vunpack.c.l.b16 %v2710
          %v2775 = vunpack.c.l.b16 %v2711
          %v2776 = vunpack.c.l.b16 %v2712
          %v2777 = vunpack.c.l.b16 %v2713
          %v2778 = vpack.c.b16 %v2747, %v2746
          %v2779 = vpack.c.b16 %v2749, %v2748
          %v2780 = vpack.c.b16 %v2751, %v2750
          %v2781 = vpack.c.b16 %v2753, %v2752
          %v2782 = vpack.c.b16 %v2755, %v2754
          %v2783 = vpack.c.b16 %v2757, %v2756
          %v2784 = vpack.c.b16 %v2759, %v2758
          %v2785 = vpack.c.b16 %v2761, %v2760
          %v2786 = vpack.c.b16 %v2763, %v2762
          %v2787 = vpack.c.b16 %v2765, %v2764
          %v2788 = vpack.c.b16 %v2767, %v2766
          %v2789 = vpack.c.b16 %v2769, %v2768
          %v2790 = vpack.c.b16 %v2771, %v2770
          %v2791 = vpack.c.b16 %v2773, %v2772
          %v2792 = vpack.c.b16 %v2775, %v2774
          %v2793 = vpack.c.b16 %v2777, %v2776
          %2810 = vmatprep.subr.bf16.mxu0 0
          %2811 = vmatpush1.bf16.msra.mxu0 %v2778
          %2812 = vmatprep.subr.bf16.mxu0 0
          %2813 = vmatpush1.bf16.msra.mxu0 %v2779
          %2814 = vmatprep.subr.bf16.mxu0 0
          %2815 = vmatpush1.bf16.msra.mxu0 %v2780
          %2816 = vmatprep.subr.bf16.mxu0 0
          %2817 = vmatpush1.bf16.msra.mxu0 %v2781
          %2818 = vmatprep.subr.bf16.mxu0 0
          %2819 = vmatpush1.bf16.msra.mxu0 %v2782
          %2820 = vmatprep.subr.bf16.mxu0 0
          %2821 = vmatpush1.bf16.msra.mxu0 %v2783
          %2822 = vmatprep.subr.bf16.mxu0 0
          %2823 = vmatpush1.bf16.msra.mxu0 %v2784
          %2824 = vmatprep.subr.bf16.mxu0 0
          %2825 = vmatpush1.bf16.msra.mxu0 %v2785
          %2826 = vmatprep.subr.bf16.mxu0 0
          %2827 = vmatpush1.bf16.msra.mxu0 %v2786
          %2828 = vmatprep.subr.bf16.mxu0 0
          %2829 = vmatpush1.bf16.msra.mxu0 %v2787
          %2830 = vmatprep.subr.bf16.mxu0 0
          %2831 = vmatpush1.bf16.msra.mxu0 %v2788
          %2832 = vmatprep.subr.bf16.mxu0 0
          %2833 = vmatpush1.bf16.msra.mxu0 %v2789
          %2834 = vmatprep.subr.bf16.mxu0 0
          %2835 = vmatpush1.bf16.msra.mxu0 %v2790
          %2836 = vmatprep.subr.bf16.mxu0 0
          %2837 = vmatpush1.bf16.msra.mxu0 %v2791
          %2838 = vmatprep.subr.bf16.mxu0 0
          %2839 = vmatpush1.bf16.msra.mxu0 %v2792
          %2840 = vmatprep.subr.bf16.mxu0 0
          %2841 = vmatpush1.bf16.msra.mxu0 %v2793
          %2842 = vmatprep.mubr.bf16.mxu0 %v2681
          %2843 = vmatmul.mubr.bf16.gmra.mrb[0].mxu0 %v2680
          %v2844 = vpop.f32.mrb[0].mxu0
          %v2845 = vadd.f32 0.0, %v2844
          %v2846 = vpop.f32.mrb[0].mxu0
          %v2847 = vpop.f32.mrb[0].mxu0
          %v2848 = vadd.f32 0.0, %v2847
          %v2849 = vpop.f32.mrb[0].mxu0
          %2850 = vdwg.mxu0
          %v2851 = vadd.f32 %v2359, %v2845
          %v2852 = vadd.f32 %v2360, %v2848
          %2853 = vst [vmem:[#allocation21] sm:$0xff] %v2851
          %2854 = vst [vmem:[#allocation21 + $0x8] sm:$0xff] %v2852
          %v2855 = vpack.c.bf16 %v2852, %v2851
          %2856 = vst [vmem:[#allocation2] sm:$0xff] %v2855
        $region128: #{tpu_custom_call.1} parent=79 // pred_fallthru
          _
        %v2857 = vld [vmem:[#allocation2] sm:$0xff]
        %v2858 = vld [vmem:[%s671] sm:$0xff]
        %v2859 = vld [vmem:[%s671 + $0x8] sm:$0xff]
        %v2860 = vld [vmem:[%s671 + $0x10] sm:$0xff]
        %v2861 = vld [vmem:[%s671 + $0x18] sm:$0xff]
        %v2862 = vld [vmem:[%s671 + $0x20] sm:$0xff]
        %v2863 = vld [vmem:[%s671 + $0x28] sm:$0xff]
        %v2864 = vld [vmem:[%s671 + $0x30] sm:$0xff]
        %v2865 = vld [vmem:[%s671 + $0x38] sm:$0xff]
        %v2866 = vld [vmem:[%s671 + $0x40] sm:$0xff]
        %v2867 = vld [vmem:[%s671 + $0x48] sm:$0xff]
        %v2868 = vld [vmem:[%s671 + $0x50] sm:$0xff]
        %v2869 = vld [vmem:[%s671 + $0x58] sm:$0xff]
        %v2870 = vld [vmem:[%s671 + $0x60] sm:$0xff]
        %v2871 = vld [vmem:[%s671 + $0x68] sm:$0xff]
        %v2872 = vld [vmem:[%s671 + $0x70] sm:$0xff]
        %v2873 = vld [vmem:[%s671 + $0x78] sm:$0xff]
        %v2874 = vld [vmem:[%s671 + $0x80] sm:$0xff]
        %v2875 = vld [vmem:[%s671 + $0x88] sm:$0xff]
        %v2876 = vld [vmem:[%s671 + $0x90] sm:$0xff]
        %v2877 = vld [vmem:[%s671 + $0x98] sm:$0xff]
        %v2878 = vld [vmem:[%s671 + $0xa0] sm:$0xff]
        %v2879 = vld [vmem:[%s671 + $0xa8] sm:$0xff]
        %v2880 = vld [vmem:[%s671 + $0xb0] sm:$0xff]
        %v2881 = vld [vmem:[%s671 + $0xb8] sm:$0xff]
        %v2882 = vld [vmem:[%s671 + $0xc0] sm:$0xff]
        %v2883 = vld [vmem:[%s671 + $0xc8] sm:$0xff]
        %v2884 = vld [vmem:[%s671 + $0xd0] sm:$0xff]
        %v2885 = vld [vmem:[%s671 + $0xd8] sm:$0xff]
        %v2886 = vld [vmem:[%s671 + $0xe0] sm:$0xff]
        %v2887 = vld [vmem:[%s671 + $0xe8] sm:$0xff]
        %v2888 = vld [vmem:[%s671 + $0xf0] sm:$0xff]
        %v2889 = vld [vmem:[%s671 + $0xf8] sm:$0xff]
        %v2890 = vld [vmem:[%s739] sm:$0xf]
        %v2892 = vlaneseq
        %v2893 = vshrl.u32 %v2892, 7
        %v2894 = vsub.s32 0, %v2893
        %v2895 = vrot.slane %v2890, %v2894
        %v2896 = vlaneseq
        %v2897 = vshrl.u32 %v2896, 7
        %v2898 = vsub.s32 1, %v2897
        %v2899 = vrot.slane %v2890, %v2898
        %v2900 = vlaneseq
        %v2901 = vshrl.u32 %v2900, 7
        %v2902 = vsub.s32 2, %v2901
        %v2903 = vrot.slane %v2890, %v2902
        %v2904 = vlaneseq
        %v2905 = vshrl.u32 %v2904, 7
        %v2906 = vsub.s32 3, %v2905
        %v2907 = vrot.slane %v2890, %v2906
        %v2944 = vunpack.c.l.b16 %v2858
        %v2945 = vunpack.c.h.b16 %v2858
        %v2946 = vunpack.c.l.b16 %v2859
        %v2947 = vunpack.c.h.b16 %v2859
        %v2948 = vunpack.c.l.b16 %v2860
        %v2949 = vunpack.c.h.b16 %v2860
        %v2950 = vunpack.c.l.b16 %v2861
        %v2951 = vunpack.c.h.b16 %v2861
        %v2952 = vunpack.c.l.b16 %v2862
        %v2953 = vunpack.c.h.b16 %v2862
        %v2954 = vunpack.c.l.b16 %v2863
        %v2955 = vunpack.c.h.b16 %v2863
        %v2956 = vunpack.c.l.b16 %v2864
        %v2957 = vunpack.c.h.b16 %v2864
        %v2958 = vunpack.c.l.b16 %v2865
        %v2959 = vunpack.c.h.b16 %v2865
        %v2960 = vunpack.c.l.b16 %v2866
        %v2961 = vunpack.c.h.b16 %v2866
        %v2962 = vunpack.c.l.b16 %v2867
        %v2963 = vunpack.c.h.b16 %v2867
        %v2964 = vunpack.c.l.b16 %v2868
        %v2965 = vunpack.c.h.b16 %v2868
        %v2966 = vunpack.c.l.b16 %v2869
        %v2967 = vunpack.c.h.b16 %v2869
        %v2968 = vunpack.c.l.b16 %v2870
        %v2969 = vunpack.c.h.b16 %v2870
        %v2970 = vunpack.c.l.b16 %v2871
        %v2971 = vunpack.c.h.b16 %v2871
        %v2972 = vunpack.c.l.b16 %v2872
        %v2973 = vunpack.c.h.b16 %v2872
        %v2974 = vunpack.c.l.b16 %v2873
        %v2975 = vunpack.c.h.b16 %v2873
        %v2976 = vunpack.c.l.b16 %v2874
        %v2977 = vunpack.c.h.b16 %v2874
        %v2978 = vunpack.c.l.b16 %v2875
        %v2979 = vunpack.c.h.b16 %v2875
        %v2980 = vunpack.c.l.b16 %v2876
        %v2981 = vunpack.c.h.b16 %v2876
        %v2982 = vunpack.c.l.b16 %v2877
        %v2983 = vunpack.c.h.b16 %v2877
        %v2984 = vunpack.c.l.b16 %v2878
        %v2985 = vunpack.c.h.b16 %v2878
        %v2986 = vunpack.c.l.b16 %v2879
        %v2987 = vunpack.c.h.b16 %v2879
        %v2988 = vunpack.c.l.b16 %v2880
        %v2989 = vunpack.c.h.b16 %v2880
        %v2990 = vunpack.c.l.b16 %v2881
        %v2991 = vunpack.c.h.b16 %v2881
        %v2992 = vunpack.c.l.b16 %v2882
        %v2993 = vunpack.c.h.b16 %v2882
        %v2994 = vunpack.c.l.b16 %v2883
        %v2995 = vunpack.c.h.b16 %v2883
        %v2996 = vunpack.c.l.b16 %v2884
        %v2997 = vunpack.c.h.b16 %v2884
        %v2998 = vunpack.c.l.b16 %v2885
        %v2999 = vunpack.c.h.b16 %v2885
        %v3000 = vunpack.c.l.b16 %v2886
        %v3001 = vunpack.c.h.b16 %v2886
        %v3002 = vunpack.c.l.b16 %v2887
        %v3003 = vunpack.c.h.b16 %v2887
        %v3004 = vunpack.c.l.b16 %v2888
        %v3005 = vunpack.c.h.b16 %v2888
        %v3006 = vunpack.c.l.b16 %v2889
        %v3007 = vunpack.c.h.b16 %v2889
        %v3008 = vpack.c.b16 %v2948, %v2944
        %v3009 = vpack.c.b16 %v2949, %v2945
        %v3010 = vpack.c.b16 %v2950, %v2946
        %v3011 = vpack.c.b16 %v2951, %v2947
        %v3012 = vpack.c.b16 %v2956, %v2952
        %v3013 = vpack.c.b16 %v2957, %v2953
        %v3014 = vpack.c.b16 %v2958, %v2954
        %v3015 = vpack.c.b16 %v2959, %v2955
        %v3016 = vpack.c.b16 %v2964, %v2960
        %v3017 = vpack.c.b16 %v2965, %v2961
        %v3018 = vpack.c.b16 %v2966, %v2962
        %v3019 = vpack.c.b16 %v2967, %v2963
        %v3020 = vpack.c.b16 %v2972, %v2968
        %v3021 = vpack.c.b16 %v2973, %v2969
        %v3022 = vpack.c.b16 %v2974, %v2970
        %v3023 = vpack.c.b16 %v2975, %v2971
        %v3024 = vpack.c.b16 %v2980, %v2976
        %v3025 = vpack.c.b16 %v2981, %v2977
        %v3026 = vpack.c.b16 %v2982, %v2978
        %v3027 = vpack.c.b16 %v2983, %v2979
        %v3028 = vpack.c.b16 %v2988, %v2984
        %v3029 = vpack.c.b16 %v2989, %v2985
        %v3030 = vpack.c.b16 %v2990, %v2986
        %v3031 = vpack.c.b16 %v2991, %v2987
        %v3032 = vpack.c.b16 %v2996, %v2992
        %v3033 = vpack.c.b16 %v2997, %v2993
        %v3034 = vpack.c.b16 %v2998, %v2994
        %v3035 = vpack.c.b16 %v2999, %v2995
        %v3036 = vpack.c.b16 %v3004, %v3000
        %v3037 = vpack.c.b16 %v3005, %v3001
        %v3038 = vpack.c.b16 %v3006, %v3002
        %v3039 = vpack.c.b16 %v3007, %v3003
        %3072 = vmatprep.subr.bf16.mxu0 %v3009
        %3073 = vmatpush1.bf16.msra.mxu0 %v3008
        %3074 = vmatprep.subr.bf16.mxu0 %v3013
        %3075 = vmatpush1.bf16.msra.mxu0 %v3012
        %3076 = vmatprep.subr.bf16.mxu0 %v3017
        %3077 = vmatpush1.bf16.msra.mxu0 %v3016
        %3078 = vmatprep.subr.bf16.mxu0 %v3021
        %3079 = vmatpush1.bf16.msra.mxu0 %v3020
        %3080 = vmatprep.subr.bf16.mxu0 %v3025
        %3081 = vmatpush1.bf16.msra.mxu0 %v3024
        %3082 = vmatprep.subr.bf16.mxu0 %v3029
        %3083 = vmatpush1.bf16.msra.mxu0 %v3028
        %3084 = vmatprep.subr.bf16.mxu0 %v3033
        %3085 = vmatpush1.bf16.msra.mxu0 %v3032
        %3086 = vmatprep.subr.bf16.mxu0 %v3037
        %3087 = vmatpush1.bf16.msra.mxu0 %v3036
        %3088 = vmatprep.subr.bf16.mxu0 0
        %3089 = vmatpush1.bf16.msra.mxu0 0
        %3090 = vmatprep.subr.bf16.mxu0 0
        %3091 = vmatpush1.bf16.msra.mxu0 0
        %3092 = vmatprep.subr.bf16.mxu0 0
        %3093 = vmatpush1.bf16.msra.mxu0 0
        %3094 = vmatprep.subr.bf16.mxu0 0
        %3095 = vmatpush1.bf16.msra.mxu0 0
        %3096 = vmatprep.subr.bf16.mxu0 0
        %3097 = vmatpush1.bf16.msra.mxu0 0
        %3098 = vmatprep.subr.bf16.mxu0 0
        %3099 = vmatpush1.bf16.msra.mxu0 0
        %3100 = vmatprep.subr.bf16.mxu0 0
        %3101 = vmatpush1.bf16.msra.mxu0 0
        %3102 = vmatprep.subr.bf16.mxu0 0
        %3103 = vmatpush1.bf16.msra.mxu0 0
        %3104 = vmatprep.mubr.bf16.mxu0 0
        %3105 = vmatmul.mubr.bf16.gmra.mrb[0].mxu0 %v2857
        %v3106 = vpop.f32.mrb[0].mxu0
        %v3107 = vadd.f32 %v2895, %v3106
        %v3108 = vpop.f32.mrb[0].mxu0
        %v3109 = vadd.f32 %v2899, %v3108
        %v3110 = vpop.f32.mrb[0].mxu0
        %v3111 = vadd.f32 %v2895, %v3110
        %v3112 = vpop.f32.mrb[0].mxu0
        %v3113 = vadd.f32 %v2899, %v3112
        %3114 = vdwg.mxu0
        %3115 = vmatprep.subr.bf16.mxu0 %v3011
        %3116 = vmatpush1.bf16.msra.mxu0 %v3010
        %3117 = vmatprep.subr.bf16.mxu0 %v3015
        %3118 = vmatpush1.bf16.msra.mxu0 %v3014
        %3119 = vmatprep.subr.bf16.mxu0 %v3019
        %3120 = vmatpush1.bf16.msra.mxu0 %v3018
        %3121 = vmatprep.subr.bf16.mxu0 %v3023
        %3122 = vmatpush1.bf16.msra.mxu0 %v3022
        %3123 = vmatprep.subr.bf16.mxu0 %v3027
        %3124 = vmatpush1.bf16.msra.mxu0 %v3026
        %3125 = vmatprep.subr.bf16.mxu0 %v3031
        %3126 = vmatpush1.bf16.msra.mxu0 %v3030
        %3127 = vmatprep.subr.bf16.mxu0 %v3035
        %3128 = vmatpush1.bf16.msra.mxu0 %v3034
        %3129 = vmatprep.subr.bf16.mxu0 %v3039
        %3130 = vmatpush1.bf16.msra.mxu0 %v3038
        %3131 = vmatprep.subr.bf16.mxu0 0
        %3132 = vmatpush1.bf16.msra.mxu0 0
        %3133 = vmatprep.subr.bf16.mxu0 0
        %3134 = vmatpush1.bf16.msra.mxu0 0
        %3135 = vmatprep.subr.bf16.mxu0 0
        %3136 = vmatpush1.bf16.msra.mxu0 0
        %3137 = vmatprep.subr.bf16.mxu0 0
        %3138 = vmatpush1.bf16.msra.mxu0 0
        %3139 = vmatprep.subr.bf16.mxu0 0
        %3140 = vmatpush1.bf16.msra.mxu0 0
        %3141 = vmatprep.subr.bf16.mxu0 0
        %3142 = vmatpush1.bf16.msra.mxu0 0
        %3143 = vmatprep.subr.bf16.mxu0 0
        %3144 = vmatpush1.bf16.msra.mxu0 0
        %3145 = vmatprep.subr.bf16.mxu0 0
        %3146 = vmatpush1.bf16.msra.mxu0 0
        %3147 = vmatprep.mubr.bf16.mxu0 0
        %3148 = vmatmul.mubr.bf16.gmra.mrb[0].mxu0 %v2857
        %v3149 = vpop.f32.mrb[0].mxu0
        %v3150 = vadd.f32 %v2903, %v3149
        %v3151 = vpop.f32.mrb[0].mxu0
        %v3152 = vadd.f32 %v2907, %v3151
        %v3153 = vpop.f32.mrb[0].mxu0
        %v3154 = vadd.f32 %v2903, %v3153
        %v3155 = vpop.f32.mrb[0].mxu0
        %v3156 = vadd.f32 %v2907, %v3155
        %3157 = vdwg.mxu0
        %3158 = vst [vmem:[%s728] sm:$0xff] %v3107
        %3159 = vst [vmem:[%s728 + $0x8] sm:$0xff] %v3109
        %3160 = vst [vmem:[%s728 + $0x10] sm:$0xff] %v3150
        %3161 = vst [vmem:[%s728 + $0x18] sm:$0xff] %v3152
        %3162 = vst [vmem:[%s728 + $0x20] sm:$0xff] %v3111
        %3163 = vst [vmem:[%s728 + $0x28] sm:$0xff] %v3113
        %3164 = vst [vmem:[%s728 + $0x30] sm:$0xff] %v3154
        %3165 = vst [vmem:[%s728 + $0x38] sm:$0xff] %v3156
        %s3166 = sand.u32 %s416, 1
        %s3167 = scalar_lea.sflag [#allocation23], %s3166
        %s3168 = sand.u32 %s416, 1
        %s3169 = smul.addr %s3168, 64
        %s3170 = scalar_lea.vmem [#allocation22], %s3169
        // Predicated region
        $region129: #{tpu_custom_call.1} parent=79 // pred_check
          %p3171 = pneg %p398
        $region130: #{tpu_custom_call.1} parent=79 // pred_check_branch
          %3173 = sbr.rel (%p3171) target = $region132
        $region131: #{tpu_custom_call.1} parent=79 // pred_region
          %s3174 = smul.u32 2, %s42
          %s3176 = ssub.s32 256, 256
          %3177 = vsyncadd [#allocation5], %s3176
          %s3178 = smul.addr %s3174, 128
          %s3179 = scalar_lea.hbm %s15, %s3178
          %s3180 = sshll.u32 [#allocation21], 4
          %s3181 = int_to_ptr.vmem [resolvable:$true] %s3180
          %3186 = dma.vmem_to_hbm [thread:$0]  %s3181, 256, %s3179, [#allocation5], 128, 128, 8
        $region132: #{tpu_custom_call.1} parent=79 // pred_fallthru
          _
        // Predicated region
        $region133: #{tpu_custom_call.1} parent=79 // pred_check
          %p3187 = pneg %p426
        $region134: #{tpu_custom_call.1} parent=79 // pred_check_branch
          %3189 = sbr.rel (%p3187) target = $region136
        $region135: #{tpu_custom_call.1} parent=79 // pred_region
          %s3190 = smul.u32 2, %s42
          %s3191 = smul.u32 4, %s43
          %s3193 = ssub.s32 1024, 1024
          %3194 = vsyncadd %s3167, %s3193
          %s3195 = smul.addr %s3190, 8
          %s3196 = sadd.s32 %s3191, %s3195
          %s3197 = smul.addr %s3196, 128
          %s3198 = scalar_lea.hbm %s16, %s3197
          %s3199 = sshll.u32 %s3170, 4
          %s3200 = int_to_ptr.vmem [resolvable:$true] %s3199
          %3205 = dma.vmem_to_hbm [thread:$0]  %s3200, 1024, %s3198, %s3167, 512, 1024, 32
        $region136: #{tpu_custom_call.1} parent=79 // pred_fallthru
          _
        // Predicated region
        $region137: #{tpu_custom_call.1} parent=79 // pred_check
          %p3206 = pneg %p398
        $region138: #{tpu_custom_call.1} parent=79 // pred_check_branch
          %3208 = sbr.rel (%p3206) target = $region140
        $region139: #{tpu_custom_call.1} parent=79 // pred_region
          %3209 = dma.done [#allocation5], 256
        $region140: #{tpu_custom_call.1} parent=79 // pred_fallthru
          _
      $region80: #{tpu_custom_call.1} parent=5 // pred_fallthru
        _
      %p3210 = scmp.le.s32.totalorder 2, %s33
      // Predicated region
      $region141: #{tpu_custom_call.1} parent=5 // pred_check
        %p3211 = pneg %p3210
      $region142: #{tpu_custom_call.1} parent=5 // pred_check_branch
        %3213 = sbr.rel (%p3211) target = $region144
      $region143: #{tpu_custom_call.1} parent=5 // pred_region
        %s3214 = ssub.s32 %s33, 2
        // Predicated region
        $region145: #{tpu_custom_call.1} parent=143 // pred_check
          %p3215 = pneg %p432
        $region146: #{tpu_custom_call.1} parent=143 // pred_check_branch
          %3217 = sbr.rel (%p3215) target = $region148
        $region147: #{tpu_custom_call.1} parent=143 // pred_region
          %s3218 = sand.u32 %s417, 1
          %s3219 = scalar_lea.sflag [#allocation23], %s3218
          %s3220 = sand.u32 %s417, 1
          %s3221 = smul.addr %s3220, 64
          %s3222 = scalar_lea.vmem [#allocation22], %s3221
          %3223 = dma.done %s3219, 1024
        $region148: #{tpu_custom_call.1} parent=143 // pred_fallthru
          _
      $region144: #{tpu_custom_call.1} parent=5 // pred_fallthru
        _
    $region6: #{tpu_custom_call.1} parent=1 // loop_footer
      %s37 = sadd.s32 1, %s33
    $region7: #{tpu_custom_call.1} parent=1 // loop_footer_branch
      %32 = sbr.rel target = $region3
    $region8: #{tpu_custom_call.1} parent=1 // loop_exit
      _
    %3224 = vsyncpa [#allocation4], 1
    %s3225 = scalar_lea.sflag [#allocation4], 1
    %3226 = vsyncpa %s3225, 1
    %3227 = vsyncpa [#allocation7], 1
    %3228 = vsyncpa [#allocation10], 1
    %3229 = vsyncpa [#allocation13], 1
    %3230 = vsyncpa [#allocation16], 1
    %3231 = vsyncpa [#allocation19], 1
    %3232 = vsyncpa [#allocation5], 1
    %s3233 = scalar_lea.sflag [#allocation5], 1
    %3234 = vsyncpa %s3233, 1
    %3235 = vsyncpa [#allocation23], 1
    %s3236 = scalar_lea.sflag [#allocation23], 1
    %3237 = vsyncpa %s3236, 1

</llo_original>
